<compile_context>
chip_gen: v7x
topology: tpu7x:2x2x1
jax: 0.10.0
libtpu: 0.0.40
codegen_flags: <defaults>
</compile_context>

<pallas_src>
import jax
import jax.numpy as jnp
from jax.experimental import pallas as pl
from jax.experimental.pallas import tpu as pltpu

EPS = 1e-5


def _vmem_budget_bytes():
    """3/4 of this generation's VMEM: 48 MiB on v7x (64 MiB), 96 MiB on v5e/v6e (128 MiB)."""
    cap = 64 * 1024 * 1024  # conservative default = v7x per-core VMEM
    try:
        cap = int(pltpu.get_tpu_info().vmem_capacity_bytes)
    except Exception:
        pass
    return (3 * cap) // 4


def _pick_tile_c(N, C, D, H, in_bytes, out_bytes, vmem_budget):
    """Largest channel tile that fits the VMEM budget; prefer >=2 grid steps (v7x megacore)
    as long as the MXU still sees >= 256 rows per matmul. BN stats are per-channel over
    (N, feature), so tiling MUST stay on C only (never N / D / H)."""
    cands = [t for t in range(8, C + 1, 8) if C % t == 0] or [C]
    # Bytes that scale with tile_c: double-buffered input+output blocks + f32 intermediates
    # (x/skip/z on D, y/y^2/spikes on H), with generous slack for compiler temporaries.
    per_c = N * (2 * D * in_bytes + 2 * D * out_bytes + 4 * (3 * D + 3 * H))
    w_res = 2 * 2 * (D * H + H * D) + 4 * (D + H)  # weights (worst case double-buffered) + biases
    avail = max(vmem_budget - w_res, per_c * cands[0])
    fit = [t for t in cands if t * per_c <= avail] or [cands[0]]
    two_step = [t for t in fit if C // t >= 2]
    if two_step and (N * max(two_step) >= 256 or max(fit) == max(two_step)):
        return max(two_step)
    return max(fit)


def _bn_scale_shift(y, gamma, beta):
    """Training-mode BatchNorm1d on [N, tc, F]: per-channel (scale, shift) with
    BN(y) = y * scale + shift. One fused pass (sum + sum-of-squares); biased variance.
    Reduce axis 0 (batch) first with plain VPU adds, then the lane axis on [1, tc, F]
    so the XLU only sees 1/N of the data. gamma/beta: [tc, 1]."""
    inv_count = 1.0 / float(y.shape[0] * y.shape[2])
    s1 = jnp.sum(jnp.sum(y, axis=0, keepdims=True), axis=2, keepdims=True)      # [1, tc, 1]
    s2 = jnp.sum(jnp.sum(y * y, axis=0, keepdims=True), axis=2, keepdims=True)  # [1, tc, 1]
    mean = s1 * inv_count
    var = jnp.maximum(s2 * inv_count - mean * mean, 0.0)   # guard catastrophic cancellation
    scale = jax.lax.rsqrt(var + EPS) * gamma[None, :, :]
    shift = beta[None, :, :] - mean * scale
    return scale, shift


def mlp_block_kernel(x_ref, w1_ref, b1_ref, w2_ref, b2_ref, bnp_ref, o_ref):
    n, tc, d = x_ref.shape
    h = w1_ref.shape[1]

    x_in = x_ref[...]                                 # [N, tc, D]
    x = x_in if x_in.dtype == jnp.float32 else x_in.astype(jnp.float32)  # f32 for BN stats

    bnp = bnp_ref[...]                                # [tc, 8] packed BN affine params
    g_skip, b_skip = bnp[:, 0:1], bnp[:, 1:2]
    g1, be1 = bnp[:, 2:3], bnp[:, 3:4]
    g2, be2 = bnp[:, 4:5], bnp[:, 5:6]

    # --- skip branch: skip = skip_bn(x) ---
    sc_s, sh_s = _bn_scale_shift(x, g_skip, b_skip)
    skip = x * sc_s + sh_s

    # --- mlp branch: bf16 MXU operands, f32 accumulation ---
    x_mxu = x_in if x_in.dtype == jnp.bfloat16 else x_in.astype(jnp.bfloat16)
    x2d = x_mxu.reshape(n * tc, d)                    # free: tc % 8 == 0 (or tc == C)
    y = jnp.dot(x2d, w1_ref[...], preferred_element_type=jnp.float32) + b1_ref[...]
    y = y.reshape(n, tc, h)

    # hidden BN fused with LIF threshold:
    #   spike = (y*scale + shift >= 2)  <=>  (sign(scale)*y >= (2 - shift)/|scale|)
    sc1, sh1 = _bn_scale_shift(y, g1, be1)
    sgn = jnp.where(sc1 >= 0.0, 1.0, -1.0)            # [1, tc, 1]
    thr = (2.0 - sh1) / jnp.abs(sc1)                  # [1, tc, 1]
    s = ((y * sgn) >= thr).astype(jnp.bfloat16)       # spikes directly in bf16 (exactly 0/1)

    z = jnp.dot(s.reshape(n * tc, h), w2_ref[...], preferred_element_type=jnp.float32) + b2_ref[...]
    z = z.reshape(n, tc, d)
    sc2, sh2 = _bn_scale_shift(z, g2, be2)

    # residual add + output LIF
    o_ref[...] = ((z * sc2 + sh2 + skip) >= 2.0).astype(o_ref.dtype)


def mlp_block(x, params, *, tile_c=None, out_dtype=jnp.bfloat16):
    """x: [N, C, D] float32 or bfloat16. Returns spikes [N, C, D] with values in {0, 1}
    (bf16 by default: lossless and halves output HBM traffic)."""
    N, C, D = x.shape
    H = params["w1"].shape[1]

    vmem_budget = _vmem_budget_bytes()
    in_bytes = x.dtype.itemsize
    out_bytes = jnp.dtype(out_dtype).itemsize

    if tile_c is None:
        tile_c = _pick_tile_c(N, C, D, H, in_bytes, out_bytes, vmem_budget)
    assert C % tile_c == 0
    assert tile_c % 8 == 0 or tile_c == C   # keep sublane tiling / in-kernel reshapes free
    # NOTE: BN stats reduce over (N, feature) per channel, so tiling must stay on C only.
    # If C % 8 != 0 (e.g. 196 Mixer tokens) we fall back to tile_c == C; pad C to a multiple
    # of 8 upstream to avoid a per-tile relayout of the (n*tc, d) reshape.

    # Weights are stored in bf16 at parameter creation; cast here only if given f32.
    w1 = params["w1"] if params["w1"].dtype == jnp.bfloat16 else params["w1"].astype(jnp.bfloat16)
    w2 = params["w2"] if params["w2"].dtype == jnp.bfloat16 else params["w2"].astype(jnp.bfloat16)
    b1, b2, bnp = params["b1"], params["b2"], params["bn"]

    bytes_accessed = int(
        N * C * D * in_bytes + N * C * D * out_bytes
        + (w1.size + w2.size) * 2 + (b1.size + b2.size) * 4 + bnp.size * 4)
    cost = pl.CostEstimate(flops=4 * N * C * D * H, transcendentals=3 * C,
                           bytes_accessed=bytes_accessed)

    def _build(single_buffer_weights):
        # Constant-index weights/biases never get re-fetched: single-buffer them to free VMEM
        # (matters most on v7x's 64 MiB part).
        wkw = {"pipeline_mode": pl.Buffered(1)} if single_buffer_weights else {}
        return pl.pallas_call(
            mlp_block_kernel,
            out_shape=jax.ShapeDtypeStruct((N, C, D), out_dtype),
            grid=(C // tile_c,),
            in_specs=[
                pl.BlockSpec((N, tile_c, D), lambda i: (0, i, 0)),       # x, tiled over channels
                pl.BlockSpec((D, H), lambda i: (0, 0), **wkw),           # w1 (resident)
                pl.BlockSpec((1, H), lambda i: (0, 0), **wkw),           # b1
                pl.BlockSpec((H, D), lambda i: (0, 0), **wkw),           # w2 (resident)
                pl.BlockSpec((1, D), lambda i: (0, 0), **wkw),           # b2
                pl.BlockSpec((tile_c, 8), lambda i: (i, 0)),             # packed BN affine params
            ],
            out_specs=pl.BlockSpec((N, tile_c, D), lambda i: (0, i, 0)),
            compiler_params=pltpu.CompilerParams(
                dimension_semantics=("parallel",),       # channel tiles are independent (megacore)
                vmem_limit_bytes=vmem_budget,            # generation-aware scoped VMEM limit
            ),
            cost_estimate=cost,
        )

    args = (x, w1, b1, w2, b2, bnp)
    try:
        return jax.block_until_ready(_build(True)(*args))
    except Exception:
        # Fallback for JAX versions without single-buffered (pl.Buffered(1)) BlockSpecs.
        return _build(False)(*args)


def _reference(x, p):
    """Pure-JAX reference with identical forward semantics (bf16 matmul operands, f32
    accumulation, biased BN variance) for the correctness check."""
    bnp = p["bn"]

    def bn(y, g, b):
        m = jnp.mean(y, axis=(0, 2), keepdims=True)
        var = jnp.mean(y * y, axis=(0, 2), keepdims=True) - m * m
        return (y - m) * jax.lax.rsqrt(var + EPS) * g[None, :, None] + b[None, :, None]

    def lif(y):
        return (y * 0.5 >= 1.0).astype(y.dtype)

    h_skip = bn(x, bnp[:, 0], bnp[:, 1])
    y = jnp.einsum("ncd,dh->nch", x.astype(jnp.bfloat16), p["w1"].astype(jnp.bfloat16),
                   preferred_element_type=jnp.float32) + p["b1"][0][None, None, :]
    y = bn(y, bnp[:, 2], bnp[:, 3])
    s = lif(y)
    z = jnp.einsum("nch,hd->ncd", s.astype(jnp.bfloat16), p["w2"].astype(jnp.bfloat16),
                   preferred_element_type=jnp.float32) + p["b2"][0][None, None, :]
    z = bn(z, bnp[:, 4], bnp[:, 5])
    return lif(z + h_skip)


def make_params(key, dim, hidden_dim, bn_dim):
    ks = jax.random.split(key, 10)
    f32 = jnp.float32
    # BatchNorm affine params packed into one [C, 8] array (1 DMA instead of 6):
    #   cols: g_skip, b_skip, g1, be1, g2, be2, pad, pad
    g_skip = 1.0 + 0.1 * jax.random.normal(ks[4], (bn_dim,), f32)
    b_skip = 0.1 * jax.random.normal(ks[5], (bn_dim,), f32)
    g1 = 1.0 + 0.1 * jax.random.normal(ks[6], (bn_dim,), f32)
    be1 = 0.1 * jax.random.normal(ks[7], (bn_dim,), f32)
    g2 = 1.0 + 0.1 * jax.random.normal(ks[8], (bn_dim,), f32)
    be2 = 0.1 * jax.random.normal(ks[9], (bn_dim,), f32)
    pad = jnp.zeros((bn_dim,), f32)
    bn_pack = jnp.stack([g_skip, b_skip, g1, be1, g2, be2, pad, pad], axis=1)  # [C, 8]
    return {
        # nn.Linear(dim, hidden_dim): stored transposed so forward is x @ w1 + b1.
        # Weights kept in bf16 once at creation: no per-forward f32->bf16 HBM pass.
        "w1": (jax.random.normal(ks[0], (dim, hidden_dim), f32)
               / jnp.sqrt(dim).astype(f32)).astype(jnp.bfloat16),
        "b1": 0.1 * jax.random.normal(ks[1], (1, hidden_dim), f32),
        # nn.Linear(hidden_dim, dim)
        "w2": (jax.random.normal(ks[2], (hidden_dim, dim), f32)
               / jnp.sqrt(hidden_dim).astype(f32)).astype(jnp.bfloat16),
        "b2": 0.1 * jax.random.normal(ks[3], (1, dim), f32),
        "bn": bn_pack,
    }


if __name__ == "__main__":
    # Small but lane-dense shapes consistent with the module:
    # batch=8, bn_dim (tokens)=64, dim=128, hidden_dim=256.
    # The tile heuristic picks tile_c=32 -> grid of 2 channel tiles, M = N*tile_c = 256 MXU rows.
    N, C, D, H = 8, 64, 128, 256

    key = jax.random.PRNGKey(0)
    kx, kp = jax.random.split(key)
    x = 2.0 * jax.random.normal(kx, (N, C, D), jnp.float32)
    params = make_params(kp, dim=D, hidden_dim=H, bn_dim=C)

    out = jax.block_until_ready(mlp_block(x, params))
    ref = _reference(x, params)

    assert out.shape == (N, C, D)
    assert bool(jnp.all((out == 0.0) | (out == 1.0))), "output is not a spike tensor"
    # bf16 matmuls + differing accumulation/reduction order can flip spikes whose
    # pre-threshold value sits exactly at the LIF threshold, so require near-exact
    # agreement (mismatch fraction) rather than bitwise equality of the binary spikes.
    mismatch = float(jnp.mean(jnp.abs(out.astype(jnp.float32) - ref)))
    assert mismatch < 1e-2, f"spike mismatch fraction too large: {mismatch}"

    print("KERNEL_OK")
</pallas_src>

<mosaic_0001>
module attributes {stable_mosaic.version = 11 : i64} {
  func.func @mlp_block_kernel(%arg0: i32, %arg1: memref<8x32x128xf32, #tpu.memory_space<vmem>>, %arg2: memref<128x256xbf16, #tpu.memory_space<vmem>>, %arg3: memref<1x256xf32, #tpu.memory_space<vmem>>, %arg4: memref<256x128xbf16, #tpu.memory_space<vmem>>, %arg5: memref<1x128xf32, #tpu.memory_space<vmem>>, %arg6: memref<32x8xf32, #tpu.memory_space<vmem>>, %arg7: memref<8x32x128xbf16, #tpu.memory_space<vmem>>) attributes {dimension_semantics = [#tpu.dimension_semantics<parallel>], iteration_bounds = array<i64: 2>, scalar_prefetch = 0 : i64, scratch_operands = 0 : i64, tpu.core_type = #tpu.core_type<tc>, window_params = [{transform_indices = @transform_0, window_bounds = array<i64: 8, 32, 128>}, {pipeline_mode = #tpu.pipeline_mode<synchronous>, transform_indices = @transform_1, window_bounds = array<i64: 128, 256>}, {pipeline_mode = #tpu.pipeline_mode<synchronous>, transform_indices = @transform_2, window_bounds = array<i64: 1, 256>}, {pipeline_mode = #tpu.pipeline_mode<synchronous>, transform_indices = @transform_3, window_bounds = array<i64: 256, 128>}, {pipeline_mode = #tpu.pipeline_mode<synchronous>, transform_indices = @transform_4, window_bounds = array<i64: 1, 128>}, {transform_indices = @transform_5, window_bounds = array<i64: 32, 8>}, {transform_indices = @transform_6, window_bounds = array<i64: 8, 32, 128>}]} {
    %c0 = arith.constant 0 : index
    %c0_0 = arith.constant 0 : index
    %c0_1 = arith.constant 0 : index
    %0 = vector.load %arg1[%c0, %c0_0, %c0_1] : memref<8x32x128xf32, #tpu.memory_space<vmem>>, vector<8x32x128xf32>
    %c0_2 = arith.constant 0 : index
    %c0_3 = arith.constant 0 : index
    %1 = vector.load %arg6[%c0_2, %c0_3] : memref<32x8xf32, #tpu.memory_space<vmem>>, vector<32x8xf32>
    %2 = vector.extract_strided_slice %1 {offsets = [0, 0], sizes = [32, 1], strides = [1, 1]} : vector<32x8xf32> to vector<32x1xf32>
    %3 = vector.extract_strided_slice %1 {offsets = [0, 1], sizes = [32, 1], strides = [1, 1]} : vector<32x8xf32> to vector<32x1xf32>
    %4 = vector.extract_strided_slice %1 {offsets = [0, 2], sizes = [32, 1], strides = [1, 1]} : vector<32x8xf32> to vector<32x1xf32>
    %5 = vector.extract_strided_slice %1 {offsets = [0, 3], sizes = [32, 1], strides = [1, 1]} : vector<32x8xf32> to vector<32x1xf32>
    %6 = vector.extract_strided_slice %1 {offsets = [0, 4], sizes = [32, 1], strides = [1, 1]} : vector<32x8xf32> to vector<32x1xf32>
    %7 = vector.extract_strided_slice %1 {offsets = [0, 5], sizes = [32, 1], strides = [1, 1]} : vector<32x8xf32> to vector<32x1xf32>
    %cst = arith.constant dense<0.000000e+00> : vector<32x128xf32>
    %8 = vector.multi_reduction <add>, %0, %cst [0] : vector<8x32x128xf32> to vector<32x128xf32>
    %9 = vector.shape_cast %8 : vector<32x128xf32> to vector<1x32x128xf32>
    %cst_4 = arith.constant dense<0.000000e+00> : vector<1x32xf32>
    %10 = vector.multi_reduction <add>, %9, %cst_4 [2] : vector<1x32x128xf32> to vector<1x32xf32>
    %11 = vector.shape_cast %10 : vector<1x32xf32> to vector<1x32x1xf32>
    %12 = arith.mulf %0, %0 : vector<8x32x128xf32>
    %cst_5 = arith.constant dense<0.000000e+00> : vector<32x128xf32>
    %13 = vector.multi_reduction <add>, %12, %cst_5 [0] : vector<8x32x128xf32> to vector<32x128xf32>
    %14 = vector.shape_cast %13 : vector<32x128xf32> to vector<1x32x128xf32>
    %cst_6 = arith.constant dense<0.000000e+00> : vector<1x32xf32>
    %15 = vector.multi_reduction <add>, %14, %cst_6 [2] : vector<1x32x128xf32> to vector<1x32xf32>
    %16 = vector.shape_cast %15 : vector<1x32xf32> to vector<1x32x1xf32>
    %cst_7 = arith.constant 9.765625E-4 : f32
    %17 = vector.broadcast %cst_7 : f32 to vector<1x32x1xf32>
    %18 = arith.mulf %11, %17 : vector<1x32x1xf32>
    %cst_8 = arith.constant 9.765625E-4 : f32
    %19 = vector.broadcast %cst_8 : f32 to vector<1x32x1xf32>
    %20 = arith.mulf %16, %19 : vector<1x32x1xf32>
    %21 = arith.mulf %18, %18 : vector<1x32x1xf32>
    %22 = arith.subf %20, %21 : vector<1x32x1xf32>
    %cst_9 = arith.constant 0.000000e+00 : f32
    %23 = vector.broadcast %cst_9 : f32 to vector<1x32x1xf32>
    %24 = arith.maximumf %22, %23 : vector<1x32x1xf32>
    %cst_10 = arith.constant 9.99999974E-6 : f32
    %25 = vector.broadcast %cst_10 : f32 to vector<1x32x1xf32>
    %26 = arith.addf %24, %25 : vector<1x32x1xf32>
    %27 = math.rsqrt %26 : vector<1x32x1xf32>
    %28 = vector.shape_cast %2 : vector<32x1xf32> to vector<1x32x1xf32>
    %29 = arith.mulf %27, %28 : vector<1x32x1xf32>
    %30 = vector.shape_cast %3 : vector<32x1xf32> to vector<1x32x1xf32>
    %31 = arith.mulf %18, %29 : vector<1x32x1xf32>
    %32 = arith.subf %30, %31 : vector<1x32x1xf32>
    %33 = vector.broadcast %29 : vector<1x32x1xf32> to vector<8x32x128xf32>
    %34 = arith.mulf %0, %33 : vector<8x32x128xf32>
    %35 = vector.broadcast %32 : vector<1x32x1xf32> to vector<8x32x128xf32>
    %36 = arith.addf %34, %35 : vector<8x32x128xf32>
    %37 = arith.truncf %0 : vector<8x32x128xf32> to vector<8x32x128xbf16>
    %38 = vector.shape_cast %37 : vector<8x32x128xbf16> to vector<256x128xbf16>
    %c0_11 = arith.constant 0 : index
    %c0_12 = arith.constant 0 : index
    %39 = vector.load %arg2[%c0_11, %c0_12] : memref<128x256xbf16, #tpu.memory_space<vmem>>, vector<128x256xbf16>
    %cst_13 = arith.constant dense<0.000000e+00> : vector<256x256xf32>
    %40 = tpu.matmul %38, %39, %cst_13 {dimension_numbers = #tpu.dot_dimension_numbers<[1], [0], [0], [1], [0, 0, 1, 1], [], []>} : vector<256x128xbf16>, vector<128x256xbf16>, vector<256x256xf32> -> vector<256x256xf32>
    %c0_14 = arith.constant 0 : index
    %c0_15 = arith.constant 0 : index
    %41 = vector.load %arg3[%c0_14, %c0_15] : memref<1x256xf32, #tpu.memory_space<vmem>>, vector<1x256xf32>
    %42 = vector.broadcast %41 : vector<1x256xf32> to vector<256x256xf32>
    %43 = arith.addf %40, %42 : vector<256x256xf32>
    %44 = vector.shape_cast %43 : vector<256x256xf32> to vector<8x32x256xf32>
    %cst_16 = arith.constant dense<0.000000e+00> : vector<32x256xf32>
    %45 = vector.multi_reduction <add>, %44, %cst_16 [0] : vector<8x32x256xf32> to vector<32x256xf32>
    %46 = vector.shape_cast %45 : vector<32x256xf32> to vector<1x32x256xf32>
    %cst_17 = arith.constant dense<0.000000e+00> : vector<1x32xf32>
    %47 = vector.multi_reduction <add>, %46, %cst_17 [2] : vector<1x32x256xf32> to vector<1x32xf32>
    %48 = vector.shape_cast %47 : vector<1x32xf32> to vector<1x32x1xf32>
    %49 = arith.mulf %44, %44 : vector<8x32x256xf32>
    %cst_18 = arith.constant dense<0.000000e+00> : vector<32x256xf32>
    %50 = vector.multi_reduction <add>, %49, %cst_18 [0] : vector<8x32x256xf32> to vector<32x256xf32>
    %51 = vector.shape_cast %50 : vector<32x256xf32> to vector<1x32x256xf32>
    %cst_19 = arith.constant dense<0.000000e+00> : vector<1x32xf32>
    %52 = vector.multi_reduction <add>, %51, %cst_19 [2] : vector<1x32x256xf32> to vector<1x32xf32>
    %53 = vector.shape_cast %52 : vector<1x32xf32> to vector<1x32x1xf32>
    %cst_20 = arith.constant 4.8828125E-4 : f32
    %54 = vector.broadcast %cst_20 : f32 to vector<1x32x1xf32>
    %55 = arith.mulf %48, %54 : vector<1x32x1xf32>
    %cst_21 = arith.constant 4.8828125E-4 : f32
    %56 = vector.broadcast %cst_21 : f32 to vector<1x32x1xf32>
    %57 = arith.mulf %53, %56 : vector<1x32x1xf32>
    %58 = arith.mulf %55, %55 : vector<1x32x1xf32>
    %59 = arith.subf %57, %58 : vector<1x32x1xf32>
    %cst_22 = arith.constant 0.000000e+00 : f32
    %60 = vector.broadcast %cst_22 : f32 to vector<1x32x1xf32>
    %61 = arith.maximumf %59, %60 : vector<1x32x1xf32>
    %cst_23 = arith.constant 9.99999974E-6 : f32
    %62 = vector.broadcast %cst_23 : f32 to vector<1x32x1xf32>
    %63 = arith.addf %61, %62 : vector<1x32x1xf32>
    %64 = math.rsqrt %63 : vector<1x32x1xf32>
    %65 = vector.shape_cast %4 : vector<32x1xf32> to vector<1x32x1xf32>
    %66 = arith.mulf %64, %65 : vector<1x32x1xf32>
    %67 = vector.shape_cast %5 : vector<32x1xf32> to vector<1x32x1xf32>
    %68 = arith.mulf %55, %66 : vector<1x32x1xf32>
    %69 = arith.subf %67, %68 : vector<1x32x1xf32>
    %cst_24 = arith.constant 0.000000e+00 : f32
    %70 = vector.broadcast %cst_24 : f32 to vector<1x32x1xf32>
    %71 = arith.cmpf oge, %66, %70 : vector<1x32x1xf32>
    %cst_25 = arith.constant 1.000000e+00 : f32
    %cst_26 = arith.constant -1.000000e+00 : f32
    %72 = vector.broadcast %cst_25 : f32 to vector<1x32x1xf32>
    %73 = vector.broadcast %cst_26 : f32 to vector<1x32x1xf32>
    %74 = arith.select %71, %72, %73 : vector<1x32x1xi1>, vector<1x32x1xf32>
    %cst_27 = arith.constant 2.000000e+00 : f32
    %75 = vector.broadcast %cst_27 : f32 to vector<1x32x1xf32>
    %76 = arith.subf %75, %69 : vector<1x32x1xf32>
    %77 = math.absf %66 : vector<1x32x1xf32>
    %78 = arith.divf %76, %77 : vector<1x32x1xf32>
    %79 = vector.broadcast %74 : vector<1x32x1xf32> to vector<8x32x256xf32>
    %80 = arith.mulf %44, %79 : vector<8x32x256xf32>
    %81 = vector.broadcast %78 : vector<1x32x1xf32> to vector<8x32x256xf32>
    %82 = arith.cmpf oge, %80, %81 : vector<8x32x256xf32>
    %83 = arith.extui %82 : vector<8x32x256xi1> to vector<8x32x256xi32>
    %84 = arith.sitofp %83 : vector<8x32x256xi32> to vector<8x32x256xf32>
    %85 = arith.truncf %84 : vector<8x32x256xf32> to vector<8x32x256xbf16>
    %86 = vector.shape_cast %85 : vector<8x32x256xbf16> to vector<256x256xbf16>
    %c0_28 = arith.constant 0 : index
    %c0_29 = arith.constant 0 : index
    %87 = vector.load %arg4[%c0_28, %c0_29] : memref<256x128xbf16, #tpu.memory_space<vmem>>, vector<256x128xbf16>
    %cst_30 = arith.constant dense<0.000000e+00> : vector<256x128xf32>
    %88 = tpu.matmul %86, %87, %cst_30 {dimension_numbers = #tpu.dot_dimension_numbers<[1], [0], [0], [1], [0, 0, 1, 1], [], []>} : vector<256x256xbf16>, vector<256x128xbf16>, vector<256x128xf32> -> vector<256x128xf32>
    %c0_31 = arith.constant 0 : index
    %c0_32 = arith.constant 0 : index
    %89 = vector.load %arg5[%c0_31, %c0_32] : memref<1x128xf32, #tpu.memory_space<vmem>>, vector<1x128xf32>
    %90 = vector.broadcast %89 : vector<1x128xf32> to vector<256x128xf32>
    %91 = arith.addf %88, %90 : vector<256x128xf32>
    %92 = vector.shape_cast %91 : vector<256x128xf32> to vector<8x32x128xf32>
    %cst_33 = arith.constant dense<0.000000e+00> : vector<32x128xf32>
    %93 = vector.multi_reduction <add>, %92, %cst_33 [0] : vector<8x32x128xf32> to vector<32x128xf32>
    %94 = vector.shape_cast %93 : vector<32x128xf32> to vector<1x32x128xf32>
    %cst_34 = arith.constant dense<0.000000e+00> : vector<1x32xf32>
    %95 = vector.multi_reduction <add>, %94, %cst_34 [2] : vector<1x32x128xf32> to vector<1x32xf32>
    %96 = vector.shape_cast %95 : vector<1x32xf32> to vector<1x32x1xf32>
    %97 = arith.mulf %92, %92 : vector<8x32x128xf32>
    %cst_35 = arith.constant dense<0.000000e+00> : vector<32x128xf32>
    %98 = vector.multi_reduction <add>, %97, %cst_35 [0] : vector<8x32x128xf32> to vector<32x128xf32>
    %99 = vector.shape_cast %98 : vector<32x128xf32> to vector<1x32x128xf32>
    %cst_36 = arith.constant dense<0.000000e+00> : vector<1x32xf32>
    %100 = vector.multi_reduction <add>, %99, %cst_36 [2] : vector<1x32x128xf32> to vector<1x32xf32>
    %101 = vector.shape_cast %100 : vector<1x32xf32> to vector<1x32x1xf32>
    %cst_37 = arith.constant 9.765625E-4 : f32
    %102 = vector.broadcast %cst_37 : f32 to vector<1x32x1xf32>
    %103 = arith.mulf %96, %102 : vector<1x32x1xf32>
    %cst_38 = arith.constant 9.765625E-4 : f32
    %104 = vector.broadcast %cst_38 : f32 to vector<1x32x1xf32>
    %105 = arith.mulf %101, %104 : vector<1x32x1xf32>
    %106 = arith.mulf %103, %103 : vector<1x32x1xf32>
    %107 = arith.subf %105, %106 : vector<1x32x1xf32>
    %cst_39 = arith.constant 0.000000e+00 : f32
    %108 = vector.broadcast %cst_39 : f32 to vector<1x32x1xf32>
    %109 = arith.maximumf %107, %108 : vector<1x32x1xf32>
    %cst_40 = arith.constant 9.99999974E-6 : f32
    %110 = vector.broadcast %cst_40 : f32 to vector<1x32x1xf32>
    %111 = arith.addf %109, %110 : vector<1x32x1xf32>
    %112 = math.rsqrt %111 : vector<1x32x1xf32>
    %113 = vector.shape_cast %6 : vector<32x1xf32> to vector<1x32x1xf32>
    %114 = arith.mulf %112, %113 : vector<1x32x1xf32>
    %115 = vector.shape_cast %7 : vector<32x1xf32> to vector<1x32x1xf32>
    %116 = arith.mulf %103, %114 : vector<1x32x1xf32>
    %117 = arith.subf %115, %116 : vector<1x32x1xf32>
    %118 = vector.broadcast %114 : vector<1x32x1xf32> to vector<8x32x128xf32>
    %119 = arith.mulf %92, %118 : vector<8x32x128xf32>
    %120 = vector.broadcast %117 : vector<1x32x1xf32> to vector<8x32x128xf32>
    %121 = arith.addf %119, %120 : vector<8x32x128xf32>
    %122 = arith.addf %121, %36 : vector<8x32x128xf32>
    %cst_41 = arith.constant 2.000000e+00 : f32
    %123 = vector.broadcast %cst_41 : f32 to vector<8x32x128xf32>
    %124 = arith.cmpf oge, %122, %123 : vector<8x32x128xf32>
    %125 = arith.extui %124 : vector<8x32x128xi1> to vector<8x32x128xi32>
    %126 = arith.sitofp %125 : vector<8x32x128xi32> to vector<8x32x128xf32>
    %127 = arith.truncf %126 : vector<8x32x128xf32> to vector<8x32x128xbf16>
    %c0_42 = arith.constant 0 : index
    %c0_43 = arith.constant 0 : index
    %c0_44 = arith.constant 0 : index
    %128 = vector.load %arg7[%c0_42, %c0_43, %c0_44] : memref<8x32x128xbf16, #tpu.memory_space<vmem>>, vector<8x32x128xbf16>
    tpu.vector_store %arg7[%c0_42, %c0_43, %c0_44], %127 {strides = array<i32>} : memref<8x32x128xbf16, #tpu.memory_space<vmem>>, vector<8x32x128xbf16>,
    return
  }
  func.func @transform_0(%arg0: i32) -> (i32, i32, i32) {
    %c0_i32 = arith.constant 0 : i32
    %c0_i32_0 = arith.constant 0 : i32
    %c0_i32_1 = arith.constant 0 : i32
    return %c0_i32, %arg0, %c0_i32_0 : i32, i32, i32
  }
  func.func @transform_1(%arg0: i32) -> (i32, i32) {
    %c0_i32 = arith.constant 0 : i32
    %c0_i32_0 = arith.constant 0 : i32
    %c0_i32_1 = arith.constant 0 : i32
    return %c0_i32, %c0_i32_0 : i32, i32
  }
  func.func @transform_2(%arg0: i32) -> (i32, i32) {
    %c0_i32 = arith.constant 0 : i32
    %c0_i32_0 = arith.constant 0 : i32
    %c0_i32_1 = arith.constant 0 : i32
    return %c0_i32, %c0_i32_0 : i32, i32
  }
  func.func @transform_3(%arg0: i32) -> (i32, i32) {
    %c0_i32 = arith.constant 0 : i32
    %c0_i32_0 = arith.constant 0 : i32
    %c0_i32_1 = arith.constant 0 : i32
    return %c0_i32, %c0_i32_0 : i32, i32
  }
  func.func @transform_4(%arg0: i32) -> (i32, i32) {
    %c0_i32 = arith.constant 0 : i32
    %c0_i32_0 = arith.constant 0 : i32
    %c0_i32_1 = arith.constant 0 : i32
    return %c0_i32, %c0_i32_0 : i32, i32
  }
  func.func @transform_5(%arg0: i32) -> (i32, i32) {
    %c0_i32 = arith.constant 0 : i32
    %c0_i32_0 = arith.constant 0 : i32
    return %arg0, %c0_i32 : i32, i32
  }
  func.func @transform_6(%arg0: i32) -> (i32, i32, i32) {
    %c0_i32 = arith.constant 0 : i32
    %c0_i32_0 = arith.constant 0 : i32
    %c0_i32_1 = arith.constant 0 : i32
    return %c0_i32, %arg0, %c0_i32_0 : i32, i32, i32
  }
}

module attributes {stable_mosaic.version = 11 : i64} {
  func.func @mlp_block_kernel(%arg0: i32, %arg1: memref<8x32x128xf32, #tpu.memory_space<vmem>>, %arg2: memref<128x256xbf16, #tpu.memory_space<vmem>>, %arg3: memref<1x256xf32, #tpu.memory_space<vmem>>, %arg4: memref<256x128xbf16, #tpu.memory_space<vmem>>, %arg5: memref<1x128xf32, #tpu.memory_space<vmem>>, %arg6: memref<32x8xf32, #tpu.memory_space<vmem>>, %arg7: memref<8x32x128xbf16, #tpu.memory_space<vmem>>) attributes {dimension_semantics = [#tpu.dimension_semantics<parallel>], iteration_bounds = array<i64: 2>, scalar_prefetch = 0 : i64, scratch_operands = 0 : i64, tpu.core_type = #tpu.core_type<tc>, window_params = [{transform_indices = @transform_0, window_bounds = array<i64: 8, 32, 128>}, {pipeline_mode = #tpu.pipeline_mode<synchronous>, transform_indices = @transform_1, window_bounds = array<i64: 128, 256>}, {pipeline_mode = #tpu.pipeline_mode<synchronous>, transform_indices = @transform_2, window_bounds = array<i64: 1, 256>}, {pipeline_mode = #tpu.pipeline_mode<synchronous>, transform_indices = @transform_3, window_bounds = array<i64: 256, 128>}, {pipeline_mode = #tpu.pipeline_mode<synchronous>, transform_indices = @transform_4, window_bounds = array<i64: 1, 128>}, {transform_indices = @transform_5, window_bounds = array<i64: 32, 8>}, {transform_indices = @transform_6, window_bounds = array<i64: 8, 32, 128>}]} {
    %c0 = arith.constant 0 : index
    %c0_0 = arith.constant 0 : index
    %c0_1 = arith.constant 0 : index
    %0 = vector.load %arg1[%c0, %c0_0, %c0_1] : memref<8x32x128xf32, #tpu.memory_space<vmem>>, vector<8x32x128xf32>
    %c0_2 = arith.constant 0 : index
    %c0_3 = arith.constant 0 : index
    %1 = vector.load %arg6[%c0_2, %c0_3] : memref<32x8xf32, #tpu.memory_space<vmem>>, vector<32x8xf32>
    %2 = vector.extract_strided_slice %1 {offsets = [0, 0], sizes = [32, 1], strides = [1, 1]} : vector<32x8xf32> to vector<32x1xf32>
    %3 = vector.extract_strided_slice %1 {offsets = [0, 1], sizes = [32, 1], strides = [1, 1]} : vector<32x8xf32> to vector<32x1xf32>
    %4 = vector.extract_strided_slice %1 {offsets = [0, 2], sizes = [32, 1], strides = [1, 1]} : vector<32x8xf32> to vector<32x1xf32>
    %5 = vector.extract_strided_slice %1 {offsets = [0, 3], sizes = [32, 1], strides = [1, 1]} : vector<32x8xf32> to vector<32x1xf32>
    %6 = vector.extract_strided_slice %1 {offsets = [0, 4], sizes = [32, 1], strides = [1, 1]} : vector<32x8xf32> to vector<32x1xf32>
    %7 = vector.extract_strided_slice %1 {offsets = [0, 5], sizes = [32, 1], strides = [1, 1]} : vector<32x8xf32> to vector<32x1xf32>
    %cst = arith.constant dense<0.000000e+00> : vector<32x128xf32>
    %8 = vector.multi_reduction <add>, %0, %cst [0] : vector<8x32x128xf32> to vector<32x128xf32>
    %9 = vector.shape_cast %8 : vector<32x128xf32> to vector<1x32x128xf32>
    %cst_4 = arith.constant dense<0.000000e+00> : vector<1x32xf32>
    %10 = vector.multi_reduction <add>, %9, %cst_4 [2] : vector<1x32x128xf32> to vector<1x32xf32>
    %11 = vector.shape_cast %10 : vector<1x32xf32> to vector<1x32x1xf32>
    %12 = arith.mulf %0, %0 : vector<8x32x128xf32>
    %cst_5 = arith.constant dense<0.000000e+00> : vector<32x128xf32>
    %13 = vector.multi_reduction <add>, %12, %cst_5 [0] : vector<8x32x128xf32> to vector<32x128xf32>
    %14 = vector.shape_cast %13 : vector<32x128xf32> to vector<1x32x128xf32>
    %cst_6 = arith.constant dense<0.000000e+00> : vector<1x32xf32>
    %15 = vector.multi_reduction <add>, %14, %cst_6 [2] : vector<1x32x128xf32> to vector<1x32xf32>
    %16 = vector.shape_cast %15 : vector<1x32xf32> to vector<1x32x1xf32>
    %cst_7 = arith.constant 9.765625E-4 : f32
    %17 = vector.broadcast %cst_7 : f32 to vector<1x32x1xf32>
    %18 = arith.mulf %11, %17 : vector<1x32x1xf32>
    %cst_8 = arith.constant 9.765625E-4 : f32
    %19 = vector.broadcast %cst_8 : f32 to vector<1x32x1xf32>
    %20 = arith.mulf %16, %19 : vector<1x32x1xf32>
    %21 = arith.mulf %18, %18 : vector<1x32x1xf32>
    %22 = arith.subf %20, %21 : vector<1x32x1xf32>
    %cst_9 = arith.constant 0.000000e+00 : f32
    %23 = vector.broadcast %cst_9 : f32 to vector<1x32x1xf32>
    %24 = arith.maximumf %22, %23 : vector<1x32x1xf32>
    %cst_10 = arith.constant 9.99999974E-6 : f32
    %25 = vector.broadcast %cst_10 : f32 to vector<1x32x1xf32>
    %26 = arith.addf %24, %25 : vector<1x32x1xf32>
    %27 = math.rsqrt %26 : vector<1x32x1xf32>
    %28 = vector.shape_cast %2 : vector<32x1xf32> to vector<1x32x1xf32>
    %29 = arith.mulf %27, %28 : vector<1x32x1xf32>
    %30 = vector.shape_cast %3 : vector<32x1xf32> to vector<1x32x1xf32>
    %31 = arith.mulf %18, %29 : vector<1x32x1xf32>
    %32 = arith.subf %30, %31 : vector<1x32x1xf32>
    %33 = vector.broadcast %29 : vector<1x32x1xf32> to vector<8x32x128xf32>
    %34 = arith.mulf %0, %33 : vector<8x32x128xf32>
    %35 = vector.broadcast %32 : vector<1x32x1xf32> to vector<8x32x128xf32>
    %36 = arith.addf %34, %35 : vector<8x32x128xf32>
    %37 = arith.truncf %0 : vector<8x32x128xf32> to vector<8x32x128xbf16>
    %38 = vector.shape_cast %37 : vector<8x32x128xbf16> to vector<256x128xbf16>
    %c0_11 = arith.constant 0 : index
    %c0_12 = arith.constant 0 : index
    %39 = vector.load %arg2[%c0_11, %c0_12] : memref<128x256xbf16, #tpu.memory_space<vmem>>, vector<128x256xbf16>
    %cst_13 = arith.constant dense<0.000000e+00> : vector<256x256xf32>
    %40 = tpu.matmul %38, %39, %cst_13 {dimension_numbers = #tpu.dot_dimension_numbers<[1], [0], [0], [1], [0, 0, 1, 1], [], []>} : vector<256x128xbf16>, vector<128x256xbf16>, vector<256x256xf32> -> vector<256x256xf32>
    %c0_14 = arith.constant 0 : index
    %c0_15 = arith.constant 0 : index
    %41 = vector.load %arg3[%c0_14, %c0_15] : memref<1x256xf32, #tpu.memory_space<vmem>>, vector<1x256xf32>
    %42 = vector.broadcast %41 : vector<1x256xf32> to vector<256x256xf32>
    %43 = arith.addf %40, %42 : vector<256x256xf32>
    %44 = vector.shape_cast %43 : vector<256x256xf32> to vector<8x32x256xf32>
    %cst_16 = arith.constant dense<0.000000e+00> : vector<32x256xf32>
    %45 = vector.multi_reduction <add>, %44, %cst_16 [0] : vector<8x32x256xf32> to vector<32x256xf32>
    %46 = vector.shape_cast %45 : vector<32x256xf32> to vector<1x32x256xf32>
    %cst_17 = arith.constant dense<0.000000e+00> : vector<1x32xf32>
    %47 = vector.multi_reduction <add>, %46, %cst_17 [2] : vector<1x32x256xf32> to vector<1x32xf32>
    %48 = vector.shape_cast %47 : vector<1x32xf32> to vector<1x32x1xf32>
    %49 = arith.mulf %44, %44 : vector<8x32x256xf32>
    %cst_18 = arith.constant dense<0.000000e+00> : vector<32x256xf32>
    %50 = vector.multi_reduction <add>, %49, %cst_18 [0] : vector<8x32x256xf32> to vector<32x256xf32>
    %51 = vector.shape_cast %50 : vector<32x256xf32> to vector<1x32x256xf32>
    %cst_19 = arith.constant dense<0.000000e+00> : vector<1x32xf32>
    %52 = vector.multi_reduction <add>, %51, %cst_19 [2] : vector<1x32x256xf32> to vector<1x32xf32>
    %53 = vector.shape_cast %52 : vector<1x32xf32> to vector<1x32x1xf32>
    %cst_20 = arith.constant 4.8828125E-4 : f32
    %54 = vector.broadcast %cst_20 : f32 to vector<1x32x1xf32>
    %55 = arith.mulf %48, %54 : vector<1x32x1xf32>
    %cst_21 = arith.constant 4.8828125E-4 : f32
    %56 = vector.broadcast %cst_21 : f32 to vector<1x32x1xf32>
    %57 = arith.mulf %53, %56 : vector<1x32x1xf32>
    %58 = arith.mulf %55, %55 : vector<1x32x1xf32>
    %59 = arith.subf %57, %58 : vector<1x32x1xf32>
    %cst_22 = arith.constant 0.000000e+00 : f32
    %60 = vector.broadcast %cst_22 : f32 to vector<1x32x1xf32>
    %61 = arith.maximumf %59, %60 : vector<1x32x1xf32>
    %cst_23 = arith.constant 9.99999974E-6 : f32
    %62 = vector.broadcast %cst_23 : f32 to vector<1x32x1xf32>
    %63 = arith.addf %61, %62 : vector<1x32x1xf32>
    %64 = math.rsqrt %63 : vector<1x32x1xf32>
    %65 = vector.shape_cast %4 : vector<32x1xf32> to vector<1x32x1xf32>
    %66 = arith.mulf %64, %65 : vector<1x32x1xf32>
    %67 = vector.shape_cast %5 : vector<32x1xf32> to vector<1x32x1xf32>
    %68 = arith.mulf %55, %66 : vector<1x32x1xf32>
    %69 = arith.subf %67, %68 : vector<1x32x1xf32>
    %cst_24 = arith.constant 0.000000e+00 : f32
    %70 = vector.broadcast %cst_24 : f32 to vector<1x32x1xf32>
    %71 = arith.cmpf oge, %66, %70 : vector<1x32x1xf32>
    %cst_25 = arith.constant 1.000000e+00 : f32
    %cst_26 = arith.constant -1.000000e+00 : f32
    %72 = vector.broadcast %cst_25 : f32 to vector<1x32x1xf32>
    %73 = vector.broadcast %cst_26 : f32 to vector<1x32x1xf32>
    %74 = arith.select %71, %72, %73 : vector<1x32x1xi1>, vector<1x32x1xf32>
    %cst_27 = arith.constant 2.000000e+00 : f32
    %75 = vector.broadcast %cst_27 : f32 to vector<1x32x1xf32>
    %76 = arith.subf %75, %69 : vector<1x32x1xf32>
    %77 = math.absf %66 : vector<1x32x1xf32>
    %78 = arith.divf %76, %77 : vector<1x32x1xf32>
    %79 = vector.broadcast %74 : vector<1x32x1xf32> to vector<8x32x256xf32>
    %80 = arith.mulf %44, %79 : vector<8x32x256xf32>
    %81 = vector.broadcast %78 : vector<1x32x1xf32> to vector<8x32x256xf32>
    %82 = arith.cmpf oge, %80, %81 : vector<8x32x256xf32>
    %83 = arith.extui %82 : vector<8x32x256xi1> to vector<8x32x256xi32>
    %84 = arith.sitofp %83 : vector<8x32x256xi32> to vector<8x32x256xf32>
    %85 = arith.truncf %84 : vector<8x32x256xf32> to vector<8x32x256xbf16>
    %86 = vector.shape_cast %85 : vector<8x32x256xbf16> to vector<256x256xbf16>
    %c0_28 = arith.constant 0 : index
    %c0_29 = arith.constant 0 : index
    %87 = vector.load %arg4[%c0_28, %c0_29] : memref<256x128xbf16, #tpu.memory_space<vmem>>, vector<256x128xbf16>
    %cst_30 = arith.constant dense<0.000000e+00> : vector<256x128xf32>
    %88 = tpu.matmul %86, %87, %cst_30 {dimension_numbers = #tpu.dot_dimension_numbers<[1], [0], [0], [1], [0, 0, 1, 1], [], []>} : vector<256x256xbf16>, vector<256x128xbf16>, vector<256x128xf32> -> vector<256x128xf32>
    %c0_31 = arith.constant 0 : index
    %c0_32 = arith.constant 0 : index
    %89 = vector.load %arg5[%c0_31, %c0_32] : memref<1x128xf32, #tpu.memory_space<vmem>>, vector<1x128xf32>
    %90 = vector.broadcast %89 : vector<1x128xf32> to vector<256x128xf32>
    %91 = arith.addf %88, %90 : vector<256x128xf32>
    %92 = vector.shape_cast %91 : vector<256x128xf32> to vector<8x32x128xf32>
    %cst_33 = arith.constant dense<0.000000e+00> : vector<32x128xf32>
    %93 = vector.multi_reduction <add>, %92, %cst_33 [0] : vector<8x32x128xf32> to vector<32x128xf32>
    %94 = vector.shape_cast %93 : vector<32x128xf32> to vector<1x32x128xf32>
    %cst_34 = arith.constant dense<0.000000e+00> : vector<1x32xf32>
    %95 = vector.multi_reduction <add>, %94, %cst_34 [2] : vector<1x32x128xf32> to vector<1x32xf32>
    %96 = vector.shape_cast %95 : vector<1x32xf32> to vector<1x32x1xf32>
    %97 = arith.mulf %92, %92 : vector<8x32x128xf32>
    %cst_35 = arith.constant dense<0.000000e+00> : vector<32x128xf32>
    %98 = vector.multi_reduction <add>, %97, %cst_35 [0] : vector<8x32x128xf32> to vector<32x128xf32>
    %99 = vector.shape_cast %98 : vector<32x128xf32> to vector<1x32x128xf32>
    %cst_36 = arith.constant dense<0.000000e+00> : vector<1x32xf32>
    %100 = vector.multi_reduction <add>, %99, %cst_36 [2] : vector<1x32x128xf32> to vector<1x32xf32>
    %101 = vector.shape_cast %100 : vector<1x32xf32> to vector<1x32x1xf32>
    %cst_37 = arith.constant 9.765625E-4 : f32
    %102 = vector.broadcast %cst_37 : f32 to vector<1x32x1xf32>
    %103 = arith.mulf %96, %102 : vector<1x32x1xf32>
    %cst_38 = arith.constant 9.765625E-4 : f32
    %104 = vector.broadcast %cst_38 : f32 to vector<1x32x1xf32>
    %105 = arith.mulf %101, %104 : vector<1x32x1xf32>
    %106 = arith.mulf %103, %103 : vector<1x32x1xf32>
    %107 = arith.subf %105, %106 : vector<1x32x1xf32>
    %cst_39 = arith.constant 0.000000e+00 : f32
    %108 = vector.broadcast %cst_39 : f32 to vector<1x32x1xf32>
    %109 = arith.maximumf %107, %108 : vector<1x32x1xf32>
    %cst_40 = arith.constant 9.99999974E-6 : f32
    %110 = vector.broadcast %cst_40 : f32 to vector<1x32x1xf32>
    %111 = arith.addf %109, %110 : vector<1x32x1xf32>
    %112 = math.rsqrt %111 : vector<1x32x1xf32>
    %113 = vector.shape_cast %6 : vector<32x1xf32> to vector<1x32x1xf32>
    %114 = arith.mulf %112, %113 : vector<1x32x1xf32>
    %115 = vector.shape_cast %7 : vector<32x1xf32> to vector<1x32x1xf32>
    %116 = arith.mulf %103, %114 : vector<1x32x1xf32>
    %117 = arith.subf %115, %116 : vector<1x32x1xf32>
    %118 = vector.broadcast %114 : vector<1x32x1xf32> to vector<8x32x128xf32>
    %119 = arith.mulf %92, %118 : vector<8x32x128xf32>
    %120 = vector.broadcast %117 : vector<1x32x1xf32> to vector<8x32x128xf32>
    %121 = arith.addf %119, %120 : vector<8x32x128xf32>
    %122 = arith.addf %121, %36 : vector<8x32x128xf32>
    %cst_41 = arith.constant 2.000000e+00 : f32
    %123 = vector.broadcast %cst_41 : f32 to vector<8x32x128xf32>
    %124 = arith.cmpf oge, %122, %123 : vector<8x32x128xf32>
    %125 = arith.extui %124 : vector<8x32x128xi1> to vector<8x32x128xi32>
    %126 = arith.sitofp %125 : vector<8x32x128xi32> to vector<8x32x128xf32>
    %127 = arith.truncf %126 : vector<8x32x128xf32> to vector<8x32x128xbf16>
    %c0_42 = arith.constant 0 : index
    %c0_43 = arith.constant 0 : index
    %c0_44 = arith.constant 0 : index
    %128 = vector.load %arg7[%c0_42, %c0_43, %c0_44] : memref<8x32x128xbf16, #tpu.memory_space<vmem>>, vector<8x32x128xbf16>
    tpu.vector_store %arg7[%c0_42, %c0_43, %c0_44], %127 {strides = array<i32>} : memref<8x32x128xbf16, #tpu.memory_space<vmem>>, vector<8x32x128xbf16>,
    return
  }
  func.func @transform_0(%arg0: i32) -> (i32, i32, i32) {
    %c0_i32 = arith.constant 0 : i32
    %c0_i32_0 = arith.constant 0 : i32
    %c0_i32_1 = arith.constant 0 : i32
    return %c0_i32, %arg0, %c0_i32_0 : i32, i32, i32
  }
  func.func @transform_1(%arg0: i32) -> (i32, i32) {
    %c0_i32 = arith.constant 0 : i32
    %c0_i32_0 = arith.constant 0 : i32
    %c0_i32_1 = arith.constant 0 : i32
    return %c0_i32, %c0_i32_0 : i32, i32
  }
  func.func @transform_2(%arg0: i32) -> (i32, i32) {
    %c0_i32 = arith.constant 0 : i32
    %c0_i32_0 = arith.constant 0 : i32
    %c0_i32_1 = arith.constant 0 : i32
    return %c0_i32, %c0_i32_0 : i32, i32
  }
  func.func @transform_3(%arg0: i32) -> (i32, i32) {
    %c0_i32 = arith.constant 0 : i32
    %c0_i32_0 = arith.constant 0 : i32
    %c0_i32_1 = arith.constant 0 : i32
    return %c0_i32, %c0_i32_0 : i32, i32
  }
  func.func @transform_4(%arg0: i32) -> (i32, i32) {
    %c0_i32 = arith.constant 0 : i32
    %c0_i32_0 = arith.constant 0 : i32
    %c0_i32_1 = arith.constant 0 : i32
    return %c0_i32, %c0_i32_0 : i32, i32
  }
  func.func @transform_5(%arg0: i32) -> (i32, i32) {
    %c0_i32 = arith.constant 0 : i32
    %c0_i32_0 = arith.constant 0 : i32
    return %arg0, %c0_i32 : i32, i32
  }
  func.func @transform_6(%arg0: i32) -> (i32, i32, i32) {
    %c0_i32 = arith.constant 0 : i32
    %c0_i32_0 = arith.constant 0 : i32
    %c0_i32_1 = arith.constant 0 : i32
    return %c0_i32, %arg0, %c0_i32_0 : i32, i32, i32
  }
}

</mosaic_0001>

<llo_original>
// kernel: tpu_custom_call.1
$region0: #{tpu_custom_call.1}
  #allocation0 [shape = 'u32[]', space=smem, size = 0x4, offset = 0x4, fixed_abs, tag = 'smem constant byte address 0x4 - core index']
  #allocation1 [shape = 'u32[144,128]{1,0:T(1,128)}', space=vmem, size = 0x12000, scoped, tag = 'internal scratch']
  #allocation9 [shape = 's32[]', space=sflag, size = 0x4, offset = 0, fixed_abs, tag = 'sflag constant byte address 0x0 - dummy sync flag']
  #allocation11 [shape = 's32[]', space=sflag, size = 0x4, offset = 0, fixed_abs, tag = 'sflag constant byte address 0x0 - dummy sync flag']
  %s0 = inlined_call_operand.hbm [shape: f32[8,64,128], index: 0, kind: input, shape index: {}]
  %s1 = inlined_call_operand.hbm [shape: bf16[128,256], index: 1, kind: input, shape index: {}]
  %s2 = inlined_call_operand.vmem [shape: f32[1,256], index: 2, kind: input, shape index: {}]
  %s3 = inlined_call_operand.hbm [shape: bf16[256,128], index: 3, kind: input, shape index: {}]
  %s4 = inlined_call_operand.vmem [shape: f32[1,128], index: 4, kind: input, shape index: {}]
  %s5 = inlined_call_operand.vmem [shape: f32[64,8], index: 5, kind: input, shape index: {}]
  %s6 = inlined_call_operand.hbm [shape: bf16[8,64,128], index: 6, kind: output, shape index: {}]
  %s7 = sld [smem:[#allocation0]]
  $region69: #{tpu_custom_call.1} parent=0
    _
  %s9 = ssub.s32 1, %s7
  %s10 = scalar_select 0, %s9, %s7
  $region1: #{tpu_custom_call.1} parent=0
    #allocation2 [shape = 'u8[262144]{0}', space=vmem, size = 0x40000, scoped, tag = 'input window, operand 0']
    #allocation3 [shape = 's32[2]{0}', space=sflag, size = 0x8, scoped, tag = 'scoped memory for tpu_custom_call.1']
    #allocation4 [shape = 's32[2]{0}', space=sflag, size = 0x8, scoped, tag = 'scoped memory for tpu_custom_call.1']
    #allocation5 [shape = 'u8[65536]{0}', space=vmem, size = 0x10000, scoped, tag = 'input window, operand 1, single buffered']
    #allocation6 [shape = 's32[1]{0}', space=sflag, size = 0x4, scoped, tag = 'scoped memory for tpu_custom_call.1']
    #allocation7 [shape = 'u8[65536]{0}', space=vmem, size = 0x10000, scoped, tag = 'input window, operand 3, single buffered']
    #allocation8 [shape = 'u8[131072]{0}', space=vmem, size = 0x20000, scoped, tag = 'output window, operand 0']
    %11 = vsyncpa [#allocation3], 0
    %s12 = scalar_lea.sflag [#allocation3], 1
    %13 = vsyncpa %s12, 0
    %14 = vsyncpa [#allocation6], 0
    %15 = vsyncpa [#allocation4], 0
    %s16 = scalar_lea.sflag [#allocation4], 1
    %17 = vsyncpa %s16, 0
    loop: start=0, step=1, limit=4
    $region2: #{tpu_custom_call.1} parent=1 // loop_pre_header
      _
    $region3: #{tpu_custom_call.1} parent=1 // loop_header
      %s19 = sphi 0, %s23
      %p20 = scmp.ge.s32.totalorder %s19, 4
      %s29 = sphi 0, %s31
      %s32 = sphi 0, %s29
      %s33 = sphi 0, %s32
      %s49 = sphi 0, %s33
      %s53 = sphi 0, %s53
      %s55 = sphi 0, %s53
      %s56 = sphi 0, %s55
      %s70 = sphi 0, %s56
      %s74 = sphi 0, %s74
      %s76 = sphi 0, %s74
      %s77 = sphi 0, %s76
      %s91 = sphi 0, %s77
      %s95 = sphi 0, %s95
      %s97 = sphi 0, %s95
      %s98 = sphi 0, %s97
      %s112 = sphi 0, %s98
      %s116 = sphi 0, %s116
      %s118 = sphi 0, %s116
      %s119 = sphi 0, %s118
      %s133 = sphi 0, %s119
      %s139 = sphi 0, %s141
      %s142 = sphi 0, %s139
      %s143 = sphi 0, %s142
      %s159 = sphi 0, %s143
      %s165 = sphi 0, %s167
      %s168 = sphi 0, %s165
      %s169 = sphi 0, %s168
      %s185 = sphi 0, %s169
    $region4: #{tpu_custom_call.1} parent=1 // loop_header_branch
      %22 = sbr.rel (%p20) target = $region8
    $region5: #{tpu_custom_call.1} parent=1 // loop_body
      %s24 = ssub.s32 %s19, 1
      %s25 = ssub.s32 %s19, 2
      %s26 = sadd.s32 %s19, 1
      %s27 = ssub.s32 %s19, %s26
      %p28 = scmp.eq.s32.totalorder %s27, 0
      %s30 = sadd.s32 %s29, 1
      %s31 = scalar_select %p28, %s29, %s30
      %p34 = pneg %p28
      %p35 = scmp.eq.s32.totalorder %s19, 1
      %p36 = por %p34, %p35
      %p37 = scmp.ne.s32.totalorder %s29, %s32
      %p38 = scmp.eq.s32.totalorder %s19, 0
      %p39 = por %p37, %p38
      %p40 = scmp.ne.s32.totalorder %s29, %s32
      %p41 = scmp.eq.s32.totalorder %s24, 1
      %p42 = por %p40, %p41
      %p43 = scmp.ne.s32.totalorder %s32, %s33
      %p44 = scmp.eq.s32.totalorder %s24, 0
      %p45 = por %p43, %p44
      %p46 = scmp.ne.s32.totalorder %s32, %s33
      %p47 = scmp.eq.s32.totalorder %s25, 1
      %p48 = por %p46, %p47
      %p50 = scmp.ne.s32.totalorder %s33, %s49
      %p51 = scmp.eq.s32.totalorder %s25, 0
      %p52 = por %p50, %p51
      %s54 = sadd.s32 %s53, 1
      %p57 = scmp.eq.s32.totalorder %s19, 1
      %p58 = scmp.ne.s32.totalorder %s53, %s55
      %p59 = scmp.eq.s32.totalorder %s19, 0
      %p60 = por %p58, %p59
      %p61 = scmp.ne.s32.totalorder %s53, %s55
      %p62 = scmp.eq.s32.totalorder %s24, 1
      %p63 = por %p61, %p62
      %p64 = scmp.ne.s32.totalorder %s55, %s56
      %p65 = scmp.eq.s32.totalorder %s24, 0
      %p66 = por %p64, %p65
      %p67 = scmp.ne.s32.totalorder %s55, %s56
      %p68 = scmp.eq.s32.totalorder %s25, 1
      %p69 = por %p67, %p68
      %p71 = scmp.ne.s32.totalorder %s56, %s70
      %p72 = scmp.eq.s32.totalorder %s25, 0
      %p73 = por %p71, %p72
      %s75 = sadd.s32 %s74, 1
      %p78 = scmp.eq.s32.totalorder %s19, 1
      %p79 = scmp.ne.s32.totalorder %s74, %s76
      %p80 = scmp.eq.s32.totalorder %s19, 0
      %p81 = por %p79, %p80
      %p82 = scmp.ne.s32.totalorder %s74, %s76
      %p83 = scmp.eq.s32.totalorder %s24, 1
      %p84 = por %p82, %p83
      %p85 = scmp.ne.s32.totalorder %s76, %s77
      %p86 = scmp.eq.s32.totalorder %s24, 0
      %p87 = por %p85, %p86
      %p88 = scmp.ne.s32.totalorder %s76, %s77
      %p89 = scmp.eq.s32.totalorder %s25, 1
      %p90 = por %p88, %p89
      %p92 = scmp.ne.s32.totalorder %s77, %s91
      %p93 = scmp.eq.s32.totalorder %s25, 0
      %p94 = por %p92, %p93
      %s96 = sadd.s32 %s95, 1
      %p99 = scmp.eq.s32.totalorder %s19, 1
      %p100 = scmp.ne.s32.totalorder %s95, %s97
      %p101 = scmp.eq.s32.totalorder %s19, 0
      %p102 = por %p100, %p101
      %p103 = scmp.ne.s32.totalorder %s95, %s97
      %p104 = scmp.eq.s32.totalorder %s24, 1
      %p105 = por %p103, %p104
      %p106 = scmp.ne.s32.totalorder %s97, %s98
      %p107 = scmp.eq.s32.totalorder %s24, 0
      %p108 = por %p106, %p107
      %p109 = scmp.ne.s32.totalorder %s97, %s98
      %p110 = scmp.eq.s32.totalorder %s25, 1
      %p111 = por %p109, %p110
      %p113 = scmp.ne.s32.totalorder %s98, %s112
      %p114 = scmp.eq.s32.totalorder %s25, 0
      %p115 = por %p113, %p114
      %s117 = sadd.s32 %s116, 1
      %p120 = scmp.eq.s32.totalorder %s19, 1
      %p121 = scmp.ne.s32.totalorder %s116, %s118
      %p122 = scmp.eq.s32.totalorder %s19, 0
      %p123 = por %p121, %p122
      %p124 = scmp.ne.s32.totalorder %s116, %s118
      %p125 = scmp.eq.s32.totalorder %s24, 1
      %p126 = por %p124, %p125
      %p127 = scmp.ne.s32.totalorder %s118, %s119
      %p128 = scmp.eq.s32.totalorder %s24, 0
      %p129 = por %p127, %p128
      %p130 = scmp.ne.s32.totalorder %s118, %s119
      %p131 = scmp.eq.s32.totalorder %s25, 1
      %p132 = por %p130, %p131
      %p134 = scmp.ne.s32.totalorder %s119, %s133
      %p135 = scmp.eq.s32.totalorder %s25, 0
      %p136 = por %p134, %p135
      %s137 = ssub.s32 %s19, %s26
      %p138 = scmp.eq.s32.totalorder %s137, 0
      %s140 = sadd.s32 %s139, 1
      %s141 = scalar_select %p138, %s139, %s140
      %p144 = pneg %p138
      %p145 = scmp.eq.s32.totalorder %s19, 1
      %p146 = por %p144, %p145
      %p147 = scmp.ne.s32.totalorder %s139, %s142
      %p148 = scmp.eq.s32.totalorder %s19, 0
      %p149 = por %p147, %p148
      %p150 = scmp.ne.s32.totalorder %s139, %s142
      %p151 = scmp.eq.s32.totalorder %s24, 1
      %p152 = por %p150, %p151
      %p153 = scmp.ne.s32.totalorder %s142, %s143
      %p154 = scmp.eq.s32.totalorder %s24, 0
      %p155 = por %p153, %p154
      %p156 = scmp.ne.s32.totalorder %s142, %s143
      %p157 = scmp.eq.s32.totalorder %s25, 1
      %p158 = por %p156, %p157
      %p160 = scmp.ne.s32.totalorder %s143, %s159
      %p161 = scmp.eq.s32.totalorder %s25, 0
      %p162 = por %p160, %p161
      %s163 = ssub.s32 %s19, %s26
      %p164 = scmp.eq.s32.totalorder %s163, 0
      %s166 = sadd.s32 %s165, 1
      %s167 = scalar_select %p164, %s165, %s166
      %p170 = pneg %p164
      %p171 = scmp.eq.s32.totalorder %s19, 1
      %p172 = por %p170, %p171
      %p173 = scmp.ne.s32.totalorder %s165, %s168
      %p174 = scmp.eq.s32.totalorder %s19, 0
      %p175 = por %p173, %p174
      %p176 = scmp.ne.s32.totalorder %s165, %s168
      %p177 = scmp.eq.s32.totalorder %s24, 1
      %p178 = por %p176, %p177
      %p179 = scmp.ne.s32.totalorder %s168, %s169
      %p180 = scmp.eq.s32.totalorder %s24, 0
      %p181 = por %p179, %p180
      %p182 = scmp.ne.s32.totalorder %s168, %s169
      %p183 = scmp.eq.s32.totalorder %s25, 1
      %p184 = por %p182, %p183
      %p186 = scmp.ne.s32.totalorder %s169, %s185
      %p187 = scmp.eq.s32.totalorder %s25, 0
      %p188 = por %p186, %p187
      %p189 = scmp.le.s32.totalorder 1, %s19
      %p190 = scmp.lt.s32.totalorder %s19, 3
      %p191 = pnand %p189, %p190
      %p192 = pneg %p191
      // Predicated region
      $region9: #{tpu_custom_call.1} parent=5 // pred_check
        _
      $region10: #{tpu_custom_call.1} parent=5 // pred_check_branch
        %194 = sbr.rel (%p191) target = $region12
      $region11: #{tpu_custom_call.1} parent=5 // pred_region
        %s195 = ssub.s32 %s19, 1
        // Predicated region
        $region13: #{tpu_custom_call.1} parent=11 // pred_check
          %p196 = pneg %p66
        $region14: #{tpu_custom_call.1} parent=11 // pred_check_branch
          %198 = sbr.rel (%p196) target = $region16
        $region15: #{tpu_custom_call.1} parent=11 // pred_region
          %s200 = ssub.s32 2048, 2048
          %201 = vsyncadd [#allocation6], %s200
          %s202 = sshll.u32 [#allocation5], 4
          %s203 = int_to_ptr.vmem [resolvable:$true] %s202
          %208 = dma.hbm_to_vmem [thread:$0]  %s1, 2048, %s203, [#allocation6], 128, 128, 8
        $region16: #{tpu_custom_call.1} parent=11 // pred_fallthru
          _
        // Predicated region
        $region17: #{tpu_custom_call.1} parent=11 // pred_check
          %p209 = pneg %p87
        $region18: #{tpu_custom_call.1} parent=11 // pred_check_branch
          %211 = sbr.rel (%p209) target = $region20
        $region19: #{tpu_custom_call.1} parent=11 // pred_region
          _
        $region20: #{tpu_custom_call.1} parent=11 // pred_fallthru
          _
        // Predicated region
        $region21: #{tpu_custom_call.1} parent=11 // pred_check
          %p212 = pneg %p108
        $region22: #{tpu_custom_call.1} parent=11 // pred_check_branch
          %214 = sbr.rel (%p212) target = $region24
        $region23: #{tpu_custom_call.1} parent=11 // pred_region
          %s216 = ssub.s32 2048, 2048
          %217 = vsyncadd [#allocation6], %s216
          %s218 = sshll.u32 [#allocation7], 4
          %s219 = int_to_ptr.vmem [resolvable:$true] %s218
          %224 = dma.hbm_to_vmem [thread:$0]  %s3, 2048, %s219, [#allocation6], 64, 64, 4
        $region24: #{tpu_custom_call.1} parent=11 // pred_fallthru
          _
        // Predicated region
        $region25: #{tpu_custom_call.1} parent=11 // pred_check
          %p225 = pneg %p129
        $region26: #{tpu_custom_call.1} parent=11 // pred_check_branch
          %227 = sbr.rel (%p225) target = $region28
        $region27: #{tpu_custom_call.1} parent=11 // pred_region
          _
        $region28: #{tpu_custom_call.1} parent=11 // pred_fallthru
          _
      $region12: #{tpu_custom_call.1} parent=5 // pred_fallthru
        _
      %p228 = scmp.lt.s32.totalorder %s19, 2
      // Predicated region
      $region29: #{tpu_custom_call.1} parent=5 // pred_check
        %p229 = pneg %p228
      $region30: #{tpu_custom_call.1} parent=5 // pred_check_branch
        %231 = sbr.rel (%p229) target = $region32
      $region31: #{tpu_custom_call.1} parent=5 // pred_region
        // Predicated region
        $region33: #{tpu_custom_call.1} parent=31 // pred_check
          %p232 = pneg %p39
        $region34: #{tpu_custom_call.1} parent=31 // pred_check_branch
          %234 = sbr.rel (%p232) target = $region36
        $region35: #{tpu_custom_call.1} parent=31 // pred_region
          #allocation10 [shape = 'u32[6]{0}', space=smem, size = 0x18, scoped, tag = 'DMA stride descriptor']
          %s235 = sand.u32 %s29, 1
          %s236 = scalar_lea.sflag [#allocation3], %s235
          %s237 = sand.u32 %s29, 1
          %s238 = smul.addr %s237, 256
          %s239 = scalar_lea.vmem [#allocation2], %s238
          %s240 = smul.u32 4, %s19
          %s242 = ssub.s32 4096, 4096
          %243 = vsyncadd %s236, %s242
          %s244 = smul.addr %s240, 128
          %s245 = scalar_lea.hbm %s0, %s244
          %s247 = sshll.u32 1, 14
          %s248 = sxor.u32 4294967295, %s247
          %s250 = sld [smem:[#allocation0]]
          %s251 = sadd.s32 2, %s250
          %s253 = sshll.u32 7, 26
          %s254 = sxor.u32 4294967295, %s253
          %s255 = sand.u32 0, %s254
          %s256 = sshll.u32 %s251, 26
          %s257 = sor.u32 %s255, %s256
          %s258 = sshll.u32 %s239, 4
          %s259 = int_to_ptr.vmem [resolvable:$true] %s258
          %265 = sst [smem:[#allocation10]] 1024
          %s266 = scalar_lea.smem [#allocation10], 1
          %267 = sst [smem:[%s266]] 512
          %s268 = scalar_lea.smem [#allocation10], 2
          %269 = sst [smem:[%s268]] 4
          %s270 = scalar_lea.smem [#allocation10], 3
          %271 = sst [smem:[%s270]] 128
          %s272 = scalar_lea.smem [#allocation10], 4
          %273 = sst [smem:[%s272]] 128
          %s274 = scalar_lea.smem [#allocation10], 5
          %275 = sst [smem:[%s274]] 8
          %277 = dma.general %s245, 4096, %s259, %s236, [#allocation9], [#allocation10], %s257, 0
        $region36: #{tpu_custom_call.1} parent=31 // pred_fallthru
          _
        // Predicated region
        $region37: #{tpu_custom_call.1} parent=31 // pred_check
          %p278 = pneg %p149
        $region38: #{tpu_custom_call.1} parent=31 // pred_check_branch
          %280 = sbr.rel (%p278) target = $region40
        $region39: #{tpu_custom_call.1} parent=31 // pred_region
          %s281 = smul.u32 4, %s19
          %p282 = scmp.lt.s32.totalorder %s281, 7
          %s283 = scalar_select %p282, %s281, 7
          %s284 = smul.addr %s283, 8
          %s285 = scalar_lea.vmem %s5, %s284
          %s286 = smul.u32 4, %s19
        $region40: #{tpu_custom_call.1} parent=31 // pred_fallthru
          _
      $region32: #{tpu_custom_call.1} parent=5 // pred_fallthru
        _
      %p287 = scmp.le.s32.totalorder 1, %s19
      %p288 = scmp.lt.s32.totalorder %s19, 3
      %p289 = pnand %p287, %p288
      %p290 = pneg %p289
      // Predicated region
      $region41: #{tpu_custom_call.1} parent=5 // pred_check
        _
      $region42: #{tpu_custom_call.1} parent=5 // pred_check_branch
        %292 = sbr.rel (%p289) target = $region44
      $region43: #{tpu_custom_call.1} parent=5 // pred_region
        %s293 = ssub.s32 %s19, 1
        %s294 = sand.u32 %s32, 1
        %s295 = scalar_lea.sflag [#allocation3], %s294
        %s296 = sand.u32 %s32, 1
        %s297 = smul.addr %s296, 256
        %s298 = scalar_lea.vmem [#allocation2], %s297
        // Predicated region
        $region45: #{tpu_custom_call.1} parent=43 // pred_check
          %p299 = pneg %p45
        $region46: #{tpu_custom_call.1} parent=43 // pred_check_branch
          %301 = sbr.rel (%p299) target = $region48
        $region47: #{tpu_custom_call.1} parent=43 // pred_region
          %302 = dma.done %s295, 4096
        $region48: #{tpu_custom_call.1} parent=43 // pred_fallthru
          _
        // Predicated region
        $region49: #{tpu_custom_call.1} parent=43 // pred_check
          %p303 = pneg %p66
        $region50: #{tpu_custom_call.1} parent=43 // pred_check_branch
          %305 = sbr.rel (%p303) target = $region52
        $region51: #{tpu_custom_call.1} parent=43 // pred_region
          %306 = dma.done [#allocation6], 2048
        $region52: #{tpu_custom_call.1} parent=43 // pred_fallthru
          _
        // Predicated region
        $region53: #{tpu_custom_call.1} parent=43 // pred_check
          %p307 = pneg %p108
        $region54: #{tpu_custom_call.1} parent=43 // pred_check_branch
          %309 = sbr.rel (%p307) target = $region56
        $region55: #{tpu_custom_call.1} parent=43 // pred_region
          %310 = dma.done [#allocation6], 2048
        $region56: #{tpu_custom_call.1} parent=43 // pred_fallthru
          _
        %s311 = sand.u32 %s32, 1
        %s312 = scalar_lea.sflag [#allocation3], %s311
        %s313 = sand.u32 %s32, 1
        %s314 = smul.addr %s313, 256
        %s315 = scalar_lea.vmem [#allocation2], %s314
        %p316 = pneg %p45
        %p317 = pneg %p42
        %p318 = pneg %p66
        %p319 = pneg %p63
        %p320 = pneg %p87
        %p321 = pneg %p84
        %p322 = pneg %p108
        %p323 = pneg %p105
        %p324 = pneg %p129
        %p325 = pneg %p126
        %s326 = smul.u32 4, %s24
        %p327 = scmp.lt.s32.totalorder %s326, 7
        %s328 = scalar_select %p327, %s326, 7
        %s329 = smul.addr %s328, 8
        %s330 = scalar_lea.vmem %s5, %s329
        %p331 = pneg %p155
        %p332 = pneg %p152
        %p333 = pneg %p181
        %p334 = pneg %p178
        %s335 = sand.u32 %s168, 1
        %s336 = scalar_lea.sflag [#allocation4], %s335
        %s337 = sand.u32 %s168, 1
        %s338 = smul.addr %s337, 128
        %s339 = scalar_lea.vmem [#allocation8], %s338
        %s340 = smul.u32 4, %s24
        %s341 = smul.u32 4, %s24
        %p342 = scmp.lt.s32.totalorder %s341, 7
        %s343 = scalar_select %p342, %s341, 7
        %s344 = smul.addr %s343, 8
        %s345 = scalar_lea.vmem %s5, %s344
        %s346 = smul.u32 4, %s24
        %s347 = smul.u32 4, %s24
        %v349 = vld [vmem:[%s298] sm:$0xff]
        %v350 = vld [vmem:[%s298 + $0x8] sm:$0xff]
        %v351 = vld [vmem:[%s298 + $0x10] sm:$0xff]
        %v352 = vld [vmem:[%s298 + $0x18] sm:$0xff]
        %v353 = vld [vmem:[%s298 + $0x20] sm:$0xff]
        %v354 = vld [vmem:[%s298 + $0x28] sm:$0xff]
        %v355 = vld [vmem:[%s298 + $0x30] sm:$0xff]
        %v356 = vld [vmem:[%s298 + $0x38] sm:$0xff]
        %v357 = vld [vmem:[%s298 + $0x40] sm:$0xff]
        %v358 = vld [vmem:[%s298 + $0x48] sm:$0xff]
        %v359 = vld [vmem:[%s298 + $0x50] sm:$0xff]
        %v360 = vld [vmem:[%s298 + $0x58] sm:$0xff]
        %v361 = vld [vmem:[%s298 + $0x60] sm:$0xff]
        %v362 = vld [vmem:[%s298 + $0x68] sm:$0xff]
        %v363 = vld [vmem:[%s298 + $0x70] sm:$0xff]
        %v364 = vld [vmem:[%s298 + $0x78] sm:$0xff]
        %v365 = vld [vmem:[%s298 + $0x80] sm:$0xff]
        %v366 = vld [vmem:[%s298 + $0x88] sm:$0xff]
        %v367 = vld [vmem:[%s298 + $0x90] sm:$0xff]
        %v368 = vld [vmem:[%s298 + $0x98] sm:$0xff]
        %v369 = vld [vmem:[%s298 + $0xa0] sm:$0xff]
        %v370 = vld [vmem:[%s298 + $0xa8] sm:$0xff]
        %v371 = vld [vmem:[%s298 + $0xb0] sm:$0xff]
        %v372 = vld [vmem:[%s298 + $0xb8] sm:$0xff]
        %v373 = vld [vmem:[%s298 + $0xc0] sm:$0xff]
        %v374 = vld [vmem:[%s298 + $0xc8] sm:$0xff]
        %v375 = vld [vmem:[%s298 + $0xd0] sm:$0xff]
        %v376 = vld [vmem:[%s298 + $0xd8] sm:$0xff]
        %v377 = vld [vmem:[%s298 + $0xe0] sm:$0xff]
        %v378 = vld [vmem:[%s298 + $0xe8] sm:$0xff]
        %v379 = vld [vmem:[%s298 + $0xf0] sm:$0xff]
        %v380 = vld [vmem:[%s298 + $0xf8] sm:$0xff]
        %v381 = vld [vmem:[%s345] sm:$0xff]
        %v382 = vld [vmem:[%s345 + $0x8] sm:$0xff]
        %v383 = vld [vmem:[%s345 + $0x10] sm:$0xff]
        %v384 = vld [vmem:[%s345 + $0x18] sm:$0xff]
        %v385 = vadd.f32 %v349, %v353
        %v386 = vadd.f32 %v385, %v357
        %v387 = vadd.f32 %v386, %v361
        %v388 = vadd.f32 %v387, %v365
        %v389 = vadd.f32 %v388, %v369
        %v390 = vadd.f32 %v389, %v373
        %v391 = vadd.f32 %v390, %v377
        %v392 = vadd.f32 %v350, %v354
        %v393 = vadd.f32 %v392, %v358
        %v394 = vadd.f32 %v393, %v362
        %v395 = vadd.f32 %v394, %v366
        %v396 = vadd.f32 %v395, %v370
        %v397 = vadd.f32 %v396, %v374
        %v398 = vadd.f32 %v397, %v378
        %v399 = vadd.f32 %v351, %v355
        %v400 = vadd.f32 %v399, %v359
        %v401 = vadd.f32 %v400, %v363
        %v402 = vadd.f32 %v401, %v367
        %v403 = vadd.f32 %v402, %v371
        %v404 = vadd.f32 %v403, %v375
        %v405 = vadd.f32 %v404, %v379
        %v406 = vadd.f32 %v352, %v356
        %v407 = vadd.f32 %v406, %v360
        %v408 = vadd.f32 %v407, %v364
        %v409 = vadd.f32 %v408, %v368
        %v410 = vadd.f32 %v409, %v372
        %v411 = vadd.f32 %v410, %v376
        %v412 = vadd.f32 %v411, %v380
        %413 = vadd.xlane.f32.xlu0 %v391
        %v414 = vpop.xlane.xlu0 %413
        %415 = vadd.xlane.f32.xlu0 %v398
        %v416 = vpop.xlane.xlu0 %415
        %417 = vadd.xlane.f32.xlu0 %v405
        %v418 = vpop.xlane.xlu0 %417
        %419 = vadd.xlane.f32.xlu0 %v412
        %v420 = vpop.xlane.xlu0 %419
        %v421 = vmul.f32 %v349, %v349
        %v422 = vmul.f32 %v350, %v350
        %v423 = vmul.f32 %v351, %v351
        %v424 = vmul.f32 %v352, %v352
        %v425 = vmul.f32 %v353, %v353
        %v426 = vmul.f32 %v354, %v354
        %v427 = vmul.f32 %v355, %v355
        %v428 = vmul.f32 %v356, %v356
        %v429 = vmul.f32 %v357, %v357
        %v430 = vmul.f32 %v358, %v358
        %v431 = vmul.f32 %v359, %v359
        %v432 = vmul.f32 %v360, %v360
        %v433 = vmul.f32 %v361, %v361
        %v434 = vmul.f32 %v362, %v362
        %v435 = vmul.f32 %v363, %v363
        %v436 = vmul.f32 %v364, %v364
        %v437 = vmul.f32 %v365, %v365
        %v438 = vmul.f32 %v366, %v366
        %v439 = vmul.f32 %v367, %v367
        %v440 = vmul.f32 %v368, %v368
        %v441 = vmul.f32 %v369, %v369
        %v442 = vmul.f32 %v370, %v370
        %v443 = vmul.f32 %v371, %v371
        %v444 = vmul.f32 %v372, %v372
        %v445 = vmul.f32 %v373, %v373
        %v446 = vmul.f32 %v374, %v374
        %v447 = vmul.f32 %v375, %v375
        %v448 = vmul.f32 %v376, %v376
        %v449 = vmul.f32 %v377, %v377
        %v450 = vmul.f32 %v378, %v378
        %v451 = vmul.f32 %v379, %v379
        %v452 = vmul.f32 %v380, %v380
        %v453 = vadd.f32 %v421, %v425
        %v454 = vadd.f32 %v453, %v429
        %v455 = vadd.f32 %v454, %v433
        %v456 = vadd.f32 %v455, %v437
        %v457 = vadd.f32 %v456, %v441
        %v458 = vadd.f32 %v457, %v445
        %v459 = vadd.f32 %v458, %v449
        %v460 = vadd.f32 %v422, %v426
        %v461 = vadd.f32 %v460, %v430
        %v462 = vadd.f32 %v461, %v434
        %v463 = vadd.f32 %v462, %v438
        %v464 = vadd.f32 %v463, %v442
        %v465 = vadd.f32 %v464, %v446
        %v466 = vadd.f32 %v465, %v450
        %v467 = vadd.f32 %v423, %v427
        %v468 = vadd.f32 %v467, %v431
        %v469 = vadd.f32 %v468, %v435
        %v470 = vadd.f32 %v469, %v439
        %v471 = vadd.f32 %v470, %v443
        %v472 = vadd.f32 %v471, %v447
        %v473 = vadd.f32 %v472, %v451
        %v474 = vadd.f32 %v424, %v428
        %v475 = vadd.f32 %v474, %v432
        %v476 = vadd.f32 %v475, %v436
        %v477 = vadd.f32 %v476, %v440
        %v478 = vadd.f32 %v477, %v444
        %v479 = vadd.f32 %v478, %v448
        %v480 = vadd.f32 %v479, %v452
        %481 = vadd.xlane.f32.xlu0 %v459
        %v482 = vpop.xlane.xlu0 %481
        %483 = vadd.xlane.f32.xlu0 %v466
        %v484 = vpop.xlane.xlu0 %483
        %485 = vadd.xlane.f32.xlu0 %v473
        %v486 = vpop.xlane.xlu0 %485
        %487 = vadd.xlane.f32.xlu0 %v480
        %v488 = vpop.xlane.xlu0 %487
        %v489 = vmul.f32 %v414, 0.0009765625
        %v490 = vmul.f32 %v416, 0.0009765625
        %v491 = vmul.f32 %v418, 0.0009765625
        %v492 = vmul.f32 %v420, 0.0009765625
        %v493 = vmul.f32 %v482, 0.0009765625
        %v494 = vmul.f32 %v484, 0.0009765625
        %v495 = vmul.f32 %v486, 0.0009765625
        %v496 = vmul.f32 %v488, 0.0009765625
        %v497 = vmul.f32 %v489, %v489
        %v498 = vmul.f32 %v490, %v490
        %v499 = vmul.f32 %v491, %v491
        %v500 = vmul.f32 %v492, %v492
        %v501 = vsub.f32 %v493, %v497
        %v502 = vsub.f32 %v494, %v498
        %v503 = vsub.f32 %v495, %v499
        %v504 = vsub.f32 %v496, %v500
        %v505 = vmax.f32 %v501, 0.0
        %v506 = vmax.f32 %v502, 0.0
        %v507 = vmax.f32 %v503, 0.0
        %v508 = vmax.f32 %v504, 0.0
        %v509 = vadd.f32 %v505, 1e-05
        %v510 = vadd.f32 %v506, 1e-05
        %v511 = vadd.f32 %v507, 1e-05
        %v512 = vadd.f32 %v508, 1e-05
        %v513 = vrsqrt.pop %v509
        %v514 = vrsqrt.pop %v510
        %v515 = vrsqrt.pop %v511
        %v516 = vrsqrt.pop %v512
        %v517 = vmul.f32 %v513, %v381
        %v518 = vmul.f32 %v514, %v382
        %v519 = vmul.f32 %v515, %v383
        %v520 = vmul.f32 %v516, %v384
        %v521 = vmul.f32 %v489, %v517
        %v522 = vmul.f32 %v490, %v518
        %v523 = vmul.f32 %v491, %v519
        %v524 = vmul.f32 %v492, %v520
        %529 = vrot.lane.b32.xlu0 %v521, 1
        %v530 = vpop.permute.xlu0 %529
        %531 = vrot.lane.b32.xlu0 %v522, 1
        %v532 = vpop.permute.xlu0 %531
        %533 = vrot.lane.b32.xlu0 %v523, 1
        %v534 = vpop.permute.xlu0 %533
        %535 = vrot.lane.b32.xlu0 %v524, 1
        %v536 = vpop.permute.xlu0 %535
        %v541 = vsub.f32 %v381, %v530
        %v542 = vsub.f32 %v382, %v532
        %v543 = vsub.f32 %v383, %v534
        %v544 = vsub.f32 %v384, %v536
        %546 = vset.pattern.permute.xlu0 0
        %547 = vperm.xlu0 %546, %v517
        %v548 = vpop.permute.xlu0 %547
        %551 = vset.pattern.permute.xlu0 0
        %552 = vperm.xlu0 %551, %v518
        %v553 = vpop.permute.xlu0 %552
        %556 = vset.pattern.permute.xlu0 0
        %557 = vperm.xlu0 %556, %v519
        %v558 = vpop.permute.xlu0 %557
        %561 = vset.pattern.permute.xlu0 0
        %562 = vperm.xlu0 %561, %v520
        %v563 = vpop.permute.xlu0 %562
        %v565 = vmul.f32 %v349, %v548
        %v566 = vmul.f32 %v350, %v553
        %v567 = vmul.f32 %v351, %v558
        %v568 = vmul.f32 %v352, %v563
        %v569 = vmul.f32 %v353, %v548
        %v570 = vmul.f32 %v354, %v553
        %v571 = vmul.f32 %v355, %v558
        %v572 = vmul.f32 %v356, %v563
        %v573 = vmul.f32 %v357, %v548
        %v574 = vmul.f32 %v358, %v553
        %v575 = vmul.f32 %v359, %v558
        %v576 = vmul.f32 %v360, %v563
        %v577 = vmul.f32 %v361, %v548
        %v578 = vmul.f32 %v362, %v553
        %v579 = vmul.f32 %v363, %v558
        %v580 = vmul.f32 %v364, %v563
        %v581 = vmul.f32 %v365, %v548
        %v582 = vmul.f32 %v366, %v553
        %v583 = vmul.f32 %v367, %v558
        %v584 = vmul.f32 %v368, %v563
        %v585 = vmul.f32 %v369, %v548
        %v586 = vmul.f32 %v370, %v553
        %v587 = vmul.f32 %v371, %v558
        %v588 = vmul.f32 %v372, %v563
        %v589 = vmul.f32 %v373, %v548
        %v590 = vmul.f32 %v374, %v553
        %v591 = vmul.f32 %v375, %v558
        %v592 = vmul.f32 %v376, %v563
        %v593 = vmul.f32 %v377, %v548
        %v594 = vmul.f32 %v378, %v553
        %v595 = vmul.f32 %v379, %v558
        %v596 = vmul.f32 %v380, %v563
        %598 = vset.pattern.permute.xlu0 1
        %599 = vperm.xlu0 %598, %v541
        %v600 = vpop.permute.xlu0 %599
        %603 = vset.pattern.permute.xlu0 1
        %604 = vperm.xlu0 %603, %v542
        %v605 = vpop.permute.xlu0 %604
        %608 = vset.pattern.permute.xlu0 1
        %609 = vperm.xlu0 %608, %v543
        %v610 = vpop.permute.xlu0 %609
        %613 = vset.pattern.permute.xlu0 1
        %614 = vperm.xlu0 %613, %v544
        %v615 = vpop.permute.xlu0 %614
        %v617 = vadd.f32 %v565, %v600
        %v618 = vadd.f32 %v566, %v605
        %v619 = vadd.f32 %v567, %v610
        %v620 = vadd.f32 %v568, %v615
        %v621 = vadd.f32 %v569, %v600
        %v622 = vadd.f32 %v570, %v605
        %v623 = vadd.f32 %v571, %v610
        %v624 = vadd.f32 %v572, %v615
        %v625 = vadd.f32 %v573, %v600
        %v626 = vadd.f32 %v574, %v605
        %v627 = vadd.f32 %v575, %v610
        %v628 = vadd.f32 %v576, %v615
        %v629 = vadd.f32 %v577, %v600
        %v630 = vadd.f32 %v578, %v605
        %v631 = vadd.f32 %v579, %v610
        %v632 = vadd.f32 %v580, %v615
        %v633 = vadd.f32 %v581, %v600
        %v634 = vadd.f32 %v582, %v605
        %v635 = vadd.f32 %v583, %v610
        %v636 = vadd.f32 %v584, %v615
        %v637 = vadd.f32 %v585, %v600
        %v638 = vadd.f32 %v586, %v605
        %v639 = vadd.f32 %v587, %v610
        %v640 = vadd.f32 %v588, %v615
        %v641 = vadd.f32 %v589, %v600
        %v642 = vadd.f32 %v590, %v605
        %v643 = vadd.f32 %v591, %v610
        %v644 = vadd.f32 %v592, %v615
        %v645 = vadd.f32 %v593, %v600
        %v646 = vadd.f32 %v594, %v605
        %v647 = vadd.f32 %v595, %v610
        %v648 = vadd.f32 %v596, %v615
        %v649 = vpack.c.bf16 %v350, %v349
        %v650 = vpack.c.bf16 %v352, %v351
        %v651 = vpack.c.bf16 %v354, %v353
        %v652 = vpack.c.bf16 %v356, %v355
        %v653 = vpack.c.bf16 %v358, %v357
        %v654 = vpack.c.bf16 %v360, %v359
        %v655 = vpack.c.bf16 %v362, %v361
        %v656 = vpack.c.bf16 %v364, %v363
        %v657 = vpack.c.bf16 %v366, %v365
        %v658 = vpack.c.bf16 %v368, %v367
        %v659 = vpack.c.bf16 %v370, %v369
        %v660 = vpack.c.bf16 %v372, %v371
        %v661 = vpack.c.bf16 %v374, %v373
        %v662 = vpack.c.bf16 %v376, %v375
        %v663 = vpack.c.bf16 %v378, %v377
        %v664 = vpack.c.bf16 %v380, %v379
        %v665 = vld [vmem:[#allocation5] sm:$0xff]
        %v666 = vld [vmem:[#allocation5 + $0x8] sm:$0xff]
        %v667 = vld [vmem:[#allocation5 + $0x10] sm:$0xff]
        %v668 = vld [vmem:[#allocation5 + $0x18] sm:$0xff]
        %v669 = vld [vmem:[#allocation5 + $0x20] sm:$0xff]
        %v670 = vld [vmem:[#allocation5 + $0x28] sm:$0xff]
        %v671 = vld [vmem:[#allocation5 + $0x30] sm:$0xff]
        %v672 = vld [vmem:[#allocation5 + $0x38] sm:$0xff]
        %v673 = vld [vmem:[#allocation5 + $0x40] sm:$0xff]
        %v674 = vld [vmem:[#allocation5 + $0x48] sm:$0xff]
        %v675 = vld [vmem:[#allocation5 + $0x50] sm:$0xff]
        %v676 = vld [vmem:[#allocation5 + $0x58] sm:$0xff]
        %v677 = vld [vmem:[#allocation5 + $0x60] sm:$0xff]
        %v678 = vld [vmem:[#allocation5 + $0x68] sm:$0xff]
        %v679 = vld [vmem:[#allocation5 + $0x70] sm:$0xff]
        %v680 = vld [vmem:[#allocation5 + $0x78] sm:$0xff]
        %v681 = vld [vmem:[%s2] sm:$0x3]
        %v683 = vlaneseq
        %v684 = vshrl.u32 %v683, 7
        %v685 = vsub.s32 0, %v684
        %v686 = vrot.slane %v681, %v685
        %v687 = vlaneseq
        %v688 = vshrl.u32 %v687, 7
        %v689 = vsub.s32 1, %v688
        %v690 = vrot.slane %v681, %v689
        %v709 = vunpack.c.l.b16 %v665
        %v710 = vunpack.c.h.b16 %v665
        %v711 = vunpack.c.l.b16 %v666
        %v712 = vunpack.c.h.b16 %v666
        %v713 = vunpack.c.l.b16 %v667
        %v714 = vunpack.c.h.b16 %v667
        %v715 = vunpack.c.l.b16 %v668
        %v716 = vunpack.c.h.b16 %v668
        %v717 = vunpack.c.l.b16 %v669
        %v718 = vunpack.c.h.b16 %v669
        %v719 = vunpack.c.l.b16 %v670
        %v720 = vunpack.c.h.b16 %v670
        %v721 = vunpack.c.l.b16 %v671
        %v722 = vunpack.c.h.b16 %v671
        %v723 = vunpack.c.l.b16 %v672
        %v724 = vunpack.c.h.b16 %v672
        %v725 = vunpack.c.l.b16 %v673
        %v726 = vunpack.c.h.b16 %v673
        %v727 = vunpack.c.l.b16 %v674
        %v728 = vunpack.c.h.b16 %v674
        %v729 = vunpack.c.l.b16 %v675
        %v730 = vunpack.c.h.b16 %v675
        %v731 = vunpack.c.l.b16 %v676
        %v732 = vunpack.c.h.b16 %v676
        %v733 = vunpack.c.l.b16 %v677
        %v734 = vunpack.c.h.b16 %v677
        %v735 = vunpack.c.l.b16 %v678
        %v736 = vunpack.c.h.b16 %v678
        %v737 = vunpack.c.l.b16 %v679
        %v738 = vunpack.c.h.b16 %v679
        %v739 = vunpack.c.l.b16 %v680
        %v740 = vunpack.c.h.b16 %v680
        %v741 = vpack.c.b16 %v711, %v709
        %v742 = vpack.c.b16 %v712, %v710
        %v743 = vpack.c.b16 %v715, %v713
        %v744 = vpack.c.b16 %v716, %v714
        %v745 = vpack.c.b16 %v719, %v717
        %v746 = vpack.c.b16 %v720, %v718
        %v747 = vpack.c.b16 %v723, %v721
        %v748 = vpack.c.b16 %v724, %v722
        %v749 = vpack.c.b16 %v727, %v725
        %v750 = vpack.c.b16 %v728, %v726
        %v751 = vpack.c.b16 %v731, %v729
        %v752 = vpack.c.b16 %v732, %v730
        %v753 = vpack.c.b16 %v735, %v733
        %v754 = vpack.c.b16 %v736, %v734
        %v755 = vpack.c.b16 %v739, %v737
        %v756 = vpack.c.b16 %v740, %v738
        %773 = vmatprep.subr.bf16.mxu0 %v742
        %774 = vmatpush1.bf16.msra.mxu0 %v741
        %775 = vmatprep.subr.bf16.mxu0 %v744
        %776 = vmatpush1.bf16.msra.mxu0 %v743
        %777 = vmatprep.subr.bf16.mxu0 %v746
        %778 = vmatpush1.bf16.msra.mxu0 %v745
        %779 = vmatprep.subr.bf16.mxu0 %v748
        %780 = vmatpush1.bf16.msra.mxu0 %v747
        %781 = vmatprep.subr.bf16.mxu0 %v750
        %782 = vmatpush1.bf16.msra.mxu0 %v749
        %783 = vmatprep.subr.bf16.mxu0 %v752
        %784 = vmatpush1.bf16.msra.mxu0 %v751
        %785 = vmatprep.subr.bf16.mxu0 %v754
        %786 = vmatpush1.bf16.msra.mxu0 %v753
        %787 = vmatprep.subr.bf16.mxu0 %v756
        %788 = vmatpush1.bf16.msra.mxu0 %v755
        %789 = vmatprep.subr.bf16.mxu0 0
        %790 = vmatpush1.bf16.msra.mxu0 0
        %791 = vmatprep.subr.bf16.mxu0 0
        %792 = vmatpush1.bf16.msra.mxu0 0
        %793 = vmatprep.subr.bf16.mxu0 0
        %794 = vmatpush1.bf16.msra.mxu0 0
        %795 = vmatprep.subr.bf16.mxu0 0
        %796 = vmatpush1.bf16.msra.mxu0 0
        %797 = vmatprep.subr.bf16.mxu0 0
        %798 = vmatpush1.bf16.msra.mxu0 0
        %799 = vmatprep.subr.bf16.mxu0 0
        %800 = vmatpush1.bf16.msra.mxu0 0
        %801 = vmatprep.subr.bf16.mxu0 0
        %802 = vmatpush1.bf16.msra.mxu0 0
        %803 = vmatprep.subr.bf16.mxu0 0
        %804 = vmatpush1.bf16.msra.mxu0 0
        %805 = vmatprep.mubr.bf16.mxu0 0
        %806 = vmatmul.mubr.bf16.gmra.mrb[0].mxu0 %v649
        %v807 = vpop.f32.mrb[0].mxu0
        %v808 = vadd.f32 %v686, %v807
        %v809 = vpop.f32.mrb[0].mxu0
        %v810 = vadd.f32 %v690, %v809
        %v811 = vpop.f32.mrb[0].mxu0
        %v812 = vadd.f32 %v686, %v811
        %v813 = vpop.f32.mrb[0].mxu0
        %v814 = vadd.f32 %v690, %v813
        %815 = vmatprep.mubr.bf16.mxu0 0
        %816 = vmatmul.mubr.bf16.gmra.mrb[0].mxu0 %v650
        %v817 = vpop.f32.mrb[0].mxu0
        %v818 = vadd.f32 %v686, %v817
        %v819 = vpop.f32.mrb[0].mxu0
        %v820 = vadd.f32 %v690, %v819
        %v821 = vpop.f32.mrb[0].mxu0
        %v822 = vadd.f32 %v686, %v821
        %v823 = vpop.f32.mrb[0].mxu0
        %v824 = vadd.f32 %v690, %v823
        %825 = vmatprep.mubr.bf16.mxu0 0
        %826 = vmatmul.mubr.bf16.gmra.mrb[0].mxu0 %v651
        %v827 = vpop.f32.mrb[0].mxu0
        %v828 = vadd.f32 %v686, %v827
        %v829 = vpop.f32.mrb[0].mxu0
        %v830 = vadd.f32 %v690, %v829
        %v831 = vpop.f32.mrb[0].mxu0
        %v832 = vadd.f32 %v686, %v831
        %v833 = vpop.f32.mrb[0].mxu0
        %v834 = vadd.f32 %v690, %v833
        %835 = vmatprep.mubr.bf16.mxu0 0
        %836 = vmatmul.mubr.bf16.gmra.mrb[0].mxu0 %v652
        %v837 = vpop.f32.mrb[0].mxu0
        %v838 = vadd.f32 %v686, %v837
        %v839 = vpop.f32.mrb[0].mxu0
        %v840 = vadd.f32 %v690, %v839
        %v841 = vpop.f32.mrb[0].mxu0
        %v842 = vadd.f32 %v686, %v841
        %v843 = vpop.f32.mrb[0].mxu0
        %v844 = vadd.f32 %v690, %v843
        %845 = vmatprep.mubr.bf16.mxu0 0
        %846 = vmatmul.mubr.bf16.gmra.mrb[0].mxu0 %v653
        %v847 = vpop.f32.mrb[0].mxu0
        %v848 = vadd.f32 %v686, %v847
        %v849 = vpop.f32.mrb[0].mxu0
        %v850 = vadd.f32 %v690, %v849
        %v851 = vpop.f32.mrb[0].mxu0
        %v852 = vadd.f32 %v686, %v851
        %v853 = vpop.f32.mrb[0].mxu0
        %v854 = vadd.f32 %v690, %v853
        %855 = vmatprep.mubr.bf16.mxu0 0
        %856 = vmatmul.mubr.bf16.gmra.mrb[0].mxu0 %v654
        %v857 = vpop.f32.mrb[0].mxu0
        %v858 = vadd.f32 %v686, %v857
        %v859 = vpop.f32.mrb[0].mxu0
        %v860 = vadd.f32 %v690, %v859
        %v861 = vpop.f32.mrb[0].mxu0
        %v862 = vadd.f32 %v686, %v861
        %v863 = vpop.f32.mrb[0].mxu0
        %v864 = vadd.f32 %v690, %v863
        %865 = vmatprep.mubr.bf16.mxu0 0
        %866 = vmatmul.mubr.bf16.gmra.mrb[0].mxu0 %v655
        %v867 = vpop.f32.mrb[0].mxu0
        %v868 = vadd.f32 %v686, %v867
        %v869 = vpop.f32.mrb[0].mxu0
        %v870 = vadd.f32 %v690, %v869
        %v871 = vpop.f32.mrb[0].mxu0
        %v872 = vadd.f32 %v686, %v871
        %v873 = vpop.f32.mrb[0].mxu0
        %v874 = vadd.f32 %v690, %v873
        %875 = vmatprep.mubr.bf16.mxu0 0
        %876 = vmatmul.mubr.bf16.gmra.mrb[0].mxu0 %v656
        %v877 = vpop.f32.mrb[0].mxu0
        %v878 = vadd.f32 %v686, %v877
        %v879 = vpop.f32.mrb[0].mxu0
        %v880 = vadd.f32 %v690, %v879
        %v881 = vpop.f32.mrb[0].mxu0
        %v882 = vadd.f32 %v686, %v881
        %v883 = vpop.f32.mrb[0].mxu0
        %v884 = vadd.f32 %v690, %v883
        %885 = vmatprep.mubr.bf16.mxu0 0
        %886 = vmatmul.mubr.bf16.gmra.mrb[0].mxu0 %v657
        %v887 = vpop.f32.mrb[0].mxu0
        %v888 = vadd.f32 %v686, %v887
        %v889 = vpop.f32.mrb[0].mxu0
        %v890 = vadd.f32 %v690, %v889
        %v891 = vpop.f32.mrb[0].mxu0
        %v892 = vadd.f32 %v686, %v891
        %v893 = vpop.f32.mrb[0].mxu0
        %v894 = vadd.f32 %v690, %v893
        %895 = vmatprep.mubr.bf16.mxu0 0
        %896 = vmatmul.mubr.bf16.gmra.mrb[0].mxu0 %v658
        %v897 = vpop.f32.mrb[0].mxu0
        %v898 = vadd.f32 %v686, %v897
        %v899 = vpop.f32.mrb[0].mxu0
        %v900 = vadd.f32 %v690, %v899
        %v901 = vpop.f32.mrb[0].mxu0
        %v902 = vadd.f32 %v686, %v901
        %v903 = vpop.f32.mrb[0].mxu0
        %v904 = vadd.f32 %v690, %v903
        %905 = vmatprep.mubr.bf16.mxu0 0
        %906 = vmatmul.mubr.bf16.gmra.mrb[0].mxu0 %v659
        %v907 = vpop.f32.mrb[0].mxu0
        %v908 = vadd.f32 %v686, %v907
        %v909 = vpop.f32.mrb[0].mxu0
        %v910 = vadd.f32 %v690, %v909
        %v911 = vpop.f32.mrb[0].mxu0
        %v912 = vadd.f32 %v686, %v911
        %v913 = vpop.f32.mrb[0].mxu0
        %v914 = vadd.f32 %v690, %v913
        %915 = vmatprep.mubr.bf16.mxu0 0
        %916 = vmatmul.mubr.bf16.gmra.mrb[0].mxu0 %v660
        %v917 = vpop.f32.mrb[0].mxu0
        %v918 = vadd.f32 %v686, %v917
        %v919 = vpop.f32.mrb[0].mxu0
        %v920 = vadd.f32 %v690, %v919
        %v921 = vpop.f32.mrb[0].mxu0
        %v922 = vadd.f32 %v686, %v921
        %v923 = vpop.f32.mrb[0].mxu0
        %v924 = vadd.f32 %v690, %v923
        %925 = vmatprep.mubr.bf16.mxu0 0
        %926 = vmatmul.mubr.bf16.gmra.mrb[0].mxu0 %v661
        %v927 = vpop.f32.mrb[0].mxu0
        %v928 = vadd.f32 %v686, %v927
        %v929 = vpop.f32.mrb[0].mxu0
        %v930 = vadd.f32 %v690, %v929
        %v931 = vpop.f32.mrb[0].mxu0
        %v932 = vadd.f32 %v686, %v931
        %v933 = vpop.f32.mrb[0].mxu0
        %v934 = vadd.f32 %v690, %v933
        %935 = vmatprep.mubr.bf16.mxu0 0
        %936 = vmatmul.mubr.bf16.gmra.mrb[0].mxu0 %v662
        %v937 = vpop.f32.mrb[0].mxu0
        %v938 = vadd.f32 %v686, %v937
        %v939 = vpop.f32.mrb[0].mxu0
        %v940 = vadd.f32 %v690, %v939
        %v941 = vpop.f32.mrb[0].mxu0
        %v942 = vadd.f32 %v686, %v941
        %v943 = vpop.f32.mrb[0].mxu0
        %v944 = vadd.f32 %v690, %v943
        %945 = vmatprep.mubr.bf16.mxu0 0
        %946 = vmatmul.mubr.bf16.gmra.mrb[0].mxu0 %v663
        %v947 = vpop.f32.mrb[0].mxu0
        %v948 = vadd.f32 %v686, %v947
        %v949 = vpop.f32.mrb[0].mxu0
        %v950 = vadd.f32 %v690, %v949
        %v951 = vpop.f32.mrb[0].mxu0
        %v952 = vadd.f32 %v686, %v951
        %v953 = vpop.f32.mrb[0].mxu0
        %v954 = vadd.f32 %v690, %v953
        %955 = vmatprep.mubr.bf16.mxu0 0
        %956 = vmatmul.mubr.bf16.gmra.mrb[0].mxu0 %v664
        %v957 = vpop.f32.mrb[0].mxu0
        %v958 = vadd.f32 %v686, %v957
        %v959 = vpop.f32.mrb[0].mxu0
        %v960 = vadd.f32 %v690, %v959
        %v961 = vpop.f32.mrb[0].mxu0
        %v962 = vadd.f32 %v686, %v961
        %v963 = vpop.f32.mrb[0].mxu0
        %v964 = vadd.f32 %v690, %v963
        %965 = vdwg.mxu0
        %v966 = vadd.f32 %v808, %v828
        %v967 = vadd.f32 %v966, %v848
        %v968 = vadd.f32 %v967, %v868
        %v969 = vadd.f32 %v968, %v888
        %v970 = vadd.f32 %v969, %v908
        %v971 = vadd.f32 %v970, %v928
        %v972 = vadd.f32 %v971, %v948
        %v973 = vadd.f32 %v810, %v830
        %v974 = vadd.f32 %v973, %v850
        %v975 = vadd.f32 %v974, %v870
        %v976 = vadd.f32 %v975, %v890
        %v977 = vadd.f32 %v976, %v910
        %v978 = vadd.f32 %v977, %v930
        %v979 = vadd.f32 %v978, %v950
        %v980 = vadd.f32 %v812, %v832
        %v981 = vadd.f32 %v980, %v852
        %v982 = vadd.f32 %v981, %v872
        %v983 = vadd.f32 %v982, %v892
        %v984 = vadd.f32 %v983, %v912
        %v985 = vadd.f32 %v984, %v932
        %v986 = vadd.f32 %v985, %v952
        %v987 = vadd.f32 %v814, %v834
        %v988 = vadd.f32 %v987, %v854
        %v989 = vadd.f32 %v988, %v874
        %v990 = vadd.f32 %v989, %v894
        %v991 = vadd.f32 %v990, %v914
        %v992 = vadd.f32 %v991, %v934
        %v993 = vadd.f32 %v992, %v954
        %v994 = vadd.f32 %v818, %v838
        %v995 = vadd.f32 %v994, %v858
        %v996 = vadd.f32 %v995, %v878
        %v997 = vadd.f32 %v996, %v898
        %v998 = vadd.f32 %v997, %v918
        %v999 = vadd.f32 %v998, %v938
        %v1000 = vadd.f32 %v999, %v958
        %v1001 = vadd.f32 %v820, %v840
        %v1002 = vadd.f32 %v1001, %v860
        %v1003 = vadd.f32 %v1002, %v880
        %v1004 = vadd.f32 %v1003, %v900
        %v1005 = vadd.f32 %v1004, %v920
        %v1006 = vadd.f32 %v1005, %v940
        %v1007 = vadd.f32 %v1006, %v960
        %v1008 = vadd.f32 %v822, %v842
        %v1009 = vadd.f32 %v1008, %v862
        %v1010 = vadd.f32 %v1009, %v882
        %v1011 = vadd.f32 %v1010, %v902
        %v1012 = vadd.f32 %v1011, %v922
        %v1013 = vadd.f32 %v1012, %v942
        %v1014 = vadd.f32 %v1013, %v962
        %v1015 = vadd.f32 %v824, %v844
        %v1016 = vadd.f32 %v1015, %v864
        %v1017 = vadd.f32 %v1016, %v884
        %v1018 = vadd.f32 %v1017, %v904
        %v1019 = vadd.f32 %v1018, %v924
        %v1020 = vadd.f32 %v1019, %v944
        %v1021 = vadd.f32 %v1020, %v964
        %v1022 = vadd.f32 %v972, %v979
        %1023 = vadd.xlane.f32.xlu0 %v1022
        %v1024 = vpop.xlane.xlu0 %1023
        %v1025 = vadd.f32 %v986, %v993
        %1026 = vadd.xlane.f32.xlu0 %v1025
        %v1027 = vpop.xlane.xlu0 %1026
        %v1028 = vadd.f32 %v1000, %v1007
        %1029 = vadd.xlane.f32.xlu0 %v1028
        %v1030 = vpop.xlane.xlu0 %1029
        %v1031 = vadd.f32 %v1014, %v1021
        %1032 = vadd.xlane.f32.xlu0 %v1031
        %v1033 = vpop.xlane.xlu0 %1032
        %v1034 = vmul.f32 %v808, %v808
        %v1035 = vmul.f32 %v810, %v810
        %v1036 = vmul.f32 %v812, %v812
        %v1037 = vmul.f32 %v814, %v814
        %v1038 = vmul.f32 %v818, %v818
        %v1039 = vmul.f32 %v820, %v820
        %v1040 = vmul.f32 %v822, %v822
        %v1041 = vmul.f32 %v824, %v824
        %v1042 = vmul.f32 %v828, %v828
        %v1043 = vmul.f32 %v830, %v830
        %v1044 = vmul.f32 %v832, %v832
        %v1045 = vmul.f32 %v834, %v834
        %v1046 = vmul.f32 %v838, %v838
        %v1047 = vmul.f32 %v840, %v840
        %v1048 = vmul.f32 %v842, %v842
        %v1049 = vmul.f32 %v844, %v844
        %v1050 = vmul.f32 %v848, %v848
        %v1051 = vmul.f32 %v850, %v850
        %v1052 = vmul.f32 %v852, %v852
        %v1053 = vmul.f32 %v854, %v854
        %v1054 = vmul.f32 %v858, %v858
        %v1055 = vmul.f32 %v860, %v860
        %v1056 = vmul.f32 %v862, %v862
        %v1057 = vmul.f32 %v864, %v864
        %v1058 = vmul.f32 %v868, %v868
        %v1059 = vmul.f32 %v870, %v870
        %v1060 = vmul.f32 %v872, %v872
        %v1061 = vmul.f32 %v874, %v874
        %v1062 = vmul.f32 %v878, %v878
        %v1063 = vmul.f32 %v880, %v880
        %v1064 = vmul.f32 %v882, %v882
        %v1065 = vmul.f32 %v884, %v884
        %v1066 = vmul.f32 %v888, %v888
        %v1067 = vmul.f32 %v890, %v890
        %v1068 = vmul.f32 %v892, %v892
        %v1069 = vmul.f32 %v894, %v894
        %v1070 = vmul.f32 %v898, %v898
        %v1071 = vmul.f32 %v900, %v900
        %v1072 = vmul.f32 %v902, %v902
        %v1073 = vmul.f32 %v904, %v904
        %v1074 = vmul.f32 %v908, %v908
        %v1075 = vmul.f32 %v910, %v910
        %v1076 = vmul.f32 %v912, %v912
        %v1077 = vmul.f32 %v914, %v914
        %v1078 = vmul.f32 %v918, %v918
        %v1079 = vmul.f32 %v920, %v920
        %v1080 = vmul.f32 %v922, %v922
        %v1081 = vmul.f32 %v924, %v924
        %v1082 = vmul.f32 %v928, %v928
        %v1083 = vmul.f32 %v930, %v930
        %v1084 = vmul.f32 %v932, %v932
        %v1085 = vmul.f32 %v934, %v934
        %v1086 = vmul.f32 %v938, %v938
        %v1087 = vmul.f32 %v940, %v940
        %v1088 = vmul.f32 %v942, %v942
        %v1089 = vmul.f32 %v944, %v944
        %v1090 = vmul.f32 %v948, %v948
        %v1091 = vmul.f32 %v950, %v950
        %v1092 = vmul.f32 %v952, %v952
        %v1093 = vmul.f32 %v954, %v954
        %v1094 = vmul.f32 %v958, %v958
        %v1095 = vmul.f32 %v960, %v960
        %v1096 = vmul.f32 %v962, %v962
        %v1097 = vmul.f32 %v964, %v964
        %v1098 = vadd.f32 %v1034, %v1042
        %v1099 = vadd.f32 %v1098, %v1050
        %v1100 = vadd.f32 %v1099, %v1058
        %v1101 = vadd.f32 %v1100, %v1066
        %v1102 = vadd.f32 %v1101, %v1074
        %v1103 = vadd.f32 %v1102, %v1082
        %v1104 = vadd.f32 %v1103, %v1090
        %v1105 = vadd.f32 %v1035, %v1043
        %v1106 = vadd.f32 %v1105, %v1051
        %v1107 = vadd.f32 %v1106, %v1059
        %v1108 = vadd.f32 %v1107, %v1067
        %v1109 = vadd.f32 %v1108, %v1075
        %v1110 = vadd.f32 %v1109, %v1083
        %v1111 = vadd.f32 %v1110, %v1091
        %v1112 = vadd.f32 %v1036, %v1044
        %v1113 = vadd.f32 %v1112, %v1052
        %v1114 = vadd.f32 %v1113, %v1060
        %v1115 = vadd.f32 %v1114, %v1068
        %v1116 = vadd.f32 %v1115, %v1076
        %v1117 = vadd.f32 %v1116, %v1084
        %v1118 = vadd.f32 %v1117, %v1092
        %v1119 = vadd.f32 %v1037, %v1045
        %v1120 = vadd.f32 %v1119, %v1053
        %v1121 = vadd.f32 %v1120, %v1061
        %v1122 = vadd.f32 %v1121, %v1069
        %v1123 = vadd.f32 %v1122, %v1077
        %v1124 = vadd.f32 %v1123, %v1085
        %v1125 = vadd.f32 %v1124, %v1093
        %v1126 = vadd.f32 %v1038, %v1046
        %v1127 = vadd.f32 %v1126, %v1054
        %v1128 = vadd.f32 %v1127, %v1062
        %v1129 = vadd.f32 %v1128, %v1070
        %v1130 = vadd.f32 %v1129, %v1078
        %v1131 = vadd.f32 %v1130, %v1086
        %v1132 = vadd.f32 %v1131, %v1094
        %v1133 = vadd.f32 %v1039, %v1047
        %v1134 = vadd.f32 %v1133, %v1055
        %v1135 = vadd.f32 %v1134, %v1063
        %v1136 = vadd.f32 %v1135, %v1071
        %v1137 = vadd.f32 %v1136, %v1079
        %v1138 = vadd.f32 %v1137, %v1087
        %v1139 = vadd.f32 %v1138, %v1095
        %v1140 = vadd.f32 %v1040, %v1048
        %v1141 = vadd.f32 %v1140, %v1056
        %v1142 = vadd.f32 %v1141, %v1064
        %v1143 = vadd.f32 %v1142, %v1072
        %v1144 = vadd.f32 %v1143, %v1080
        %v1145 = vadd.f32 %v1144, %v1088
        %v1146 = vadd.f32 %v1145, %v1096
        %v1147 = vadd.f32 %v1041, %v1049
        %v1148 = vadd.f32 %v1147, %v1057
        %v1149 = vadd.f32 %v1148, %v1065
        %v1150 = vadd.f32 %v1149, %v1073
        %v1151 = vadd.f32 %v1150, %v1081
        %v1152 = vadd.f32 %v1151, %v1089
        %v1153 = vadd.f32 %v1152, %v1097
        %v1154 = vadd.f32 %v1104, %v1111
        %1155 = vadd.xlane.f32.xlu0 %v1154
        %v1156 = vpop.xlane.xlu0 %1155
        %v1157 = vadd.f32 %v1118, %v1125
        %1158 = vadd.xlane.f32.xlu0 %v1157
        %v1159 = vpop.xlane.xlu0 %1158
        %v1160 = vadd.f32 %v1132, %v1139
        %1161 = vadd.xlane.f32.xlu0 %v1160
        %v1162 = vpop.xlane.xlu0 %1161
        %v1163 = vadd.f32 %v1146, %v1153
        %1164 = vadd.xlane.f32.xlu0 %v1163
        %v1165 = vpop.xlane.xlu0 %1164
        %v1166 = vmul.f32 %v1024, 0.00048828125
        %v1167 = vmul.f32 %v1027, 0.00048828125
        %v1168 = vmul.f32 %v1030, 0.00048828125
        %v1169 = vmul.f32 %v1033, 0.00048828125
        %v1170 = vmul.f32 %v1156, 0.00048828125
        %v1171 = vmul.f32 %v1159, 0.00048828125
        %v1172 = vmul.f32 %v1162, 0.00048828125
        %v1173 = vmul.f32 %v1165, 0.00048828125
        %v1174 = vmul.f32 %v1166, %v1166
        %v1175 = vmul.f32 %v1167, %v1167
        %v1176 = vmul.f32 %v1168, %v1168
        %v1177 = vmul.f32 %v1169, %v1169
        %v1178 = vsub.f32 %v1170, %v1174
        %v1179 = vsub.f32 %v1171, %v1175
        %v1180 = vsub.f32 %v1172, %v1176
        %v1181 = vsub.f32 %v1173, %v1177
        %v1182 = vmax.f32 %v1178, 0.0
        %v1183 = vmax.f32 %v1179, 0.0
        %v1184 = vmax.f32 %v1180, 0.0
        %v1185 = vmax.f32 %v1181, 0.0
        %v1186 = vadd.f32 %v1182, 1e-05
        %v1187 = vadd.f32 %v1183, 1e-05
        %v1188 = vadd.f32 %v1184, 1e-05
        %v1189 = vadd.f32 %v1185, 1e-05
        %v1190 = vrsqrt.pop %v1186
        %v1191 = vrsqrt.pop %v1187
        %v1192 = vrsqrt.pop %v1188
        %v1193 = vrsqrt.pop %v1189
        %v1194 = vmul.f32 %v1190, %v381
        %v1195 = vmul.f32 %v1191, %v382
        %v1196 = vmul.f32 %v1192, %v383
        %v1197 = vmul.f32 %v1193, %v384
        %v1198 = vmul.f32 %v1166, %v1194
        %v1199 = vmul.f32 %v1167, %v1195
        %v1200 = vmul.f32 %v1168, %v1196
        %v1201 = vmul.f32 %v1169, %v1197
        %1206 = vrot.lane.b32.xlu0 %v1198, 1
        %v1207 = vpop.permute.xlu0 %1206
        %1208 = vrot.lane.b32.xlu0 %v1199, 1
        %v1209 = vpop.permute.xlu0 %1208
        %1210 = vrot.lane.b32.xlu0 %v1200, 1
        %v1211 = vpop.permute.xlu0 %1210
        %1212 = vrot.lane.b32.xlu0 %v1201, 1
        %v1213 = vpop.permute.xlu0 %1212
        %v1218 = vsub.f32 %v381, %v1207
        %v1219 = vsub.f32 %v382, %v1209
        %v1220 = vsub.f32 %v383, %v1211
        %v1221 = vsub.f32 %v384, %v1213
        %vm1222 = vcmp.ge.f32.partialorder %v1194, 0.0
        %vm1223 = vcmp.ge.f32.partialorder %v1195, 0.0
        %vm1224 = vcmp.ge.f32.partialorder %v1196, 0.0
        %vm1225 = vcmp.ge.f32.partialorder %v1197, 0.0
        %v1226 = vsel %vm1222, 1.0, -1.0
        %v1227 = vsel %vm1223, 1.0, -1.0
        %v1228 = vsel %vm1224, 1.0, -1.0
        %v1229 = vsel %vm1225, 1.0, -1.0
        %v1230 = vsub.f32 2.0, %v1218
        %v1231 = vsub.f32 2.0, %v1219
        %v1232 = vsub.f32 2.0, %v1220
        %v1233 = vsub.f32 2.0, %v1221
        %v1234 = vand.u32 2147483647, %v1194
        %v1235 = vand.u32 2147483647, %v1195
        %v1236 = vand.u32 2147483647, %v1196
        %v1237 = vand.u32 2147483647, %v1197
        %1242 = vrot.lane.b32.xlu0 %v1234, 1
        %v1243 = vpop.permute.xlu0 %1242
        %1244 = vrot.lane.b32.xlu0 %v1235, 1
        %v1245 = vpop.permute.xlu0 %1244
        %1246 = vrot.lane.b32.xlu0 %v1236, 1
        %v1247 = vpop.permute.xlu0 %1246
        %1248 = vrot.lane.b32.xlu0 %v1237, 1
        %v1249 = vpop.permute.xlu0 %1248
        %v1254 = vrcp.pop %v1243
        %v1255 = vmul.f32 %v1230, %v1254
        %v1256 = vrcp.pop %v1245
        %v1257 = vmul.f32 %v1231, %v1256
        %v1258 = vrcp.pop %v1247
        %v1259 = vmul.f32 %v1232, %v1258
        %v1260 = vrcp.pop %v1249
        %v1261 = vmul.f32 %v1233, %v1260
        %1263 = vset.pattern.permute.xlu0 2
        %1264 = vperm.xlu0 %1263, %v1226
        %v1265 = vpop.permute.xlu0 %1264
        %1268 = vset.pattern.permute.xlu0 2
        %1269 = vperm.xlu0 %1268, %v1227
        %v1270 = vpop.permute.xlu0 %1269
        %1273 = vset.pattern.permute.xlu0 2
        %1274 = vperm.xlu0 %1273, %v1228
        %v1275 = vpop.permute.xlu0 %1274
        %1278 = vset.pattern.permute.xlu0 2
        %1279 = vperm.xlu0 %1278, %v1229
        %v1280 = vpop.permute.xlu0 %1279
        %v1282 = vmul.f32 %v808, %v1265
        %v1283 = vmul.f32 %v810, %v1265
        %v1284 = vmul.f32 %v812, %v1270
        %v1285 = vmul.f32 %v814, %v1270
        %v1286 = vmul.f32 %v818, %v1275
        %v1287 = vmul.f32 %v820, %v1275
        %v1288 = vmul.f32 %v822, %v1280
        %v1289 = vmul.f32 %v824, %v1280
        %v1290 = vmul.f32 %v828, %v1265
        %v1291 = vmul.f32 %v830, %v1265
        %v1292 = vmul.f32 %v832, %v1270
        %v1293 = vmul.f32 %v834, %v1270
        %v1294 = vmul.f32 %v838, %v1275
        %v1295 = vmul.f32 %v840, %v1275
        %v1296 = vmul.f32 %v842, %v1280
        %v1297 = vmul.f32 %v844, %v1280
        %v1298 = vmul.f32 %v848, %v1265
        %v1299 = vmul.f32 %v850, %v1265
        %v1300 = vmul.f32 %v852, %v1270
        %v1301 = vmul.f32 %v854, %v1270
        %v1302 = vmul.f32 %v858, %v1275
        %v1303 = vmul.f32 %v860, %v1275
        %v1304 = vmul.f32 %v862, %v1280
        %v1305 = vmul.f32 %v864, %v1280
        %v1306 = vmul.f32 %v868, %v1265
        %v1307 = vmul.f32 %v870, %v1265
        %v1308 = vmul.f32 %v872, %v1270
        %v1309 = vmul.f32 %v874, %v1270
        %v1310 = vmul.f32 %v878, %v1275
        %v1311 = vmul.f32 %v880, %v1275
        %v1312 = vmul.f32 %v882, %v1280
        %v1313 = vmul.f32 %v884, %v1280
        %v1314 = vmul.f32 %v888, %v1265
        %v1315 = vmul.f32 %v890, %v1265
        %v1316 = vmul.f32 %v892, %v1270
        %v1317 = vmul.f32 %v894, %v1270
        %v1318 = vmul.f32 %v898, %v1275
        %v1319 = vmul.f32 %v900, %v1275
        %v1320 = vmul.f32 %v902, %v1280
        %v1321 = vmul.f32 %v904, %v1280
        %v1322 = vmul.f32 %v908, %v1265
        %v1323 = vmul.f32 %v910, %v1265
        %v1324 = vmul.f32 %v912, %v1270
        %v1325 = vmul.f32 %v914, %v1270
        %v1326 = vmul.f32 %v918, %v1275
        %v1327 = vmul.f32 %v920, %v1275
        %v1328 = vmul.f32 %v922, %v1280
        %v1329 = vmul.f32 %v924, %v1280
        %v1330 = vmul.f32 %v928, %v1265
        %v1331 = vmul.f32 %v930, %v1265
        %v1332 = vmul.f32 %v932, %v1270
        %v1333 = vmul.f32 %v934, %v1270
        %v1334 = vmul.f32 %v938, %v1275
        %v1335 = vmul.f32 %v940, %v1275
        %v1336 = vmul.f32 %v942, %v1280
        %v1337 = vmul.f32 %v944, %v1280
        %v1338 = vmul.f32 %v948, %v1265
        %v1339 = vmul.f32 %v950, %v1265
        %v1340 = vmul.f32 %v952, %v1270
        %v1341 = vmul.f32 %v954, %v1270
        %v1342 = vmul.f32 %v958, %v1275
        %v1343 = vmul.f32 %v960, %v1275
        %v1344 = vmul.f32 %v962, %v1280
        %v1345 = vmul.f32 %v964, %v1280
        %1347 = vset.pattern.permute.xlu0 3
        %1348 = vperm.xlu0 %1347, %v1255
        %v1349 = vpop.permute.xlu0 %1348
        %1352 = vset.pattern.permute.xlu0 3
        %1353 = vperm.xlu0 %1352, %v1257
        %v1354 = vpop.permute.xlu0 %1353
        %1357 = vset.pattern.permute.xlu0 3
        %1358 = vperm.xlu0 %1357, %v1259
        %v1359 = vpop.permute.xlu0 %1358
        %1362 = vset.pattern.permute.xlu0 3
        %1363 = vperm.xlu0 %1362, %v1261
        %v1364 = vpop.permute.xlu0 %1363
        %vm1366 = vcmp.ge.f32.partialorder %v1282, %v1349
        %vm1367 = vcmp.ge.f32.partialorder %v1283, %v1349
        %vm1368 = vcmp.ge.f32.partialorder %v1284, %v1354
        %vm1369 = vcmp.ge.f32.partialorder %v1285, %v1354
        %vm1370 = vcmp.ge.f32.partialorder %v1286, %v1359
        %vm1371 = vcmp.ge.f32.partialorder %v1287, %v1359
        %vm1372 = vcmp.ge.f32.partialorder %v1288, %v1364
        %vm1373 = vcmp.ge.f32.partialorder %v1289, %v1364
        %vm1374 = vcmp.ge.f32.partialorder %v1290, %v1349
        %vm1375 = vcmp.ge.f32.partialorder %v1291, %v1349
        %vm1376 = vcmp.ge.f32.partialorder %v1292, %v1354
        %vm1377 = vcmp.ge.f32.partialorder %v1293, %v1354
        %vm1378 = vcmp.ge.f32.partialorder %v1294, %v1359
        %vm1379 = vcmp.ge.f32.partialorder %v1295, %v1359
        %vm1380 = vcmp.ge.f32.partialorder %v1296, %v1364
        %vm1381 = vcmp.ge.f32.partialorder %v1297, %v1364
        %vm1382 = vcmp.ge.f32.partialorder %v1298, %v1349
        %vm1383 = vcmp.ge.f32.partialorder %v1299, %v1349
        %vm1384 = vcmp.ge.f32.partialorder %v1300, %v1354
        %vm1385 = vcmp.ge.f32.partialorder %v1301, %v1354
        %vm1386 = vcmp.ge.f32.partialorder %v1302, %v1359
        %vm1387 = vcmp.ge.f32.partialorder %v1303, %v1359
        %vm1388 = vcmp.ge.f32.partialorder %v1304, %v1364
        %vm1389 = vcmp.ge.f32.partialorder %v1305, %v1364
        %vm1390 = vcmp.ge.f32.partialorder %v1306, %v1349
        %vm1391 = vcmp.ge.f32.partialorder %v1307, %v1349
        %vm1392 = vcmp.ge.f32.partialorder %v1308, %v1354
        %vm1393 = vcmp.ge.f32.partialorder %v1309, %v1354
        %vm1394 = vcmp.ge.f32.partialorder %v1310, %v1359
        %vm1395 = vcmp.ge.f32.partialorder %v1311, %v1359
        %vm1396 = vcmp.ge.f32.partialorder %v1312, %v1364
        %vm1397 = vcmp.ge.f32.partialorder %v1313, %v1364
        %vm1398 = vcmp.ge.f32.partialorder %v1314, %v1349
        %vm1399 = vcmp.ge.f32.partialorder %v1315, %v1349
        %vm1400 = vcmp.ge.f32.partialorder %v1316, %v1354
        %vm1401 = vcmp.ge.f32.partialorder %v1317, %v1354
        %vm1402 = vcmp.ge.f32.partialorder %v1318, %v1359
        %vm1403 = vcmp.ge.f32.partialorder %v1319, %v1359
        %vm1404 = vcmp.ge.f32.partialorder %v1320, %v1364
        %vm1405 = vcmp.ge.f32.partialorder %v1321, %v1364
        %vm1406 = vcmp.ge.f32.partialorder %v1322, %v1349
        %vm1407 = vcmp.ge.f32.partialorder %v1323, %v1349
        %vm1408 = vcmp.ge.f32.partialorder %v1324, %v1354
        %vm1409 = vcmp.ge.f32.partialorder %v1325, %v1354
        %vm1410 = vcmp.ge.f32.partialorder %v1326, %v1359
        %vm1411 = vcmp.ge.f32.partialorder %v1327, %v1359
        %vm1412 = vcmp.ge.f32.partialorder %v1328, %v1364
        %vm1413 = vcmp.ge.f32.partialorder %v1329, %v1364
        %vm1414 = vcmp.ge.f32.partialorder %v1330, %v1349
        %vm1415 = vcmp.ge.f32.partialorder %v1331, %v1349
        %vm1416 = vcmp.ge.f32.partialorder %v1332, %v1354
        %vm1417 = vcmp.ge.f32.partialorder %v1333, %v1354
        %vm1418 = vcmp.ge.f32.partialorder %v1334, %v1359
        %vm1419 = vcmp.ge.f32.partialorder %v1335, %v1359
        %vm1420 = vcmp.ge.f32.partialorder %v1336, %v1364
        %vm1421 = vcmp.ge.f32.partialorder %v1337, %v1364
        %vm1422 = vcmp.ge.f32.partialorder %v1338, %v1349
        %vm1423 = vcmp.ge.f32.partialorder %v1339, %v1349
        %vm1424 = vcmp.ge.f32.partialorder %v1340, %v1354
        %vm1425 = vcmp.ge.f32.partialorder %v1341, %v1354
        %vm1426 = vcmp.ge.f32.partialorder %v1342, %v1359
        %vm1427 = vcmp.ge.f32.partialorder %v1343, %v1359
        %vm1428 = vcmp.ge.f32.partialorder %v1344, %v1364
        %vm1429 = vcmp.ge.f32.partialorder %v1345, %v1364
        %v1430 = vsel %vm1366, 1, 0
        %v1431 = vsel %vm1367, 1, 0
        %v1432 = vsel %vm1368, 1, 0
        %v1433 = vsel %vm1369, 1, 0
        %v1434 = vsel %vm1370, 1, 0
        %v1435 = vsel %vm1371, 1, 0
        %v1436 = vsel %vm1372, 1, 0
        %v1437 = vsel %vm1373, 1, 0
        %v1438 = vsel %vm1374, 1, 0
        %v1439 = vsel %vm1375, 1, 0
        %v1440 = vsel %vm1376, 1, 0
        %v1441 = vsel %vm1377, 1, 0
        %v1442 = vsel %vm1378, 1, 0
        %v1443 = vsel %vm1379, 1, 0
        %v1444 = vsel %vm1380, 1, 0
        %v1445 = vsel %vm1381, 1, 0
        %v1446 = vsel %vm1382, 1, 0
        %v1447 = vsel %vm1383, 1, 0
        %v1448 = vsel %vm1384, 1, 0
        %v1449 = vsel %vm1385, 1, 0
        %v1450 = vsel %vm1386, 1, 0
        %v1451 = vsel %vm1387, 1, 0
        %v1452 = vsel %vm1388, 1, 0
        %v1453 = vsel %vm1389, 1, 0
        %v1454 = vsel %vm1390, 1, 0
        %v1455 = vsel %vm1391, 1, 0
        %v1456 = vsel %vm1392, 1, 0
        %v1457 = vsel %vm1393, 1, 0
        %v1458 = vsel %vm1394, 1, 0
        %v1459 = vsel %vm1395, 1, 0
        %v1460 = vsel %vm1396, 1, 0
        %v1461 = vsel %vm1397, 1, 0
        %v1462 = vsel %vm1398, 1, 0
        %v1463 = vsel %vm1399, 1, 0
        %v1464 = vsel %vm1400, 1, 0
        %v1465 = vsel %vm1401, 1, 0
        %v1466 = vsel %vm1402, 1, 0
        %v1467 = vsel %vm1403, 1, 0
        %v1468 = vsel %vm1404, 1, 0
        %v1469 = vsel %vm1405, 1, 0
        %v1470 = vsel %vm1406, 1, 0
        %v1471 = vsel %vm1407, 1, 0
        %v1472 = vsel %vm1408, 1, 0
        %v1473 = vsel %vm1409, 1, 0
        %v1474 = vsel %vm1410, 1, 0
        %v1475 = vsel %vm1411, 1, 0
        %v1476 = vsel %vm1412, 1, 0
        %v1477 = vsel %vm1413, 1, 0
        %v1478 = vsel %vm1414, 1, 0
        %v1479 = vsel %vm1415, 1, 0
        %v1480 = vsel %vm1416, 1, 0
        %v1481 = vsel %vm1417, 1, 0
        %v1482 = vsel %vm1418, 1, 0
        %v1483 = vsel %vm1419, 1, 0
        %v1484 = vsel %vm1420, 1, 0
        %v1485 = vsel %vm1421, 1, 0
        %v1486 = vsel %vm1422, 1, 0
        %v1487 = vsel %vm1423, 1, 0
        %v1488 = vsel %vm1424, 1, 0
        %v1489 = vsel %vm1425, 1, 0
        %v1490 = vsel %vm1426, 1, 0
        %v1491 = vsel %vm1427, 1, 0
        %v1492 = vsel %vm1428, 1, 0
        %v1493 = vsel %vm1429, 1, 0
        %v1494 = vcvt.s32.f32 %v1430
        %v1495 = vcvt.s32.f32 %v1431
        %v1496 = vcvt.s32.f32 %v1432
        %v1497 = vcvt.s32.f32 %v1433
        %v1498 = vcvt.s32.f32 %v1434
        %v1499 = vcvt.s32.f32 %v1435
        %v1500 = vcvt.s32.f32 %v1436
        %v1501 = vcvt.s32.f32 %v1437
        %v1502 = vcvt.s32.f32 %v1438
        %v1503 = vcvt.s32.f32 %v1439
        %v1504 = vcvt.s32.f32 %v1440
        %v1505 = vcvt.s32.f32 %v1441
        %v1506 = vcvt.s32.f32 %v1442
        %v1507 = vcvt.s32.f32 %v1443
        %v1508 = vcvt.s32.f32 %v1444
        %v1509 = vcvt.s32.f32 %v1445
        %v1510 = vcvt.s32.f32 %v1446
        %v1511 = vcvt.s32.f32 %v1447
        %v1512 = vcvt.s32.f32 %v1448
        %v1513 = vcvt.s32.f32 %v1449
        %v1514 = vcvt.s32.f32 %v1450
        %v1515 = vcvt.s32.f32 %v1451
        %v1516 = vcvt.s32.f32 %v1452
        %v1517 = vcvt.s32.f32 %v1453
        %v1518 = vcvt.s32.f32 %v1454
        %v1519 = vcvt.s32.f32 %v1455
        %v1520 = vcvt.s32.f32 %v1456
        %v1521 = vcvt.s32.f32 %v1457
        %v1522 = vcvt.s32.f32 %v1458
        %v1523 = vcvt.s32.f32 %v1459
        %v1524 = vcvt.s32.f32 %v1460
        %v1525 = vcvt.s32.f32 %v1461
        %v1526 = vcvt.s32.f32 %v1462
        %v1527 = vcvt.s32.f32 %v1463
        %v1528 = vcvt.s32.f32 %v1464
        %v1529 = vcvt.s32.f32 %v1465
        %v1530 = vcvt.s32.f32 %v1466
        %v1531 = vcvt.s32.f32 %v1467
        %v1532 = vcvt.s32.f32 %v1468
        %v1533 = vcvt.s32.f32 %v1469
        %v1534 = vcvt.s32.f32 %v1470
        %v1535 = vcvt.s32.f32 %v1471
        %v1536 = vcvt.s32.f32 %v1472
        %v1537 = vcvt.s32.f32 %v1473
        %v1538 = vcvt.s32.f32 %v1474
        %v1539 = vcvt.s32.f32 %v1475
        %v1540 = vcvt.s32.f32 %v1476
        %v1541 = vcvt.s32.f32 %v1477
        %v1542 = vcvt.s32.f32 %v1478
        %v1543 = vcvt.s32.f32 %v1479
        %v1544 = vcvt.s32.f32 %v1480
        %v1545 = vcvt.s32.f32 %v1481
        %v1546 = vcvt.s32.f32 %v1482
        %v1547 = vcvt.s32.f32 %v1483
        %v1548 = vcvt.s32.f32 %v1484
        %v1549 = vcvt.s32.f32 %v1485
        %v1550 = vcvt.s32.f32 %v1486
        %v1551 = vcvt.s32.f32 %v1487
        %v1552 = vcvt.s32.f32 %v1488
        %v1553 = vcvt.s32.f32 %v1489
        %v1554 = vcvt.s32.f32 %v1490
        %v1555 = vcvt.s32.f32 %v1491
        %v1556 = vcvt.s32.f32 %v1492
        %v1557 = vcvt.s32.f32 %v1493
        %v1558 = vpack.c.bf16 %v1496, %v1494
        %v1559 = vpack.c.bf16 %v1497, %v1495
        %v1560 = vpack.c.bf16 %v1500, %v1498
        %v1561 = vpack.c.bf16 %v1501, %v1499
        %v1562 = vpack.c.bf16 %v1504, %v1502
        %v1563 = vpack.c.bf16 %v1505, %v1503
        %v1564 = vpack.c.bf16 %v1508, %v1506
        %v1565 = vpack.c.bf16 %v1509, %v1507
        %v1566 = vpack.c.bf16 %v1512, %v1510
        %v1567 = vpack.c.bf16 %v1513, %v1511
        %v1568 = vpack.c.bf16 %v1516, %v1514
        %v1569 = vpack.c.bf16 %v1517, %v1515
        %v1570 = vpack.c.bf16 %v1520, %v1518
        %v1571 = vpack.c.bf16 %v1521, %v1519
        %v1572 = vpack.c.bf16 %v1524, %v1522
        %v1573 = vpack.c.bf16 %v1525, %v1523
        %v1574 = vpack.c.bf16 %v1528, %v1526
        %v1575 = vpack.c.bf16 %v1529, %v1527
        %v1576 = vpack.c.bf16 %v1532, %v1530
        %v1577 = vpack.c.bf16 %v1533, %v1531
        %v1578 = vpack.c.bf16 %v1536, %v1534
        %v1579 = vpack.c.bf16 %v1537, %v1535
        %v1580 = vpack.c.bf16 %v1540, %v1538
        %v1581 = vpack.c.bf16 %v1541, %v1539
        %v1582 = vpack.c.bf16 %v1544, %v1542
        %v1583 = vpack.c.bf16 %v1545, %v1543
        %v1584 = vpack.c.bf16 %v1548, %v1546
        %v1585 = vpack.c.bf16 %v1549, %v1547
        %v1586 = vpack.c.bf16 %v1552, %v1550
        %v1587 = vpack.c.bf16 %v1553, %v1551
        %v1588 = vpack.c.bf16 %v1556, %v1554
        %v1589 = vpack.c.bf16 %v1557, %v1555
        %v1590 = vld [vmem:[#allocation7] sm:$0xf]
        %v1591 = vld [vmem:[#allocation7 + $0x4] sm:$0xf]
        %v1592 = vld [vmem:[#allocation7 + $0x8] sm:$0xf]
        %v1593 = vld [vmem:[#allocation7 + $0xc] sm:$0xf]
        %v1594 = vld [vmem:[#allocation7 + $0x10] sm:$0xf]
        %v1595 = vld [vmem:[#allocation7 + $0x14] sm:$0xf]
        %v1596 = vld [vmem:[#allocation7 + $0x18] sm:$0xf]
        %v1597 = vld [vmem:[#allocation7 + $0x1c] sm:$0xf]
        %v1598 = vld [vmem:[#allocation7 + $0x20] sm:$0xf]
        %v1599 = vld [vmem:[#allocation7 + $0x24] sm:$0xf]
        %v1600 = vld [vmem:[#allocation7 + $0x28] sm:$0xf]
        %v1601 = vld [vmem:[#allocation7 + $0x2c] sm:$0xf]
        %v1602 = vld [vmem:[#allocation7 + $0x30] sm:$0xf]
        %v1603 = vld [vmem:[#allocation7 + $0x34] sm:$0xf]
        %v1604 = vld [vmem:[#allocation7 + $0x38] sm:$0xf]
        %v1605 = vld [vmem:[#allocation7 + $0x3c] sm:$0xf]
        %v1606 = vld [vmem:[#allocation7 + $0x40] sm:$0xf]
        %v1607 = vld [vmem:[#allocation7 + $0x44] sm:$0xf]
        %v1608 = vld [vmem:[#allocation7 + $0x48] sm:$0xf]
        %v1609 = vld [vmem:[#allocation7 + $0x4c] sm:$0xf]
        %v1610 = vld [vmem:[#allocation7 + $0x50] sm:$0xf]
        %v1611 = vld [vmem:[#allocation7 + $0x54] sm:$0xf]
        %v1612 = vld [vmem:[#allocation7 + $0x58] sm:$0xf]
        %v1613 = vld [vmem:[#allocation7 + $0x5c] sm:$0xf]
        %v1614 = vld [vmem:[#allocation7 + $0x60] sm:$0xf]
        %v1615 = vld [vmem:[#allocation7 + $0x64] sm:$0xf]
        %v1616 = vld [vmem:[#allocation7 + $0x68] sm:$0xf]
        %v1617 = vld [vmem:[#allocation7 + $0x6c] sm:$0xf]
        %v1618 = vld [vmem:[#allocation7 + $0x70] sm:$0xf]
        %v1619 = vld [vmem:[#allocation7 + $0x74] sm:$0xf]
        %v1620 = vld [vmem:[#allocation7 + $0x78] sm:$0xf]
        %v1621 = vld [vmem:[#allocation7 + $0x7c] sm:$0xf]
        %v1622 = vld [vmem:[%s4] sm:$0x1]
        %v1624 = vlaneseq
        %v1625 = vshrl.u32 %v1624, 7
        %v1626 = vsub.s32 0, %v1625
        %v1627 = vrot.slane %v1622, %v1626
        %v1661 = vunpack.c.l.b16 %v1590
        %v1662 = vunpack.c.l.b16 %v1591
        %v1663 = vunpack.c.l.b16 %v1592
        %v1664 = vunpack.c.l.b16 %v1593
        %v1665 = vunpack.c.l.b16 %v1594
        %v1666 = vunpack.c.l.b16 %v1595
        %v1667 = vunpack.c.l.b16 %v1596
        %v1668 = vunpack.c.l.b16 %v1597
        %v1669 = vunpack.c.l.b16 %v1598
        %v1670 = vunpack.c.l.b16 %v1599
        %v1671 = vunpack.c.l.b16 %v1600
        %v1672 = vunpack.c.l.b16 %v1601
        %v1673 = vunpack.c.l.b16 %v1602
        %v1674 = vunpack.c.l.b16 %v1603
        %v1675 = vunpack.c.l.b16 %v1604
        %v1676 = vunpack.c.l.b16 %v1605
        %v1677 = vunpack.c.l.b16 %v1606
        %v1678 = vunpack.c.l.b16 %v1607
        %v1679 = vunpack.c.l.b16 %v1608
        %v1680 = vunpack.c.l.b16 %v1609
        %v1681 = vunpack.c.l.b16 %v1610
        %v1682 = vunpack.c.l.b16 %v1611
        %v1683 = vunpack.c.l.b16 %v1612
        %v1684 = vunpack.c.l.b16 %v1613
        %v1685 = vunpack.c.l.b16 %v1614
        %v1686 = vunpack.c.l.b16 %v1615
        %v1687 = vunpack.c.l.b16 %v1616
        %v1688 = vunpack.c.l.b16 %v1617
        %v1689 = vunpack.c.l.b16 %v1618
        %v1690 = vunpack.c.l.b16 %v1619
        %v1691 = vunpack.c.l.b16 %v1620
        %v1692 = vunpack.c.l.b16 %v1621
        %v1693 = vpack.c.b16 %v1662, %v1661
        %v1694 = vpack.c.b16 %v1664, %v1663
        %v1695 = vpack.c.b16 %v1666, %v1665
        %v1696 = vpack.c.b16 %v1668, %v1667
        %v1697 = vpack.c.b16 %v1670, %v1669
        %v1698 = vpack.c.b16 %v1672, %v1671
        %v1699 = vpack.c.b16 %v1674, %v1673
        %v1700 = vpack.c.b16 %v1676, %v1675
        %v1701 = vpack.c.b16 %v1678, %v1677
        %v1702 = vpack.c.b16 %v1680, %v1679
        %v1703 = vpack.c.b16 %v1682, %v1681
        %v1704 = vpack.c.b16 %v1684, %v1683
        %v1705 = vpack.c.b16 %v1686, %v1685
        %v1706 = vpack.c.b16 %v1688, %v1687
        %v1707 = vpack.c.b16 %v1690, %v1689
        %v1708 = vpack.c.b16 %v1692, %v1691
        %1725 = vmatprep.subr.bf16.mxu0 0
        %1726 = vmatpush1.bf16.msra.mxu0 %v1693
        %1727 = vmatprep.subr.bf16.mxu0 0
        %1728 = vmatpush1.bf16.msra.mxu0 %v1694
        %1729 = vmatprep.subr.bf16.mxu0 0
        %1730 = vmatpush1.bf16.msra.mxu0 %v1695
        %1731 = vmatprep.subr.bf16.mxu0 0
        %1732 = vmatpush1.bf16.msra.mxu0 %v1696
        %1733 = vmatprep.subr.bf16.mxu0 0
        %1734 = vmatpush1.bf16.msra.mxu0 %v1697
        %1735 = vmatprep.subr.bf16.mxu0 0
        %1736 = vmatpush1.bf16.msra.mxu0 %v1698
        %1737 = vmatprep.subr.bf16.mxu0 0
        %1738 = vmatpush1.bf16.msra.mxu0 %v1699
        %1739 = vmatprep.subr.bf16.mxu0 0
        %1740 = vmatpush1.bf16.msra.mxu0 %v1700
        %1741 = vmatprep.subr.bf16.mxu0 0
        %1742 = vmatpush1.bf16.msra.mxu0 %v1701
        %1743 = vmatprep.subr.bf16.mxu0 0
        %1744 = vmatpush1.bf16.msra.mxu0 %v1702
        %1745 = vmatprep.subr.bf16.mxu0 0
        %1746 = vmatpush1.bf16.msra.mxu0 %v1703
        %1747 = vmatprep.subr.bf16.mxu0 0
        %1748 = vmatpush1.bf16.msra.mxu0 %v1704
        %1749 = vmatprep.subr.bf16.mxu0 0
        %1750 = vmatpush1.bf16.msra.mxu0 %v1705
        %1751 = vmatprep.subr.bf16.mxu0 0
        %1752 = vmatpush1.bf16.msra.mxu0 %v1706
        %1753 = vmatprep.subr.bf16.mxu0 0
        %1754 = vmatpush1.bf16.msra.mxu0 %v1707
        %1755 = vmatprep.subr.bf16.mxu0 0
        %1756 = vmatpush1.bf16.msra.mxu0 %v1708
        %1757 = vmatprep.mubr.bf16.mxu0 %v1559
        %1758 = vmatmul.mubr.bf16.gmra.mrb[0].mxu0 %v1558
        %v1759 = vpop.f32.mrb[0].mxu0
        %v1760 = vadd.f32 %v1627, %v1759
        %v1761 = vpop.f32.mrb[0].mxu0
        %v1762 = vpop.f32.mrb[0].mxu0
        %v1763 = vadd.f32 %v1627, %v1762
        %v1764 = vpop.f32.mrb[0].mxu0
        %1765 = vmatprep.mubr.bf16.mxu0 %v1561
        %1766 = vmatmul.mubr.bf16.gmra.mrb[0].mxu0 %v1560
        %v1767 = vpop.f32.mrb[0].mxu0
        %v1768 = vadd.f32 %v1627, %v1767
        %v1769 = vpop.f32.mrb[0].mxu0
        %v1770 = vpop.f32.mrb[0].mxu0
        %v1771 = vadd.f32 %v1627, %v1770
        %v1772 = vpop.f32.mrb[0].mxu0
        %1773 = vmatprep.mubr.bf16.mxu0 %v1563
        %1774 = vmatmul.mubr.bf16.gmra.mrb[0].mxu0 %v1562
        %v1775 = vpop.f32.mrb[0].mxu0
        %v1776 = vadd.f32 %v1627, %v1775
        %v1777 = vpop.f32.mrb[0].mxu0
        %v1778 = vpop.f32.mrb[0].mxu0
        %v1779 = vadd.f32 %v1627, %v1778
        %v1780 = vpop.f32.mrb[0].mxu0
        %1781 = vmatprep.mubr.bf16.mxu0 %v1565
        %1782 = vmatmul.mubr.bf16.gmra.mrb[0].mxu0 %v1564
        %v1783 = vpop.f32.mrb[0].mxu0
        %v1784 = vadd.f32 %v1627, %v1783
        %v1785 = vpop.f32.mrb[0].mxu0
        %v1786 = vpop.f32.mrb[0].mxu0
        %v1787 = vadd.f32 %v1627, %v1786
        %v1788 = vpop.f32.mrb[0].mxu0
        %1789 = vmatprep.mubr.bf16.mxu0 %v1567
        %1790 = vmatmul.mubr.bf16.gmra.mrb[0].mxu0 %v1566
        %v1791 = vpop.f32.mrb[0].mxu0
        %v1792 = vadd.f32 %v1627, %v1791
        %v1793 = vpop.f32.mrb[0].mxu0
        %v1794 = vpop.f32.mrb[0].mxu0
        %v1795 = vadd.f32 %v1627, %v1794
        %v1796 = vpop.f32.mrb[0].mxu0
        %1797 = vmatprep.mubr.bf16.mxu0 %v1569
        %1798 = vmatmul.mubr.bf16.gmra.mrb[0].mxu0 %v1568
        %v1799 = vpop.f32.mrb[0].mxu0
        %v1800 = vadd.f32 %v1627, %v1799
        %v1801 = vpop.f32.mrb[0].mxu0
        %v1802 = vpop.f32.mrb[0].mxu0
        %v1803 = vadd.f32 %v1627, %v1802
        %v1804 = vpop.f32.mrb[0].mxu0
        %1805 = vmatprep.mubr.bf16.mxu0 %v1571
        %1806 = vmatmul.mubr.bf16.gmra.mrb[0].mxu0 %v1570
        %v1807 = vpop.f32.mrb[0].mxu0
        %v1808 = vadd.f32 %v1627, %v1807
        %v1809 = vpop.f32.mrb[0].mxu0
        %v1810 = vpop.f32.mrb[0].mxu0
        %v1811 = vadd.f32 %v1627, %v1810
        %v1812 = vpop.f32.mrb[0].mxu0
        %1813 = vmatprep.mubr.bf16.mxu0 %v1573
        %1814 = vmatmul.mubr.bf16.gmra.mrb[0].mxu0 %v1572
        %v1815 = vpop.f32.mrb[0].mxu0
        %v1816 = vadd.f32 %v1627, %v1815
        %v1817 = vpop.f32.mrb[0].mxu0
        %v1818 = vpop.f32.mrb[0].mxu0
        %v1819 = vadd.f32 %v1627, %v1818
        %v1820 = vpop.f32.mrb[0].mxu0
        %1821 = vmatprep.mubr.bf16.mxu0 %v1575
        %1822 = vmatmul.mubr.bf16.gmra.mrb[0].mxu0 %v1574
        %v1823 = vpop.f32.mrb[0].mxu0
        %v1824 = vadd.f32 %v1627, %v1823
        %v1825 = vpop.f32.mrb[0].mxu0
        %v1826 = vpop.f32.mrb[0].mxu0
        %v1827 = vadd.f32 %v1627, %v1826
        %v1828 = vpop.f32.mrb[0].mxu0
        %1829 = vmatprep.mubr.bf16.mxu0 %v1577
        %1830 = vmatmul.mubr.bf16.gmra.mrb[0].mxu0 %v1576
        %v1831 = vpop.f32.mrb[0].mxu0
        %v1832 = vadd.f32 %v1627, %v1831
        %v1833 = vpop.f32.mrb[0].mxu0
        %v1834 = vpop.f32.mrb[0].mxu0
        %v1835 = vadd.f32 %v1627, %v1834
        %v1836 = vpop.f32.mrb[0].mxu0
        %1837 = vmatprep.mubr.bf16.mxu0 %v1579
        %1838 = vmatmul.mubr.bf16.gmra.mrb[0].mxu0 %v1578
        %v1839 = vpop.f32.mrb[0].mxu0
        %v1840 = vadd.f32 %v1627, %v1839
        %v1841 = vpop.f32.mrb[0].mxu0
        %v1842 = vpop.f32.mrb[0].mxu0
        %v1843 = vadd.f32 %v1627, %v1842
        %v1844 = vpop.f32.mrb[0].mxu0
        %1845 = vmatprep.mubr.bf16.mxu0 %v1581
        %1846 = vmatmul.mubr.bf16.gmra.mrb[0].mxu0 %v1580
        %v1847 = vpop.f32.mrb[0].mxu0
        %v1848 = vadd.f32 %v1627, %v1847
        %v1849 = vpop.f32.mrb[0].mxu0
        %v1850 = vpop.f32.mrb[0].mxu0
        %v1851 = vadd.f32 %v1627, %v1850
        %v1852 = vpop.f32.mrb[0].mxu0
        %1853 = vmatprep.mubr.bf16.mxu0 %v1583
        %1854 = vmatmul.mubr.bf16.gmra.mrb[0].mxu0 %v1582
        %v1855 = vpop.f32.mrb[0].mxu0
        %v1856 = vadd.f32 %v1627, %v1855
        %v1857 = vpop.f32.mrb[0].mxu0
        %v1858 = vpop.f32.mrb[0].mxu0
        %v1859 = vadd.f32 %v1627, %v1858
        %v1860 = vpop.f32.mrb[0].mxu0
        %1861 = vmatprep.mubr.bf16.mxu0 %v1585
        %1862 = vmatmul.mubr.bf16.gmra.mrb[0].mxu0 %v1584
        %v1863 = vpop.f32.mrb[0].mxu0
        %v1864 = vadd.f32 %v1627, %v1863
        %v1865 = vpop.f32.mrb[0].mxu0
        %v1866 = vpop.f32.mrb[0].mxu0
        %v1867 = vadd.f32 %v1627, %v1866
        %v1868 = vpop.f32.mrb[0].mxu0
        %1869 = vmatprep.mubr.bf16.mxu0 %v1587
        %1870 = vmatmul.mubr.bf16.gmra.mrb[0].mxu0 %v1586
        %v1871 = vpop.f32.mrb[0].mxu0
        %v1872 = vadd.f32 %v1627, %v1871
        %v1873 = vpop.f32.mrb[0].mxu0
        %v1874 = vpop.f32.mrb[0].mxu0
        %v1875 = vadd.f32 %v1627, %v1874
        %v1876 = vpop.f32.mrb[0].mxu0
        %1877 = vmatprep.mubr.bf16.mxu0 %v1589
        %1878 = vmatmul.mubr.bf16.gmra.mrb[0].mxu0 %v1588
        %v1879 = vpop.f32.mrb[0].mxu0
        %v1880 = vadd.f32 %v1627, %v1879
        %v1881 = vpop.f32.mrb[0].mxu0
        %v1882 = vpop.f32.mrb[0].mxu0
        %v1883 = vadd.f32 %v1627, %v1882
        %v1884 = vpop.f32.mrb[0].mxu0
        %1885 = vdwg.mxu0
        %v1886 = vadd.f32 %v1760, %v1776
        %v1887 = vadd.f32 %v1886, %v1792
        %v1888 = vadd.f32 %v1887, %v1808
        %v1889 = vadd.f32 %v1888, %v1824
        %v1890 = vadd.f32 %v1889, %v1840
        %v1891 = vadd.f32 %v1890, %v1856
        %v1892 = vadd.f32 %v1891, %v1872
        %v1893 = vadd.f32 %v1763, %v1779
        %v1894 = vadd.f32 %v1893, %v1795
        %v1895 = vadd.f32 %v1894, %v1811
        %v1896 = vadd.f32 %v1895, %v1827
        %v1897 = vadd.f32 %v1896, %v1843
        %v1898 = vadd.f32 %v1897, %v1859
        %v1899 = vadd.f32 %v1898, %v1875
        %v1900 = vadd.f32 %v1768, %v1784
        %v1901 = vadd.f32 %v1900, %v1800
        %v1902 = vadd.f32 %v1901, %v1816
        %v1903 = vadd.f32 %v1902, %v1832
        %v1904 = vadd.f32 %v1903, %v1848
        %v1905 = vadd.f32 %v1904, %v1864
        %v1906 = vadd.f32 %v1905, %v1880
        %v1907 = vadd.f32 %v1771, %v1787
        %v1908 = vadd.f32 %v1907, %v1803
        %v1909 = vadd.f32 %v1908, %v1819
        %v1910 = vadd.f32 %v1909, %v1835
        %v1911 = vadd.f32 %v1910, %v1851
        %v1912 = vadd.f32 %v1911, %v1867
        %v1913 = vadd.f32 %v1912, %v1883
        %1914 = vadd.xlane.f32.xlu0 %v1892
        %v1915 = vpop.xlane.xlu0 %1914
        %1916 = vadd.xlane.f32.xlu0 %v1899
        %v1917 = vpop.xlane.xlu0 %1916
        %1918 = vadd.xlane.f32.xlu0 %v1906
        %v1919 = vpop.xlane.xlu0 %1918
        %1920 = vadd.xlane.f32.xlu0 %v1913
        %v1921 = vpop.xlane.xlu0 %1920
        %v1922 = vmul.f32 %v1760, %v1760
        %v1923 = vmul.f32 %v1763, %v1763
        %v1924 = vmul.f32 %v1768, %v1768
        %v1925 = vmul.f32 %v1771, %v1771
        %v1926 = vmul.f32 %v1776, %v1776
        %v1927 = vmul.f32 %v1779, %v1779
        %v1928 = vmul.f32 %v1784, %v1784
        %v1929 = vmul.f32 %v1787, %v1787
        %v1930 = vmul.f32 %v1792, %v1792
        %v1931 = vmul.f32 %v1795, %v1795
        %v1932 = vmul.f32 %v1800, %v1800
        %v1933 = vmul.f32 %v1803, %v1803
        %v1934 = vmul.f32 %v1808, %v1808
        %v1935 = vmul.f32 %v1811, %v1811
        %v1936 = vmul.f32 %v1816, %v1816
        %v1937 = vmul.f32 %v1819, %v1819
        %v1938 = vmul.f32 %v1824, %v1824
        %v1939 = vmul.f32 %v1827, %v1827
        %v1940 = vmul.f32 %v1832, %v1832
        %v1941 = vmul.f32 %v1835, %v1835
        %v1942 = vmul.f32 %v1840, %v1840
        %v1943 = vmul.f32 %v1843, %v1843
        %v1944 = vmul.f32 %v1848, %v1848
        %v1945 = vmul.f32 %v1851, %v1851
        %v1946 = vmul.f32 %v1856, %v1856
        %v1947 = vmul.f32 %v1859, %v1859
        %v1948 = vmul.f32 %v1864, %v1864
        %v1949 = vmul.f32 %v1867, %v1867
        %v1950 = vmul.f32 %v1872, %v1872
        %v1951 = vmul.f32 %v1875, %v1875
        %v1952 = vmul.f32 %v1880, %v1880
        %v1953 = vmul.f32 %v1883, %v1883
        %v1954 = vadd.f32 %v1922, %v1926
        %v1955 = vadd.f32 %v1954, %v1930
        %v1956 = vadd.f32 %v1955, %v1934
        %v1957 = vadd.f32 %v1956, %v1938
        %v1958 = vadd.f32 %v1957, %v1942
        %v1959 = vadd.f32 %v1958, %v1946
        %v1960 = vadd.f32 %v1959, %v1950
        %v1961 = vadd.f32 %v1923, %v1927
        %v1962 = vadd.f32 %v1961, %v1931
        %v1963 = vadd.f32 %v1962, %v1935
        %v1964 = vadd.f32 %v1963, %v1939
        %v1965 = vadd.f32 %v1964, %v1943
        %v1966 = vadd.f32 %v1965, %v1947
        %v1967 = vadd.f32 %v1966, %v1951
        %v1968 = vadd.f32 %v1924, %v1928
        %v1969 = vadd.f32 %v1968, %v1932
        %v1970 = vadd.f32 %v1969, %v1936
        %v1971 = vadd.f32 %v1970, %v1940
        %v1972 = vadd.f32 %v1971, %v1944
        %v1973 = vadd.f32 %v1972, %v1948
        %v1974 = vadd.f32 %v1973, %v1952
        %v1975 = vadd.f32 %v1925, %v1929
        %v1976 = vadd.f32 %v1975, %v1933
        %v1977 = vadd.f32 %v1976, %v1937
        %v1978 = vadd.f32 %v1977, %v1941
        %v1979 = vadd.f32 %v1978, %v1945
        %v1980 = vadd.f32 %v1979, %v1949
        %v1981 = vadd.f32 %v1980, %v1953
        %1982 = vadd.xlane.f32.xlu0 %v1960
        %v1983 = vpop.xlane.xlu0 %1982
        %1984 = vadd.xlane.f32.xlu0 %v1967
        %v1985 = vpop.xlane.xlu0 %1984
        %1986 = vadd.xlane.f32.xlu0 %v1974
        %v1987 = vpop.xlane.xlu0 %1986
        %1988 = vadd.xlane.f32.xlu0 %v1981
        %v1989 = vpop.xlane.xlu0 %1988
        %v1990 = vmul.f32 %v1915, 0.0009765625
        %v1991 = vmul.f32 %v1917, 0.0009765625
        %v1992 = vmul.f32 %v1919, 0.0009765625
        %v1993 = vmul.f32 %v1921, 0.0009765625
        %v1994 = vmul.f32 %v1983, 0.0009765625
        %v1995 = vmul.f32 %v1985, 0.0009765625
        %v1996 = vmul.f32 %v1987, 0.0009765625
        %v1997 = vmul.f32 %v1989, 0.0009765625
        %v1998 = vmul.f32 %v1990, %v1990
        %v1999 = vmul.f32 %v1991, %v1991
        %v2000 = vmul.f32 %v1992, %v1992
        %v2001 = vmul.f32 %v1993, %v1993
        %v2002 = vsub.f32 %v1994, %v1998
        %v2003 = vsub.f32 %v1995, %v1999
        %v2004 = vsub.f32 %v1996, %v2000
        %v2005 = vsub.f32 %v1997, %v2001
        %v2006 = vmax.f32 %v2002, 0.0
        %v2007 = vmax.f32 %v2003, 0.0
        %v2008 = vmax.f32 %v2004, 0.0
        %v2009 = vmax.f32 %v2005, 0.0
        %v2010 = vadd.f32 %v2006, 1e-05
        %v2011 = vadd.f32 %v2007, 1e-05
        %v2012 = vadd.f32 %v2008, 1e-05
        %v2013 = vadd.f32 %v2009, 1e-05
        %v2014 = vrsqrt.pop %v2010
        %v2015 = vrsqrt.pop %v2011
        %v2016 = vrsqrt.pop %v2012
        %v2017 = vrsqrt.pop %v2013
        %v2018 = vmul.f32 %v2014, %v381
        %v2019 = vmul.f32 %v2015, %v382
        %v2020 = vmul.f32 %v2016, %v383
        %v2021 = vmul.f32 %v2017, %v384
        %v2022 = vmul.f32 %v1990, %v2018
        %v2023 = vmul.f32 %v1991, %v2019
        %v2024 = vmul.f32 %v1992, %v2020
        %v2025 = vmul.f32 %v1993, %v2021
        %2030 = vrot.lane.b32.xlu0 %v2022, 1
        %v2031 = vpop.permute.xlu0 %2030
        %2032 = vrot.lane.b32.xlu0 %v2023, 1
        %v2033 = vpop.permute.xlu0 %2032
        %2034 = vrot.lane.b32.xlu0 %v2024, 1
        %v2035 = vpop.permute.xlu0 %2034
        %2036 = vrot.lane.b32.xlu0 %v2025, 1
        %v2037 = vpop.permute.xlu0 %2036
        %v2042 = vsub.f32 %v381, %v2031
        %v2043 = vsub.f32 %v382, %v2033
        %v2044 = vsub.f32 %v383, %v2035
        %v2045 = vsub.f32 %v384, %v2037
        %2047 = vset.pattern.permute.xlu0 4
        %2048 = vperm.xlu0 %2047, %v2018
        %v2049 = vpop.permute.xlu0 %2048
        %2052 = vset.pattern.permute.xlu0 4
        %2053 = vperm.xlu0 %2052, %v2019
        %v2054 = vpop.permute.xlu0 %2053
        %2057 = vset.pattern.permute.xlu0 4
        %2058 = vperm.xlu0 %2057, %v2020
        %v2059 = vpop.permute.xlu0 %2058
        %2062 = vset.pattern.permute.xlu0 4
        %2063 = vperm.xlu0 %2062, %v2021
        %v2064 = vpop.permute.xlu0 %2063
        %v2066 = vmul.f32 %v1760, %v2049
        %v2067 = vmul.f32 %v1763, %v2054
        %v2068 = vmul.f32 %v1768, %v2059
        %v2069 = vmul.f32 %v1771, %v2064
        %v2070 = vmul.f32 %v1776, %v2049
        %v2071 = vmul.f32 %v1779, %v2054
        %v2072 = vmul.f32 %v1784, %v2059
        %v2073 = vmul.f32 %v1787, %v2064
        %v2074 = vmul.f32 %v1792, %v2049
        %v2075 = vmul.f32 %v1795, %v2054
        %v2076 = vmul.f32 %v1800, %v2059
        %v2077 = vmul.f32 %v1803, %v2064
        %v2078 = vmul.f32 %v1808, %v2049
        %v2079 = vmul.f32 %v1811, %v2054
        %v2080 = vmul.f32 %v1816, %v2059
        %v2081 = vmul.f32 %v1819, %v2064
        %v2082 = vmul.f32 %v1824, %v2049
        %v2083 = vmul.f32 %v1827, %v2054
        %v2084 = vmul.f32 %v1832, %v2059
        %v2085 = vmul.f32 %v1835, %v2064
        %v2086 = vmul.f32 %v1840, %v2049
        %v2087 = vmul.f32 %v1843, %v2054
        %v2088 = vmul.f32 %v1848, %v2059
        %v2089 = vmul.f32 %v1851, %v2064
        %v2090 = vmul.f32 %v1856, %v2049
        %v2091 = vmul.f32 %v1859, %v2054
        %v2092 = vmul.f32 %v1864, %v2059
        %v2093 = vmul.f32 %v1867, %v2064
        %v2094 = vmul.f32 %v1872, %v2049
        %v2095 = vmul.f32 %v1875, %v2054
        %v2096 = vmul.f32 %v1880, %v2059
        %v2097 = vmul.f32 %v1883, %v2064
        %2099 = vset.pattern.permute.xlu0 5
        %2100 = vperm.xlu0 %2099, %v2042
        %v2101 = vpop.permute.xlu0 %2100
        %2104 = vset.pattern.permute.xlu0 5
        %2105 = vperm.xlu0 %2104, %v2043
        %v2106 = vpop.permute.xlu0 %2105
        %2109 = vset.pattern.permute.xlu0 5
        %2110 = vperm.xlu0 %2109, %v2044
        %v2111 = vpop.permute.xlu0 %2110
        %2114 = vset.pattern.permute.xlu0 5
        %2115 = vperm.xlu0 %2114, %v2045
        %v2116 = vpop.permute.xlu0 %2115
        %v2118 = vadd.f32 %v2066, %v2101
        %v2119 = vadd.f32 %v2067, %v2106
        %v2120 = vadd.f32 %v2068, %v2111
        %v2121 = vadd.f32 %v2069, %v2116
        %v2122 = vadd.f32 %v2070, %v2101
        %v2123 = vadd.f32 %v2071, %v2106
        %v2124 = vadd.f32 %v2072, %v2111
        %v2125 = vadd.f32 %v2073, %v2116
        %v2126 = vadd.f32 %v2074, %v2101
        %v2127 = vadd.f32 %v2075, %v2106
        %v2128 = vadd.f32 %v2076, %v2111
        %v2129 = vadd.f32 %v2077, %v2116
        %v2130 = vadd.f32 %v2078, %v2101
        %v2131 = vadd.f32 %v2079, %v2106
        %v2132 = vadd.f32 %v2080, %v2111
        %v2133 = vadd.f32 %v2081, %v2116
        %v2134 = vadd.f32 %v2082, %v2101
        %v2135 = vadd.f32 %v2083, %v2106
        %v2136 = vadd.f32 %v2084, %v2111
        %v2137 = vadd.f32 %v2085, %v2116
        %v2138 = vadd.f32 %v2086, %v2101
        %v2139 = vadd.f32 %v2087, %v2106
        %v2140 = vadd.f32 %v2088, %v2111
        %v2141 = vadd.f32 %v2089, %v2116
        %v2142 = vadd.f32 %v2090, %v2101
        %v2143 = vadd.f32 %v2091, %v2106
        %v2144 = vadd.f32 %v2092, %v2111
        %v2145 = vadd.f32 %v2093, %v2116
        %v2146 = vadd.f32 %v2094, %v2101
        %v2147 = vadd.f32 %v2095, %v2106
        %v2148 = vadd.f32 %v2096, %v2111
        %v2149 = vadd.f32 %v2097, %v2116
        %v2150 = vadd.f32 %v2118, %v617
        %v2151 = vadd.f32 %v2119, %v618
        %v2152 = vadd.f32 %v2120, %v619
        %v2153 = vadd.f32 %v2121, %v620
        %v2154 = vadd.f32 %v2122, %v621
        %v2155 = vadd.f32 %v2123, %v622
        %v2156 = vadd.f32 %v2124, %v623
        %v2157 = vadd.f32 %v2125, %v624
        %v2158 = vadd.f32 %v2126, %v625
        %v2159 = vadd.f32 %v2127, %v626
        %v2160 = vadd.f32 %v2128, %v627
        %v2161 = vadd.f32 %v2129, %v628
        %v2162 = vadd.f32 %v2130, %v629
        %v2163 = vadd.f32 %v2131, %v630
        %v2164 = vadd.f32 %v2132, %v631
        %v2165 = vadd.f32 %v2133, %v632
        %v2166 = vadd.f32 %v2134, %v633
        %v2167 = vadd.f32 %v2135, %v634
        %v2168 = vadd.f32 %v2136, %v635
        %v2169 = vadd.f32 %v2137, %v636
        %v2170 = vadd.f32 %v2138, %v637
        %v2171 = vadd.f32 %v2139, %v638
        %v2172 = vadd.f32 %v2140, %v639
        %v2173 = vadd.f32 %v2141, %v640
        %v2174 = vadd.f32 %v2142, %v641
        %v2175 = vadd.f32 %v2143, %v642
        %v2176 = vadd.f32 %v2144, %v643
        %v2177 = vadd.f32 %v2145, %v644
        %v2178 = vadd.f32 %v2146, %v645
        %v2179 = vadd.f32 %v2147, %v646
        %v2180 = vadd.f32 %v2148, %v647
        %v2181 = vadd.f32 %v2149, %v648
        %vm2182 = vcmp.ge.f32.partialorder %v2150, 2.0
        %vm2183 = vcmp.ge.f32.partialorder %v2151, 2.0
        %vm2184 = vcmp.ge.f32.partialorder %v2152, 2.0
        %vm2185 = vcmp.ge.f32.partialorder %v2153, 2.0
        %vm2186 = vcmp.ge.f32.partialorder %v2154, 2.0
        %vm2187 = vcmp.ge.f32.partialorder %v2155, 2.0
        %vm2188 = vcmp.ge.f32.partialorder %v2156, 2.0
        %vm2189 = vcmp.ge.f32.partialorder %v2157, 2.0
        %vm2190 = vcmp.ge.f32.partialorder %v2158, 2.0
        %vm2191 = vcmp.ge.f32.partialorder %v2159, 2.0
        %vm2192 = vcmp.ge.f32.partialorder %v2160, 2.0
        %vm2193 = vcmp.ge.f32.partialorder %v2161, 2.0
        %vm2194 = vcmp.ge.f32.partialorder %v2162, 2.0
        %vm2195 = vcmp.ge.f32.partialorder %v2163, 2.0
        %vm2196 = vcmp.ge.f32.partialorder %v2164, 2.0
        %vm2197 = vcmp.ge.f32.partialorder %v2165, 2.0
        %vm2198 = vcmp.ge.f32.partialorder %v2166, 2.0
        %vm2199 = vcmp.ge.f32.partialorder %v2167, 2.0
        %vm2200 = vcmp.ge.f32.partialorder %v2168, 2.0
        %vm2201 = vcmp.ge.f32.partialorder %v2169, 2.0
        %vm2202 = vcmp.ge.f32.partialorder %v2170, 2.0
        %vm2203 = vcmp.ge.f32.partialorder %v2171, 2.0
        %vm2204 = vcmp.ge.f32.partialorder %v2172, 2.0
        %vm2205 = vcmp.ge.f32.partialorder %v2173, 2.0
        %vm2206 = vcmp.ge.f32.partialorder %v2174, 2.0
        %vm2207 = vcmp.ge.f32.partialorder %v2175, 2.0
        %vm2208 = vcmp.ge.f32.partialorder %v2176, 2.0
        %vm2209 = vcmp.ge.f32.partialorder %v2177, 2.0
        %vm2210 = vcmp.ge.f32.partialorder %v2178, 2.0
        %vm2211 = vcmp.ge.f32.partialorder %v2179, 2.0
        %vm2212 = vcmp.ge.f32.partialorder %v2180, 2.0
        %vm2213 = vcmp.ge.f32.partialorder %v2181, 2.0
        %v2214 = vsel %vm2182, 1, 0
        %v2215 = vsel %vm2183, 1, 0
        %v2216 = vsel %vm2184, 1, 0
        %v2217 = vsel %vm2185, 1, 0
        %v2218 = vsel %vm2186, 1, 0
        %v2219 = vsel %vm2187, 1, 0
        %v2220 = vsel %vm2188, 1, 0
        %v2221 = vsel %vm2189, 1, 0
        %v2222 = vsel %vm2190, 1, 0
        %v2223 = vsel %vm2191, 1, 0
        %v2224 = vsel %vm2192, 1, 0
        %v2225 = vsel %vm2193, 1, 0
        %v2226 = vsel %vm2194, 1, 0
        %v2227 = vsel %vm2195, 1, 0
        %v2228 = vsel %vm2196, 1, 0
        %v2229 = vsel %vm2197, 1, 0
        %v2230 = vsel %vm2198, 1, 0
        %v2231 = vsel %vm2199, 1, 0
        %v2232 = vsel %vm2200, 1, 0
        %v2233 = vsel %vm2201, 1, 0
        %v2234 = vsel %vm2202, 1, 0
        %v2235 = vsel %vm2203, 1, 0
        %v2236 = vsel %vm2204, 1, 0
        %v2237 = vsel %vm2205, 1, 0
        %v2238 = vsel %vm2206, 1, 0
        %v2239 = vsel %vm2207, 1, 0
        %v2240 = vsel %vm2208, 1, 0
        %v2241 = vsel %vm2209, 1, 0
        %v2242 = vsel %vm2210, 1, 0
        %v2243 = vsel %vm2211, 1, 0
        %v2244 = vsel %vm2212, 1, 0
        %v2245 = vsel %vm2213, 1, 0
        %v2246 = vcvt.s32.f32 %v2214
        %v2247 = vcvt.s32.f32 %v2215
        %v2248 = vcvt.s32.f32 %v2216
        %v2249 = vcvt.s32.f32 %v2217
        %v2250 = vcvt.s32.f32 %v2218
        %v2251 = vcvt.s32.f32 %v2219
        %v2252 = vcvt.s32.f32 %v2220
        %v2253 = vcvt.s32.f32 %v2221
        %v2254 = vcvt.s32.f32 %v2222
        %v2255 = vcvt.s32.f32 %v2223
        %v2256 = vcvt.s32.f32 %v2224
        %v2257 = vcvt.s32.f32 %v2225
        %v2258 = vcvt.s32.f32 %v2226
        %v2259 = vcvt.s32.f32 %v2227
        %v2260 = vcvt.s32.f32 %v2228
        %v2261 = vcvt.s32.f32 %v2229
        %v2262 = vcvt.s32.f32 %v2230
        %v2263 = vcvt.s32.f32 %v2231
        %v2264 = vcvt.s32.f32 %v2232
        %v2265 = vcvt.s32.f32 %v2233
        %v2266 = vcvt.s32.f32 %v2234
        %v2267 = vcvt.s32.f32 %v2235
        %v2268 = vcvt.s32.f32 %v2236
        %v2269 = vcvt.s32.f32 %v2237
        %v2270 = vcvt.s32.f32 %v2238
        %v2271 = vcvt.s32.f32 %v2239
        %v2272 = vcvt.s32.f32 %v2240
        %v2273 = vcvt.s32.f32 %v2241
        %v2274 = vcvt.s32.f32 %v2242
        %v2275 = vcvt.s32.f32 %v2243
        %v2276 = vcvt.s32.f32 %v2244
        %v2277 = vcvt.s32.f32 %v2245
        %v2278 = vpack.c.bf16 %v2247, %v2246
        %v2279 = vpack.c.bf16 %v2249, %v2248
        %v2280 = vpack.c.bf16 %v2251, %v2250
        %v2281 = vpack.c.bf16 %v2253, %v2252
        %v2282 = vpack.c.bf16 %v2255, %v2254
        %v2283 = vpack.c.bf16 %v2257, %v2256
        %v2284 = vpack.c.bf16 %v2259, %v2258
        %v2285 = vpack.c.bf16 %v2261, %v2260
        %v2286 = vpack.c.bf16 %v2263, %v2262
        %v2287 = vpack.c.bf16 %v2265, %v2264
        %v2288 = vpack.c.bf16 %v2267, %v2266
        %v2289 = vpack.c.bf16 %v2269, %v2268
        %v2290 = vpack.c.bf16 %v2271, %v2270
        %v2291 = vpack.c.bf16 %v2273, %v2272
        %v2292 = vpack.c.bf16 %v2275, %v2274
        %v2293 = vpack.c.bf16 %v2277, %v2276
        %v2310 = vunpack.c.l.b16 %v2278
        %v2311 = vunpack.c.h.b16 %v2278
        %v2312 = vunpack.c.l.b16 %v2279
        %v2313 = vunpack.c.h.b16 %v2279
        %v2314 = vunpack.c.l.b16 %v2280
        %v2315 = vunpack.c.h.b16 %v2280
        %v2316 = vunpack.c.l.b16 %v2281
        %v2317 = vunpack.c.h.b16 %v2281
        %v2318 = vunpack.c.l.b16 %v2282
        %v2319 = vunpack.c.h.b16 %v2282
        %v2320 = vunpack.c.l.b16 %v2283
        %v2321 = vunpack.c.h.b16 %v2283
        %v2322 = vunpack.c.l.b16 %v2284
        %v2323 = vunpack.c.h.b16 %v2284
        %v2324 = vunpack.c.l.b16 %v2285
        %v2325 = vunpack.c.h.b16 %v2285
        %v2326 = vunpack.c.l.b16 %v2286
        %v2327 = vunpack.c.h.b16 %v2286
        %v2328 = vunpack.c.l.b16 %v2287
        %v2329 = vunpack.c.h.b16 %v2287
        %v2330 = vunpack.c.l.b16 %v2288
        %v2331 = vunpack.c.h.b16 %v2288
        %v2332 = vunpack.c.l.b16 %v2289
        %v2333 = vunpack.c.h.b16 %v2289
        %v2334 = vunpack.c.l.b16 %v2290
        %v2335 = vunpack.c.h.b16 %v2290
        %v2336 = vunpack.c.l.b16 %v2291
        %v2337 = vunpack.c.h.b16 %v2291
        %v2338 = vunpack.c.l.b16 %v2292
        %v2339 = vunpack.c.h.b16 %v2292
        %v2340 = vunpack.c.l.b16 %v2293
        %v2341 = vunpack.c.h.b16 %v2293
        %v2342 = vpack.c.b16 %v2310, %v2310
        %v2343 = vpack.c.b16 %v2311, %v2311
        %v2344 = vpack.c.b16 %v2312, %v2312
        %v2345 = vpack.c.b16 %v2313, %v2313
        %v2346 = vpack.c.b16 %v2314, %v2314
        %v2347 = vpack.c.b16 %v2315, %v2315
        %v2348 = vpack.c.b16 %v2316, %v2316
        %v2349 = vpack.c.b16 %v2317, %v2317
        %v2350 = vpack.c.b16 %v2318, %v2318
        %v2351 = vpack.c.b16 %v2319, %v2319
        %v2352 = vpack.c.b16 %v2320, %v2320
        %v2353 = vpack.c.b16 %v2321, %v2321
        %v2354 = vpack.c.b16 %v2322, %v2322
        %v2355 = vpack.c.b16 %v2323, %v2323
        %v2356 = vpack.c.b16 %v2324, %v2324
        %v2357 = vpack.c.b16 %v2325, %v2325
        %v2358 = vpack.c.b16 %v2326, %v2326
        %v2359 = vpack.c.b16 %v2327, %v2327
        %v2360 = vpack.c.b16 %v2328, %v2328
        %v2361 = vpack.c.b16 %v2329, %v2329
        %v2362 = vpack.c.b16 %v2330, %v2330
        %v2363 = vpack.c.b16 %v2331, %v2331
        %v2364 = vpack.c.b16 %v2332, %v2332
        %v2365 = vpack.c.b16 %v2333, %v2333
        %v2366 = vpack.c.b16 %v2334, %v2334
        %v2367 = vpack.c.b16 %v2335, %v2335
        %v2368 = vpack.c.b16 %v2336, %v2336
        %v2369 = vpack.c.b16 %v2337, %v2337
        %v2370 = vpack.c.b16 %v2338, %v2338
        %v2371 = vpack.c.b16 %v2339, %v2339
        %v2372 = vpack.c.b16 %v2340, %v2340
        %v2373 = vpack.c.b16 %v2341, %v2341
        %2406 = vst [vmem:[%s339] sm:$0xf] %v2342
        %2407 = vst [vmem:[%s339 + $0x4] sm:$0xf] %v2343
        %2408 = vst [vmem:[%s339 + $0x8] sm:$0xf] %v2344
        %2409 = vst [vmem:[%s339 + $0xc] sm:$0xf] %v2345
        %2410 = vst [vmem:[%s339 + $0x10] sm:$0xf] %v2346
        %2411 = vst [vmem:[%s339 + $0x14] sm:$0xf] %v2347
        %2412 = vst [vmem:[%s339 + $0x18] sm:$0xf] %v2348
        %2413 = vst [vmem:[%s339 + $0x1c] sm:$0xf] %v2349
        %2414 = vst [vmem:[%s339 + $0x20] sm:$0xf] %v2350
        %2415 = vst [vmem:[%s339 + $0x24] sm:$0xf] %v2351
        %2416 = vst [vmem:[%s339 + $0x28] sm:$0xf] %v2352
        %2417 = vst [vmem:[%s339 + $0x2c] sm:$0xf] %v2353
        %2418 = vst [vmem:[%s339 + $0x30] sm:$0xf] %v2354
        %2419 = vst [vmem:[%s339 + $0x34] sm:$0xf] %v2355
        %2420 = vst [vmem:[%s339 + $0x38] sm:$0xf] %v2356
        %2421 = vst [vmem:[%s339 + $0x3c] sm:$0xf] %v2357
        %2422 = vst [vmem:[%s339 + $0x40] sm:$0xf] %v2358
        %2423 = vst [vmem:[%s339 + $0x44] sm:$0xf] %v2359
        %2424 = vst [vmem:[%s339 + $0x48] sm:$0xf] %v2360
        %2425 = vst [vmem:[%s339 + $0x4c] sm:$0xf] %v2361
        %2426 = vst [vmem:[%s339 + $0x50] sm:$0xf] %v2362
        %2427 = vst [vmem:[%s339 + $0x54] sm:$0xf] %v2363
        %2428 = vst [vmem:[%s339 + $0x58] sm:$0xf] %v2364
        %2429 = vst [vmem:[%s339 + $0x5c] sm:$0xf] %v2365
        %2430 = vst [vmem:[%s339 + $0x60] sm:$0xf] %v2366
        %2431 = vst [vmem:[%s339 + $0x64] sm:$0xf] %v2367
        %2432 = vst [vmem:[%s339 + $0x68] sm:$0xf] %v2368
        %2433 = vst [vmem:[%s339 + $0x6c] sm:$0xf] %v2369
        %2434 = vst [vmem:[%s339 + $0x70] sm:$0xf] %v2370
        %2435 = vst [vmem:[%s339 + $0x74] sm:$0xf] %v2371
        %2436 = vst [vmem:[%s339 + $0x78] sm:$0xf] %v2372
        %2437 = vst [vmem:[%s339 + $0x7c] sm:$0xf] %v2373
        %s2438 = sand.u32 %s168, 1
        %s2439 = scalar_lea.sflag [#allocation4], %s2438
        %s2440 = sand.u32 %s168, 1
        %s2441 = smul.addr %s2440, 128
        %s2442 = scalar_lea.vmem [#allocation8], %s2441
        // Predicated region
        $region57: #{tpu_custom_call.1} parent=43 // pred_check
          %p2443 = pneg %p178
        $region58: #{tpu_custom_call.1} parent=43 // pred_check_branch
          %2445 = sbr.rel (%p2443) target = $region60
        $region59: #{tpu_custom_call.1} parent=43 // pred_region
          #allocation12 [shape = 'u32[6]{0}', space=smem, size = 0x18, scoped, tag = 'DMA stride descriptor']
          %s2446 = smul.u32 4, %s24
          %s2448 = ssub.s32 2048, 2048
          %2449 = vsyncadd %s2439, %s2448
          %s2450 = smul.addr %s2446, 64
          %s2451 = scalar_lea.hbm %s6, %s2450
          %s2453 = sshll.u32 1, 14
          %s2454 = sxor.u32 4294967295, %s2453
          %s2457 = sshll.u32 7, 18
          %s2458 = sxor.u32 4294967295, %s2457
          %s2459 = sand.u32 0, %s2458
          %s2461 = sor.u32 %s2459, 0
          %s2463 = sshll.u32 3, 24
          %s2464 = sxor.u32 4294967295, %s2463
          %s2465 = sand.u32 %s2461, %s2464
          %s2467 = sor.u32 %s2465, 0
          %s2468 = sshll.u32 %s2442, 4
          %s2469 = int_to_ptr.vmem [resolvable:$true] %s2468
          %2475 = sst [smem:[#allocation12]] 256
          %s2476 = scalar_lea.smem [#allocation12], 1
          %2477 = sst [smem:[%s2476]] 512
          %s2478 = scalar_lea.smem [#allocation12], 2
          %2479 = sst [smem:[%s2478]] 4
          %s2480 = scalar_lea.smem [#allocation12], 3
          %2481 = sst [smem:[%s2480]] 64
          %s2482 = scalar_lea.smem [#allocation12], 4
          %2483 = sst [smem:[%s2482]] 64
          %s2484 = scalar_lea.smem [#allocation12], 5
          %2485 = sst [smem:[%s2484]] 4
          %2487 = dma.general %s2469, 2048, %s2451, %s2439, [#allocation11], [#allocation12], %s2467, 0
        $region60: #{tpu_custom_call.1} parent=43 // pred_fallthru
          _
      $region44: #{tpu_custom_call.1} parent=5 // pred_fallthru
        _
      %p2488 = scmp.le.s32.totalorder 2, %s19
      // Predicated region
      $region61: #{tpu_custom_call.1} parent=5 // pred_check
        %p2489 = pneg %p2488
      $region62: #{tpu_custom_call.1} parent=5 // pred_check_branch
        %2491 = sbr.rel (%p2489) target = $region64
      $region63: #{tpu_custom_call.1} parent=5 // pred_region
        %s2492 = ssub.s32 %s19, 2
        // Predicated region
        $region65: #{tpu_custom_call.1} parent=63 // pred_check
          %p2493 = pneg %p184
        $region66: #{tpu_custom_call.1} parent=63 // pred_check_branch
          %2495 = sbr.rel (%p2493) target = $region68
        $region67: #{tpu_custom_call.1} parent=63 // pred_region
          %s2496 = sand.u32 %s169, 1
          %s2497 = scalar_lea.sflag [#allocation4], %s2496
          %s2498 = sand.u32 %s169, 1
          %s2499 = smul.addr %s2498, 128
          %s2500 = scalar_lea.vmem [#allocation8], %s2499
          %2501 = dma.done %s2497, 2048
        $region68: #{tpu_custom_call.1} parent=63 // pred_fallthru
          _
      $region64: #{tpu_custom_call.1} parent=5 // pred_fallthru
        _
    $region6: #{tpu_custom_call.1} parent=1 // loop_footer
      %s23 = sadd.s32 1, %s19
    $region7: #{tpu_custom_call.1} parent=1 // loop_footer_branch
      %18 = sbr.rel target = $region3
    $region8: #{tpu_custom_call.1} parent=1 // loop_exit
      _
    %2502 = vsyncpa [#allocation3], 1
    %s2503 = scalar_lea.sflag [#allocation3], 1
    %2504 = vsyncpa %s2503, 1
    %2505 = vsyncpa [#allocation6], 1
    %2506 = vsyncpa [#allocation4], 1
    %s2507 = scalar_lea.sflag [#allocation4], 1
    %2508 = vsyncpa %s2507, 1

// kernel: tpu_custom_call.1
$region0: #{tpu_custom_call.1}
  #allocation0 [shape = 'u32[]', space=smem, size = 0x4, offset = 0x4, fixed_abs, tag = 'smem constant byte address 0x4 - core index']
  #allocation1 [shape = 'u32[144,128]{1,0:T(1,128)}', space=vmem, size = 0x12000, scoped, tag = 'internal scratch']
  #allocation9 [shape = 's32[]', space=sflag, size = 0x4, offset = 0, fixed_abs, tag = 'sflag constant byte address 0x0 - dummy sync flag']
  #allocation11 [shape = 's32[]', space=sflag, size = 0x4, offset = 0, fixed_abs, tag = 'sflag constant byte address 0x0 - dummy sync flag']
  %s0 = inlined_call_operand.hbm [shape: f32[8,64,128], index: 0, kind: input, shape index: {}]
  %s1 = inlined_call_operand.hbm [shape: bf16[128,256], index: 1, kind: input, shape index: {}]
  %s2 = inlined_call_operand.vmem [shape: f32[1,256], index: 2, kind: input, shape index: {}]
  %s3 = inlined_call_operand.hbm [shape: bf16[256,128], index: 3, kind: input, shape index: {}]
  %s4 = inlined_call_operand.vmem [shape: f32[1,128], index: 4, kind: input, shape index: {}]
  %s5 = inlined_call_operand.vmem [shape: f32[64,8], index: 5, kind: input, shape index: {}]
  %s6 = inlined_call_operand.hbm [shape: bf16[8,64,128], index: 6, kind: output, shape index: {}]
  %s7 = sld [smem:[#allocation0]]
  $region69: #{tpu_custom_call.1} parent=0
    _
  %s9 = ssub.s32 1, %s7
  %s10 = scalar_select 0, %s9, %s7
  $region1: #{tpu_custom_call.1} parent=0
    #allocation2 [shape = 'u8[262144]{0}', space=vmem, size = 0x40000, scoped, tag = 'input window, operand 0']
    #allocation3 [shape = 's32[2]{0}', space=sflag, size = 0x8, scoped, tag = 'scoped memory for tpu_custom_call.1']
    #allocation4 [shape = 's32[2]{0}', space=sflag, size = 0x8, scoped, tag = 'scoped memory for tpu_custom_call.1']
    #allocation5 [shape = 'u8[65536]{0}', space=vmem, size = 0x10000, scoped, tag = 'input window, operand 1, single buffered']
    #allocation6 [shape = 's32[1]{0}', space=sflag, size = 0x4, scoped, tag = 'scoped memory for tpu_custom_call.1']
    #allocation7 [shape = 'u8[65536]{0}', space=vmem, size = 0x10000, scoped, tag = 'input window, operand 3, single buffered']
    #allocation8 [shape = 'u8[131072]{0}', space=vmem, size = 0x20000, scoped, tag = 'output window, operand 0']
    %11 = vsyncpa [#allocation3], 0
    %s12 = scalar_lea.sflag [#allocation3], 1
    %13 = vsyncpa %s12, 0
    %14 = vsyncpa [#allocation6], 0
    %15 = vsyncpa [#allocation4], 0
    %s16 = scalar_lea.sflag [#allocation4], 1
    %17 = vsyncpa %s16, 0
    loop: start=0, step=1, limit=4
    $region2: #{tpu_custom_call.1} parent=1 // loop_pre_header
      _
    $region3: #{tpu_custom_call.1} parent=1 // loop_header
      %s19 = sphi 0, %s23
      %p20 = scmp.ge.s32.totalorder %s19, 4
      %s29 = sphi 0, %s31
      %s32 = sphi 0, %s29
      %s33 = sphi 0, %s32
      %s49 = sphi 0, %s33
      %s53 = sphi 0, %s53
      %s55 = sphi 0, %s53
      %s56 = sphi 0, %s55
      %s70 = sphi 0, %s56
      %s74 = sphi 0, %s74
      %s76 = sphi 0, %s74
      %s77 = sphi 0, %s76
      %s91 = sphi 0, %s77
      %s95 = sphi 0, %s95
      %s97 = sphi 0, %s95
      %s98 = sphi 0, %s97
      %s112 = sphi 0, %s98
      %s116 = sphi 0, %s116
      %s118 = sphi 0, %s116
      %s119 = sphi 0, %s118
      %s133 = sphi 0, %s119
      %s139 = sphi 0, %s141
      %s142 = sphi 0, %s139
      %s143 = sphi 0, %s142
      %s159 = sphi 0, %s143
      %s165 = sphi 0, %s167
      %s168 = sphi 0, %s165
      %s169 = sphi 0, %s168
      %s185 = sphi 0, %s169
    $region4: #{tpu_custom_call.1} parent=1 // loop_header_branch
      %22 = sbr.rel (%p20) target = $region8
    $region5: #{tpu_custom_call.1} parent=1 // loop_body
      %s24 = ssub.s32 %s19, 1
      %s25 = ssub.s32 %s19, 2
      %s26 = sadd.s32 %s19, 1
      %s27 = ssub.s32 %s19, %s26
      %p28 = scmp.eq.s32.totalorder %s27, 0
      %s30 = sadd.s32 %s29, 1
      %s31 = scalar_select %p28, %s29, %s30
      %p34 = pneg %p28
      %p35 = scmp.eq.s32.totalorder %s19, 1
      %p36 = por %p34, %p35
      %p37 = scmp.ne.s32.totalorder %s29, %s32
      %p38 = scmp.eq.s32.totalorder %s19, 0
      %p39 = por %p37, %p38
      %p40 = scmp.ne.s32.totalorder %s29, %s32
      %p41 = scmp.eq.s32.totalorder %s24, 1
      %p42 = por %p40, %p41
      %p43 = scmp.ne.s32.totalorder %s32, %s33
      %p44 = scmp.eq.s32.totalorder %s24, 0
      %p45 = por %p43, %p44
      %p46 = scmp.ne.s32.totalorder %s32, %s33
      %p47 = scmp.eq.s32.totalorder %s25, 1
      %p48 = por %p46, %p47
      %p50 = scmp.ne.s32.totalorder %s33, %s49
      %p51 = scmp.eq.s32.totalorder %s25, 0
      %p52 = por %p50, %p51
      %s54 = sadd.s32 %s53, 1
      %p57 = scmp.eq.s32.totalorder %s19, 1
      %p58 = scmp.ne.s32.totalorder %s53, %s55
      %p59 = scmp.eq.s32.totalorder %s19, 0
      %p60 = por %p58, %p59
      %p61 = scmp.ne.s32.totalorder %s53, %s55
      %p62 = scmp.eq.s32.totalorder %s24, 1
      %p63 = por %p61, %p62
      %p64 = scmp.ne.s32.totalorder %s55, %s56
      %p65 = scmp.eq.s32.totalorder %s24, 0
      %p66 = por %p64, %p65
      %p67 = scmp.ne.s32.totalorder %s55, %s56
      %p68 = scmp.eq.s32.totalorder %s25, 1
      %p69 = por %p67, %p68
      %p71 = scmp.ne.s32.totalorder %s56, %s70
      %p72 = scmp.eq.s32.totalorder %s25, 0
      %p73 = por %p71, %p72
      %s75 = sadd.s32 %s74, 1
      %p78 = scmp.eq.s32.totalorder %s19, 1
      %p79 = scmp.ne.s32.totalorder %s74, %s76
      %p80 = scmp.eq.s32.totalorder %s19, 0
      %p81 = por %p79, %p80
      %p82 = scmp.ne.s32.totalorder %s74, %s76
      %p83 = scmp.eq.s32.totalorder %s24, 1
      %p84 = por %p82, %p83
      %p85 = scmp.ne.s32.totalorder %s76, %s77
      %p86 = scmp.eq.s32.totalorder %s24, 0
      %p87 = por %p85, %p86
      %p88 = scmp.ne.s32.totalorder %s76, %s77
      %p89 = scmp.eq.s32.totalorder %s25, 1
      %p90 = por %p88, %p89
      %p92 = scmp.ne.s32.totalorder %s77, %s91
      %p93 = scmp.eq.s32.totalorder %s25, 0
      %p94 = por %p92, %p93
      %s96 = sadd.s32 %s95, 1
      %p99 = scmp.eq.s32.totalorder %s19, 1
      %p100 = scmp.ne.s32.totalorder %s95, %s97
      %p101 = scmp.eq.s32.totalorder %s19, 0
      %p102 = por %p100, %p101
      %p103 = scmp.ne.s32.totalorder %s95, %s97
      %p104 = scmp.eq.s32.totalorder %s24, 1
      %p105 = por %p103, %p104
      %p106 = scmp.ne.s32.totalorder %s97, %s98
      %p107 = scmp.eq.s32.totalorder %s24, 0
      %p108 = por %p106, %p107
      %p109 = scmp.ne.s32.totalorder %s97, %s98
      %p110 = scmp.eq.s32.totalorder %s25, 1
      %p111 = por %p109, %p110
      %p113 = scmp.ne.s32.totalorder %s98, %s112
      %p114 = scmp.eq.s32.totalorder %s25, 0
      %p115 = por %p113, %p114
      %s117 = sadd.s32 %s116, 1
      %p120 = scmp.eq.s32.totalorder %s19, 1
      %p121 = scmp.ne.s32.totalorder %s116, %s118
      %p122 = scmp.eq.s32.totalorder %s19, 0
      %p123 = por %p121, %p122
      %p124 = scmp.ne.s32.totalorder %s116, %s118
      %p125 = scmp.eq.s32.totalorder %s24, 1
      %p126 = por %p124, %p125
      %p127 = scmp.ne.s32.totalorder %s118, %s119
      %p128 = scmp.eq.s32.totalorder %s24, 0
      %p129 = por %p127, %p128
      %p130 = scmp.ne.s32.totalorder %s118, %s119
      %p131 = scmp.eq.s32.totalorder %s25, 1
      %p132 = por %p130, %p131
      %p134 = scmp.ne.s32.totalorder %s119, %s133
      %p135 = scmp.eq.s32.totalorder %s25, 0
      %p136 = por %p134, %p135
      %s137 = ssub.s32 %s19, %s26
      %p138 = scmp.eq.s32.totalorder %s137, 0
      %s140 = sadd.s32 %s139, 1
      %s141 = scalar_select %p138, %s139, %s140
      %p144 = pneg %p138
      %p145 = scmp.eq.s32.totalorder %s19, 1
      %p146 = por %p144, %p145
      %p147 = scmp.ne.s32.totalorder %s139, %s142
      %p148 = scmp.eq.s32.totalorder %s19, 0
      %p149 = por %p147, %p148
      %p150 = scmp.ne.s32.totalorder %s139, %s142
      %p151 = scmp.eq.s32.totalorder %s24, 1
      %p152 = por %p150, %p151
      %p153 = scmp.ne.s32.totalorder %s142, %s143
      %p154 = scmp.eq.s32.totalorder %s24, 0
      %p155 = por %p153, %p154
      %p156 = scmp.ne.s32.totalorder %s142, %s143
      %p157 = scmp.eq.s32.totalorder %s25, 1
      %p158 = por %p156, %p157
      %p160 = scmp.ne.s32.totalorder %s143, %s159
      %p161 = scmp.eq.s32.totalorder %s25, 0
      %p162 = por %p160, %p161
      %s163 = ssub.s32 %s19, %s26
      %p164 = scmp.eq.s32.totalorder %s163, 0
      %s166 = sadd.s32 %s165, 1
      %s167 = scalar_select %p164, %s165, %s166
      %p170 = pneg %p164
      %p171 = scmp.eq.s32.totalorder %s19, 1
      %p172 = por %p170, %p171
      %p173 = scmp.ne.s32.totalorder %s165, %s168
      %p174 = scmp.eq.s32.totalorder %s19, 0
      %p175 = por %p173, %p174
      %p176 = scmp.ne.s32.totalorder %s165, %s168
      %p177 = scmp.eq.s32.totalorder %s24, 1
      %p178 = por %p176, %p177
      %p179 = scmp.ne.s32.totalorder %s168, %s169
      %p180 = scmp.eq.s32.totalorder %s24, 0
      %p181 = por %p179, %p180
      %p182 = scmp.ne.s32.totalorder %s168, %s169
      %p183 = scmp.eq.s32.totalorder %s25, 1
      %p184 = por %p182, %p183
      %p186 = scmp.ne.s32.totalorder %s169, %s185
      %p187 = scmp.eq.s32.totalorder %s25, 0
      %p188 = por %p186, %p187
      %p189 = scmp.le.s32.totalorder 1, %s19
      %p190 = scmp.lt.s32.totalorder %s19, 3
      %p191 = pnand %p189, %p190
      %p192 = pneg %p191
      // Predicated region
      $region9: #{tpu_custom_call.1} parent=5 // pred_check
        _
      $region10: #{tpu_custom_call.1} parent=5 // pred_check_branch
        %194 = sbr.rel (%p191) target = $region12
      $region11: #{tpu_custom_call.1} parent=5 // pred_region
        %s195 = ssub.s32 %s19, 1
        // Predicated region
        $region13: #{tpu_custom_call.1} parent=11 // pred_check
          %p196 = pneg %p66
        $region14: #{tpu_custom_call.1} parent=11 // pred_check_branch
          %198 = sbr.rel (%p196) target = $region16
        $region15: #{tpu_custom_call.1} parent=11 // pred_region
          %s200 = ssub.s32 2048, 2048
          %201 = vsyncadd [#allocation6], %s200
          %s202 = sshll.u32 [#allocation5], 4
          %s203 = int_to_ptr.vmem [resolvable:$true] %s202
          %208 = dma.hbm_to_vmem [thread:$0]  %s1, 2048, %s203, [#allocation6], 128, 128, 8
        $region16: #{tpu_custom_call.1} parent=11 // pred_fallthru
          _
        // Predicated region
        $region17: #{tpu_custom_call.1} parent=11 // pred_check
          %p209 = pneg %p87
        $region18: #{tpu_custom_call.1} parent=11 // pred_check_branch
          %211 = sbr.rel (%p209) target = $region20
        $region19: #{tpu_custom_call.1} parent=11 // pred_region
          _
        $region20: #{tpu_custom_call.1} parent=11 // pred_fallthru
          _
        // Predicated region
        $region21: #{tpu_custom_call.1} parent=11 // pred_check
          %p212 = pneg %p108
        $region22: #{tpu_custom_call.1} parent=11 // pred_check_branch
          %214 = sbr.rel (%p212) target = $region24
        $region23: #{tpu_custom_call.1} parent=11 // pred_region
          %s216 = ssub.s32 2048, 2048
          %217 = vsyncadd [#allocation6], %s216
          %s218 = sshll.u32 [#allocation7], 4
          %s219 = int_to_ptr.vmem [resolvable:$true] %s218
          %224 = dma.hbm_to_vmem [thread:$0]  %s3, 2048, %s219, [#allocation6], 64, 64, 4
        $region24: #{tpu_custom_call.1} parent=11 // pred_fallthru
          _
        // Predicated region
        $region25: #{tpu_custom_call.1} parent=11 // pred_check
          %p225 = pneg %p129
        $region26: #{tpu_custom_call.1} parent=11 // pred_check_branch
          %227 = sbr.rel (%p225) target = $region28
        $region27: #{tpu_custom_call.1} parent=11 // pred_region
          _
        $region28: #{tpu_custom_call.1} parent=11 // pred_fallthru
          _
      $region12: #{tpu_custom_call.1} parent=5 // pred_fallthru
        _
      %p228 = scmp.lt.s32.totalorder %s19, 2
      // Predicated region
      $region29: #{tpu_custom_call.1} parent=5 // pred_check
        %p229 = pneg %p228
      $region30: #{tpu_custom_call.1} parent=5 // pred_check_branch
        %231 = sbr.rel (%p229) target = $region32
      $region31: #{tpu_custom_call.1} parent=5 // pred_region
        // Predicated region
        $region33: #{tpu_custom_call.1} parent=31 // pred_check
          %p232 = pneg %p39
        $region34: #{tpu_custom_call.1} parent=31 // pred_check_branch
          %234 = sbr.rel (%p232) target = $region36
        $region35: #{tpu_custom_call.1} parent=31 // pred_region
          #allocation10 [shape = 'u32[6]{0}', space=smem, size = 0x18, scoped, tag = 'DMA stride descriptor']
          %s235 = sand.u32 %s29, 1
          %s236 = scalar_lea.sflag [#allocation3], %s235
          %s237 = sand.u32 %s29, 1
          %s238 = smul.addr %s237, 256
          %s239 = scalar_lea.vmem [#allocation2], %s238
          %s240 = smul.u32 4, %s19
          %s242 = ssub.s32 4096, 4096
          %243 = vsyncadd %s236, %s242
          %s244 = smul.addr %s240, 128
          %s245 = scalar_lea.hbm %s0, %s244
          %s247 = sshll.u32 1, 14
          %s248 = sxor.u32 4294967295, %s247
          %s250 = sld [smem:[#allocation0]]
          %s251 = sadd.s32 2, %s250
          %s253 = sshll.u32 7, 26
          %s254 = sxor.u32 4294967295, %s253
          %s255 = sand.u32 0, %s254
          %s256 = sshll.u32 %s251, 26
          %s257 = sor.u32 %s255, %s256
          %s258 = sshll.u32 %s239, 4
          %s259 = int_to_ptr.vmem [resolvable:$true] %s258
          %265 = sst [smem:[#allocation10]] 1024
          %s266 = scalar_lea.smem [#allocation10], 1
          %267 = sst [smem:[%s266]] 512
          %s268 = scalar_lea.smem [#allocation10], 2
          %269 = sst [smem:[%s268]] 4
          %s270 = scalar_lea.smem [#allocation10], 3
          %271 = sst [smem:[%s270]] 128
          %s272 = scalar_lea.smem [#allocation10], 4
          %273 = sst [smem:[%s272]] 128
          %s274 = scalar_lea.smem [#allocation10], 5
          %275 = sst [smem:[%s274]] 8
          %277 = dma.general %s245, 4096, %s259, %s236, [#allocation9], [#allocation10], %s257, 0
        $region36: #{tpu_custom_call.1} parent=31 // pred_fallthru
          _
        // Predicated region
        $region37: #{tpu_custom_call.1} parent=31 // pred_check
          %p278 = pneg %p149
        $region38: #{tpu_custom_call.1} parent=31 // pred_check_branch
          %280 = sbr.rel (%p278) target = $region40
        $region39: #{tpu_custom_call.1} parent=31 // pred_region
          %s281 = smul.u32 4, %s19
          %p282 = scmp.lt.s32.totalorder %s281, 7
          %s283 = scalar_select %p282, %s281, 7
          %s284 = smul.addr %s283, 8
          %s285 = scalar_lea.vmem %s5, %s284
          %s286 = smul.u32 4, %s19
        $region40: #{tpu_custom_call.1} parent=31 // pred_fallthru
          _
      $region32: #{tpu_custom_call.1} parent=5 // pred_fallthru
        _
      %p287 = scmp.le.s32.totalorder 1, %s19
      %p288 = scmp.lt.s32.totalorder %s19, 3
      %p289 = pnand %p287, %p288
      %p290 = pneg %p289
      // Predicated region
      $region41: #{tpu_custom_call.1} parent=5 // pred_check
        _
      $region42: #{tpu_custom_call.1} parent=5 // pred_check_branch
        %292 = sbr.rel (%p289) target = $region44
      $region43: #{tpu_custom_call.1} parent=5 // pred_region
        %s293 = ssub.s32 %s19, 1
        %s294 = sand.u32 %s32, 1
        %s295 = scalar_lea.sflag [#allocation3], %s294
        %s296 = sand.u32 %s32, 1
        %s297 = smul.addr %s296, 256
        %s298 = scalar_lea.vmem [#allocation2], %s297
        // Predicated region
        $region45: #{tpu_custom_call.1} parent=43 // pred_check
          %p299 = pneg %p45
        $region46: #{tpu_custom_call.1} parent=43 // pred_check_branch
          %301 = sbr.rel (%p299) target = $region48
        $region47: #{tpu_custom_call.1} parent=43 // pred_region
          %302 = dma.done %s295, 4096
        $region48: #{tpu_custom_call.1} parent=43 // pred_fallthru
          _
        // Predicated region
        $region49: #{tpu_custom_call.1} parent=43 // pred_check
          %p303 = pneg %p66
        $region50: #{tpu_custom_call.1} parent=43 // pred_check_branch
          %305 = sbr.rel (%p303) target = $region52
        $region51: #{tpu_custom_call.1} parent=43 // pred_region
          %306 = dma.done [#allocation6], 2048
        $region52: #{tpu_custom_call.1} parent=43 // pred_fallthru
          _
        // Predicated region
        $region53: #{tpu_custom_call.1} parent=43 // pred_check
          %p307 = pneg %p108
        $region54: #{tpu_custom_call.1} parent=43 // pred_check_branch
          %309 = sbr.rel (%p307) target = $region56
        $region55: #{tpu_custom_call.1} parent=43 // pred_region
          %310 = dma.done [#allocation6], 2048
        $region56: #{tpu_custom_call.1} parent=43 // pred_fallthru
          _
        %s311 = sand.u32 %s32, 1
        %s312 = scalar_lea.sflag [#allocation3], %s311
        %s313 = sand.u32 %s32, 1
        %s314 = smul.addr %s313, 256
        %s315 = scalar_lea.vmem [#allocation2], %s314
        %p316 = pneg %p45
        %p317 = pneg %p42
        %p318 = pneg %p66
        %p319 = pneg %p63
        %p320 = pneg %p87
        %p321 = pneg %p84
        %p322 = pneg %p108
        %p323 = pneg %p105
        %p324 = pneg %p129
        %p325 = pneg %p126
        %s326 = smul.u32 4, %s24
        %p327 = scmp.lt.s32.totalorder %s326, 7
        %s328 = scalar_select %p327, %s326, 7
        %s329 = smul.addr %s328, 8
        %s330 = scalar_lea.vmem %s5, %s329
        %p331 = pneg %p155
        %p332 = pneg %p152
        %p333 = pneg %p181
        %p334 = pneg %p178
        %s335 = sand.u32 %s168, 1
        %s336 = scalar_lea.sflag [#allocation4], %s335
        %s337 = sand.u32 %s168, 1
        %s338 = smul.addr %s337, 128
        %s339 = scalar_lea.vmem [#allocation8], %s338
        %s340 = smul.u32 4, %s24
        %s341 = smul.u32 4, %s24
        %p342 = scmp.lt.s32.totalorder %s341, 7
        %s343 = scalar_select %p342, %s341, 7
        %s344 = smul.addr %s343, 8
        %s345 = scalar_lea.vmem %s5, %s344
        %s346 = smul.u32 4, %s24
        %s347 = smul.u32 4, %s24
        %v349 = vld [vmem:[%s298] sm:$0xff]
        %v350 = vld [vmem:[%s298 + $0x8] sm:$0xff]
        %v351 = vld [vmem:[%s298 + $0x10] sm:$0xff]
        %v352 = vld [vmem:[%s298 + $0x18] sm:$0xff]
        %v353 = vld [vmem:[%s298 + $0x20] sm:$0xff]
        %v354 = vld [vmem:[%s298 + $0x28] sm:$0xff]
        %v355 = vld [vmem:[%s298 + $0x30] sm:$0xff]
        %v356 = vld [vmem:[%s298 + $0x38] sm:$0xff]
        %v357 = vld [vmem:[%s298 + $0x40] sm:$0xff]
        %v358 = vld [vmem:[%s298 + $0x48] sm:$0xff]
        %v359 = vld [vmem:[%s298 + $0x50] sm:$0xff]
        %v360 = vld [vmem:[%s298 + $0x58] sm:$0xff]
        %v361 = vld [vmem:[%s298 + $0x60] sm:$0xff]
        %v362 = vld [vmem:[%s298 + $0x68] sm:$0xff]
        %v363 = vld [vmem:[%s298 + $0x70] sm:$0xff]
        %v364 = vld [vmem:[%s298 + $0x78] sm:$0xff]
        %v365 = vld [vmem:[%s298 + $0x80] sm:$0xff]
        %v366 = vld [vmem:[%s298 + $0x88] sm:$0xff]
        %v367 = vld [vmem:[%s298 + $0x90] sm:$0xff]
        %v368 = vld [vmem:[%s298 + $0x98] sm:$0xff]
        %v369 = vld [vmem:[%s298 + $0xa0] sm:$0xff]
        %v370 = vld [vmem:[%s298 + $0xa8] sm:$0xff]
        %v371 = vld [vmem:[%s298 + $0xb0] sm:$0xff]
        %v372 = vld [vmem:[%s298 + $0xb8] sm:$0xff]
        %v373 = vld [vmem:[%s298 + $0xc0] sm:$0xff]
        %v374 = vld [vmem:[%s298 + $0xc8] sm:$0xff]
        %v375 = vld [vmem:[%s298 + $0xd0] sm:$0xff]
        %v376 = vld [vmem:[%s298 + $0xd8] sm:$0xff]
        %v377 = vld [vmem:[%s298 + $0xe0] sm:$0xff]
        %v378 = vld [vmem:[%s298 + $0xe8] sm:$0xff]
        %v379 = vld [vmem:[%s298 + $0xf0] sm:$0xff]
        %v380 = vld [vmem:[%s298 + $0xf8] sm:$0xff]
        %v381 = vld [vmem:[%s345] sm:$0xff]
        %v382 = vld [vmem:[%s345 + $0x8] sm:$0xff]
        %v383 = vld [vmem:[%s345 + $0x10] sm:$0xff]
        %v384 = vld [vmem:[%s345 + $0x18] sm:$0xff]
        %v385 = vadd.f32 %v349, %v353
        %v386 = vadd.f32 %v385, %v357
        %v387 = vadd.f32 %v386, %v361
        %v388 = vadd.f32 %v387, %v365
        %v389 = vadd.f32 %v388, %v369
        %v390 = vadd.f32 %v389, %v373
        %v391 = vadd.f32 %v390, %v377
        %v392 = vadd.f32 %v350, %v354
        %v393 = vadd.f32 %v392, %v358
        %v394 = vadd.f32 %v393, %v362
        %v395 = vadd.f32 %v394, %v366
        %v396 = vadd.f32 %v395, %v370
        %v397 = vadd.f32 %v396, %v374
        %v398 = vadd.f32 %v397, %v378
        %v399 = vadd.f32 %v351, %v355
        %v400 = vadd.f32 %v399, %v359
        %v401 = vadd.f32 %v400, %v363
        %v402 = vadd.f32 %v401, %v367
        %v403 = vadd.f32 %v402, %v371
        %v404 = vadd.f32 %v403, %v375
        %v405 = vadd.f32 %v404, %v379
        %v406 = vadd.f32 %v352, %v356
        %v407 = vadd.f32 %v406, %v360
        %v408 = vadd.f32 %v407, %v364
        %v409 = vadd.f32 %v408, %v368
        %v410 = vadd.f32 %v409, %v372
        %v411 = vadd.f32 %v410, %v376
        %v412 = vadd.f32 %v411, %v380
        %413 = vadd.xlane.f32.xlu0 %v391
        %v414 = vpop.xlane.xlu0 %413
        %415 = vadd.xlane.f32.xlu0 %v398
        %v416 = vpop.xlane.xlu0 %415
        %417 = vadd.xlane.f32.xlu0 %v405
        %v418 = vpop.xlane.xlu0 %417
        %419 = vadd.xlane.f32.xlu0 %v412
        %v420 = vpop.xlane.xlu0 %419
        %v421 = vmul.f32 %v349, %v349
        %v422 = vmul.f32 %v350, %v350
        %v423 = vmul.f32 %v351, %v351
        %v424 = vmul.f32 %v352, %v352
        %v425 = vmul.f32 %v353, %v353
        %v426 = vmul.f32 %v354, %v354
        %v427 = vmul.f32 %v355, %v355
        %v428 = vmul.f32 %v356, %v356
        %v429 = vmul.f32 %v357, %v357
        %v430 = vmul.f32 %v358, %v358
        %v431 = vmul.f32 %v359, %v359
        %v432 = vmul.f32 %v360, %v360
        %v433 = vmul.f32 %v361, %v361
        %v434 = vmul.f32 %v362, %v362
        %v435 = vmul.f32 %v363, %v363
        %v436 = vmul.f32 %v364, %v364
        %v437 = vmul.f32 %v365, %v365
        %v438 = vmul.f32 %v366, %v366
        %v439 = vmul.f32 %v367, %v367
        %v440 = vmul.f32 %v368, %v368
        %v441 = vmul.f32 %v369, %v369
        %v442 = vmul.f32 %v370, %v370
        %v443 = vmul.f32 %v371, %v371
        %v444 = vmul.f32 %v372, %v372
        %v445 = vmul.f32 %v373, %v373
        %v446 = vmul.f32 %v374, %v374
        %v447 = vmul.f32 %v375, %v375
        %v448 = vmul.f32 %v376, %v376
        %v449 = vmul.f32 %v377, %v377
        %v450 = vmul.f32 %v378, %v378
        %v451 = vmul.f32 %v379, %v379
        %v452 = vmul.f32 %v380, %v380
        %v453 = vadd.f32 %v421, %v425
        %v454 = vadd.f32 %v453, %v429
        %v455 = vadd.f32 %v454, %v433
        %v456 = vadd.f32 %v455, %v437
        %v457 = vadd.f32 %v456, %v441
        %v458 = vadd.f32 %v457, %v445
        %v459 = vadd.f32 %v458, %v449
        %v460 = vadd.f32 %v422, %v426
        %v461 = vadd.f32 %v460, %v430
        %v462 = vadd.f32 %v461, %v434
        %v463 = vadd.f32 %v462, %v438
        %v464 = vadd.f32 %v463, %v442
        %v465 = vadd.f32 %v464, %v446
        %v466 = vadd.f32 %v465, %v450
        %v467 = vadd.f32 %v423, %v427
        %v468 = vadd.f32 %v467, %v431
        %v469 = vadd.f32 %v468, %v435
        %v470 = vadd.f32 %v469, %v439
        %v471 = vadd.f32 %v470, %v443
        %v472 = vadd.f32 %v471, %v447
        %v473 = vadd.f32 %v472, %v451
        %v474 = vadd.f32 %v424, %v428
        %v475 = vadd.f32 %v474, %v432
        %v476 = vadd.f32 %v475, %v436
        %v477 = vadd.f32 %v476, %v440
        %v478 = vadd.f32 %v477, %v444
        %v479 = vadd.f32 %v478, %v448
        %v480 = vadd.f32 %v479, %v452
        %481 = vadd.xlane.f32.xlu0 %v459
        %v482 = vpop.xlane.xlu0 %481
        %483 = vadd.xlane.f32.xlu0 %v466
        %v484 = vpop.xlane.xlu0 %483
        %485 = vadd.xlane.f32.xlu0 %v473
        %v486 = vpop.xlane.xlu0 %485
        %487 = vadd.xlane.f32.xlu0 %v480
        %v488 = vpop.xlane.xlu0 %487
        %v489 = vmul.f32 %v414, 0.0009765625
        %v490 = vmul.f32 %v416, 0.0009765625
        %v491 = vmul.f32 %v418, 0.0009765625
        %v492 = vmul.f32 %v420, 0.0009765625
        %v493 = vmul.f32 %v482, 0.0009765625
        %v494 = vmul.f32 %v484, 0.0009765625
        %v495 = vmul.f32 %v486, 0.0009765625
        %v496 = vmul.f32 %v488, 0.0009765625
        %v497 = vmul.f32 %v489, %v489
        %v498 = vmul.f32 %v490, %v490
        %v499 = vmul.f32 %v491, %v491
        %v500 = vmul.f32 %v492, %v492
        %v501 = vsub.f32 %v493, %v497
        %v502 = vsub.f32 %v494, %v498
        %v503 = vsub.f32 %v495, %v499
        %v504 = vsub.f32 %v496, %v500
        %v505 = vmax.f32 %v501, 0.0
        %v506 = vmax.f32 %v502, 0.0
        %v507 = vmax.f32 %v503, 0.0
        %v508 = vmax.f32 %v504, 0.0
        %v509 = vadd.f32 %v505, 1e-05
        %v510 = vadd.f32 %v506, 1e-05
        %v511 = vadd.f32 %v507, 1e-05
        %v512 = vadd.f32 %v508, 1e-05
        %v513 = vrsqrt.pop %v509
        %v514 = vrsqrt.pop %v510
        %v515 = vrsqrt.pop %v511
        %v516 = vrsqrt.pop %v512
        %v517 = vmul.f32 %v513, %v381
        %v518 = vmul.f32 %v514, %v382
        %v519 = vmul.f32 %v515, %v383
        %v520 = vmul.f32 %v516, %v384
        %v521 = vmul.f32 %v489, %v517
        %v522 = vmul.f32 %v490, %v518
        %v523 = vmul.f32 %v491, %v519
        %v524 = vmul.f32 %v492, %v520
        %529 = vrot.lane.b32.xlu0 %v521, 1
        %v530 = vpop.permute.xlu0 %529
        %531 = vrot.lane.b32.xlu0 %v522, 1
        %v532 = vpop.permute.xlu0 %531
        %533 = vrot.lane.b32.xlu0 %v523, 1
        %v534 = vpop.permute.xlu0 %533
        %535 = vrot.lane.b32.xlu0 %v524, 1
        %v536 = vpop.permute.xlu0 %535
        %v541 = vsub.f32 %v381, %v530
        %v542 = vsub.f32 %v382, %v532
        %v543 = vsub.f32 %v383, %v534
        %v544 = vsub.f32 %v384, %v536
        %546 = vset.pattern.permute.xlu0 0
        %547 = vperm.xlu0 %546, %v517
        %v548 = vpop.permute.xlu0 %547
        %551 = vset.pattern.permute.xlu0 0
        %552 = vperm.xlu0 %551, %v518
        %v553 = vpop.permute.xlu0 %552
        %556 = vset.pattern.permute.xlu0 0
        %557 = vperm.xlu0 %556, %v519
        %v558 = vpop.permute.xlu0 %557
        %561 = vset.pattern.permute.xlu0 0
        %562 = vperm.xlu0 %561, %v520
        %v563 = vpop.permute.xlu0 %562
        %v565 = vmul.f32 %v349, %v548
        %v566 = vmul.f32 %v350, %v553
        %v567 = vmul.f32 %v351, %v558
        %v568 = vmul.f32 %v352, %v563
        %v569 = vmul.f32 %v353, %v548
        %v570 = vmul.f32 %v354, %v553
        %v571 = vmul.f32 %v355, %v558
        %v572 = vmul.f32 %v356, %v563
        %v573 = vmul.f32 %v357, %v548
        %v574 = vmul.f32 %v358, %v553
        %v575 = vmul.f32 %v359, %v558
        %v576 = vmul.f32 %v360, %v563
        %v577 = vmul.f32 %v361, %v548
        %v578 = vmul.f32 %v362, %v553
        %v579 = vmul.f32 %v363, %v558
        %v580 = vmul.f32 %v364, %v563
        %v581 = vmul.f32 %v365, %v548
        %v582 = vmul.f32 %v366, %v553
        %v583 = vmul.f32 %v367, %v558
        %v584 = vmul.f32 %v368, %v563
        %v585 = vmul.f32 %v369, %v548
        %v586 = vmul.f32 %v370, %v553
        %v587 = vmul.f32 %v371, %v558
        %v588 = vmul.f32 %v372, %v563
        %v589 = vmul.f32 %v373, %v548
        %v590 = vmul.f32 %v374, %v553
        %v591 = vmul.f32 %v375, %v558
        %v592 = vmul.f32 %v376, %v563
        %v593 = vmul.f32 %v377, %v548
        %v594 = vmul.f32 %v378, %v553
        %v595 = vmul.f32 %v379, %v558
        %v596 = vmul.f32 %v380, %v563
        %598 = vset.pattern.permute.xlu0 1
        %599 = vperm.xlu0 %598, %v541
        %v600 = vpop.permute.xlu0 %599
        %603 = vset.pattern.permute.xlu0 1
        %604 = vperm.xlu0 %603, %v542
        %v605 = vpop.permute.xlu0 %604
        %608 = vset.pattern.permute.xlu0 1
        %609 = vperm.xlu0 %608, %v543
        %v610 = vpop.permute.xlu0 %609
        %613 = vset.pattern.permute.xlu0 1
        %614 = vperm.xlu0 %613, %v544
        %v615 = vpop.permute.xlu0 %614
        %v617 = vadd.f32 %v565, %v600
        %v618 = vadd.f32 %v566, %v605
        %v619 = vadd.f32 %v567, %v610
        %v620 = vadd.f32 %v568, %v615
        %v621 = vadd.f32 %v569, %v600
        %v622 = vadd.f32 %v570, %v605
        %v623 = vadd.f32 %v571, %v610
        %v624 = vadd.f32 %v572, %v615
        %v625 = vadd.f32 %v573, %v600
        %v626 = vadd.f32 %v574, %v605
        %v627 = vadd.f32 %v575, %v610
        %v628 = vadd.f32 %v576, %v615
        %v629 = vadd.f32 %v577, %v600
        %v630 = vadd.f32 %v578, %v605
        %v631 = vadd.f32 %v579, %v610
        %v632 = vadd.f32 %v580, %v615
        %v633 = vadd.f32 %v581, %v600
        %v634 = vadd.f32 %v582, %v605
        %v635 = vadd.f32 %v583, %v610
        %v636 = vadd.f32 %v584, %v615
        %v637 = vadd.f32 %v585, %v600
        %v638 = vadd.f32 %v586, %v605
        %v639 = vadd.f32 %v587, %v610
        %v640 = vadd.f32 %v588, %v615
        %v641 = vadd.f32 %v589, %v600
        %v642 = vadd.f32 %v590, %v605
        %v643 = vadd.f32 %v591, %v610
        %v644 = vadd.f32 %v592, %v615
        %v645 = vadd.f32 %v593, %v600
        %v646 = vadd.f32 %v594, %v605
        %v647 = vadd.f32 %v595, %v610
        %v648 = vadd.f32 %v596, %v615
        %v649 = vpack.c.bf16 %v350, %v349
        %v650 = vpack.c.bf16 %v352, %v351
        %v651 = vpack.c.bf16 %v354, %v353
        %v652 = vpack.c.bf16 %v356, %v355
        %v653 = vpack.c.bf16 %v358, %v357
        %v654 = vpack.c.bf16 %v360, %v359
        %v655 = vpack.c.bf16 %v362, %v361
        %v656 = vpack.c.bf16 %v364, %v363
        %v657 = vpack.c.bf16 %v366, %v365
        %v658 = vpack.c.bf16 %v368, %v367
        %v659 = vpack.c.bf16 %v370, %v369
        %v660 = vpack.c.bf16 %v372, %v371
        %v661 = vpack.c.bf16 %v374, %v373
        %v662 = vpack.c.bf16 %v376, %v375
        %v663 = vpack.c.bf16 %v378, %v377
        %v664 = vpack.c.bf16 %v380, %v379
        %v665 = vld [vmem:[#allocation5] sm:$0xff]
        %v666 = vld [vmem:[#allocation5 + $0x8] sm:$0xff]
        %v667 = vld [vmem:[#allocation5 + $0x10] sm:$0xff]
        %v668 = vld [vmem:[#allocation5 + $0x18] sm:$0xff]
        %v669 = vld [vmem:[#allocation5 + $0x20] sm:$0xff]
        %v670 = vld [vmem:[#allocation5 + $0x28] sm:$0xff]
        %v671 = vld [vmem:[#allocation5 + $0x30] sm:$0xff]
        %v672 = vld [vmem:[#allocation5 + $0x38] sm:$0xff]
        %v673 = vld [vmem:[#allocation5 + $0x40] sm:$0xff]
        %v674 = vld [vmem:[#allocation5 + $0x48] sm:$0xff]
        %v675 = vld [vmem:[#allocation5 + $0x50] sm:$0xff]
        %v676 = vld [vmem:[#allocation5 + $0x58] sm:$0xff]
        %v677 = vld [vmem:[#allocation5 + $0x60] sm:$0xff]
        %v678 = vld [vmem:[#allocation5 + $0x68] sm:$0xff]
        %v679 = vld [vmem:[#allocation5 + $0x70] sm:$0xff]
        %v680 = vld [vmem:[#allocation5 + $0x78] sm:$0xff]
        %v681 = vld [vmem:[%s2] sm:$0x3]
        %v683 = vlaneseq
        %v684 = vshrl.u32 %v683, 7
        %v685 = vsub.s32 0, %v684
        %v686 = vrot.slane %v681, %v685
        %v687 = vlaneseq
        %v688 = vshrl.u32 %v687, 7
        %v689 = vsub.s32 1, %v688
        %v690 = vrot.slane %v681, %v689
        %v709 = vunpack.c.l.b16 %v665
        %v710 = vunpack.c.h.b16 %v665
        %v711 = vunpack.c.l.b16 %v666
        %v712 = vunpack.c.h.b16 %v666
        %v713 = vunpack.c.l.b16 %v667
        %v714 = vunpack.c.h.b16 %v667
        %v715 = vunpack.c.l.b16 %v668
        %v716 = vunpack.c.h.b16 %v668
        %v717 = vunpack.c.l.b16 %v669
        %v718 = vunpack.c.h.b16 %v669
        %v719 = vunpack.c.l.b16 %v670
        %v720 = vunpack.c.h.b16 %v670
        %v721 = vunpack.c.l.b16 %v671
        %v722 = vunpack.c.h.b16 %v671
        %v723 = vunpack.c.l.b16 %v672
        %v724 = vunpack.c.h.b16 %v672
        %v725 = vunpack.c.l.b16 %v673
        %v726 = vunpack.c.h.b16 %v673
        %v727 = vunpack.c.l.b16 %v674
        %v728 = vunpack.c.h.b16 %v674
        %v729 = vunpack.c.l.b16 %v675
        %v730 = vunpack.c.h.b16 %v675
        %v731 = vunpack.c.l.b16 %v676
        %v732 = vunpack.c.h.b16 %v676
        %v733 = vunpack.c.l.b16 %v677
        %v734 = vunpack.c.h.b16 %v677
        %v735 = vunpack.c.l.b16 %v678
        %v736 = vunpack.c.h.b16 %v678
        %v737 = vunpack.c.l.b16 %v679
        %v738 = vunpack.c.h.b16 %v679
        %v739 = vunpack.c.l.b16 %v680
        %v740 = vunpack.c.h.b16 %v680
        %v741 = vpack.c.b16 %v711, %v709
        %v742 = vpack.c.b16 %v712, %v710
        %v743 = vpack.c.b16 %v715, %v713
        %v744 = vpack.c.b16 %v716, %v714
        %v745 = vpack.c.b16 %v719, %v717
        %v746 = vpack.c.b16 %v720, %v718
        %v747 = vpack.c.b16 %v723, %v721
        %v748 = vpack.c.b16 %v724, %v722
        %v749 = vpack.c.b16 %v727, %v725
        %v750 = vpack.c.b16 %v728, %v726
        %v751 = vpack.c.b16 %v731, %v729
        %v752 = vpack.c.b16 %v732, %v730
        %v753 = vpack.c.b16 %v735, %v733
        %v754 = vpack.c.b16 %v736, %v734
        %v755 = vpack.c.b16 %v739, %v737
        %v756 = vpack.c.b16 %v740, %v738
        %773 = vmatprep.subr.bf16.mxu0 %v742
        %774 = vmatpush1.bf16.msra.mxu0 %v741
        %775 = vmatprep.subr.bf16.mxu0 %v744
        %776 = vmatpush1.bf16.msra.mxu0 %v743
        %777 = vmatprep.subr.bf16.mxu0 %v746
        %778 = vmatpush1.bf16.msra.mxu0 %v745
        %779 = vmatprep.subr.bf16.mxu0 %v748
        %780 = vmatpush1.bf16.msra.mxu0 %v747
        %781 = vmatprep.subr.bf16.mxu0 %v750
        %782 = vmatpush1.bf16.msra.mxu0 %v749
        %783 = vmatprep.subr.bf16.mxu0 %v752
        %784 = vmatpush1.bf16.msra.mxu0 %v751
        %785 = vmatprep.subr.bf16.mxu0 %v754
        %786 = vmatpush1.bf16.msra.mxu0 %v753
        %787 = vmatprep.subr.bf16.mxu0 %v756
        %788 = vmatpush1.bf16.msra.mxu0 %v755
        %789 = vmatprep.subr.bf16.mxu0 0
        %790 = vmatpush1.bf16.msra.mxu0 0
        %791 = vmatprep.subr.bf16.mxu0 0
        %792 = vmatpush1.bf16.msra.mxu0 0
        %793 = vmatprep.subr.bf16.mxu0 0
        %794 = vmatpush1.bf16.msra.mxu0 0
        %795 = vmatprep.subr.bf16.mxu0 0
        %796 = vmatpush1.bf16.msra.mxu0 0
        %797 = vmatprep.subr.bf16.mxu0 0
        %798 = vmatpush1.bf16.msra.mxu0 0
        %799 = vmatprep.subr.bf16.mxu0 0
        %800 = vmatpush1.bf16.msra.mxu0 0
        %801 = vmatprep.subr.bf16.mxu0 0
        %802 = vmatpush1.bf16.msra.mxu0 0
        %803 = vmatprep.subr.bf16.mxu0 0
        %804 = vmatpush1.bf16.msra.mxu0 0
        %805 = vmatprep.mubr.bf16.mxu0 0
        %806 = vmatmul.mubr.bf16.gmra.mrb[0].mxu0 %v649
        %v807 = vpop.f32.mrb[0].mxu0
        %v808 = vadd.f32 %v686, %v807
        %v809 = vpop.f32.mrb[0].mxu0
        %v810 = vadd.f32 %v690, %v809
        %v811 = vpop.f32.mrb[0].mxu0
        %v812 = vadd.f32 %v686, %v811
        %v813 = vpop.f32.mrb[0].mxu0
        %v814 = vadd.f32 %v690, %v813
        %815 = vmatprep.mubr.bf16.mxu0 0
        %816 = vmatmul.mubr.bf16.gmra.mrb[0].mxu0 %v650
        %v817 = vpop.f32.mrb[0].mxu0
        %v818 = vadd.f32 %v686, %v817
        %v819 = vpop.f32.mrb[0].mxu0
        %v820 = vadd.f32 %v690, %v819
        %v821 = vpop.f32.mrb[0].mxu0
        %v822 = vadd.f32 %v686, %v821
        %v823 = vpop.f32.mrb[0].mxu0
        %v824 = vadd.f32 %v690, %v823
        %825 = vmatprep.mubr.bf16.mxu0 0
        %826 = vmatmul.mubr.bf16.gmra.mrb[0].mxu0 %v651
        %v827 = vpop.f32.mrb[0].mxu0
        %v828 = vadd.f32 %v686, %v827
        %v829 = vpop.f32.mrb[0].mxu0
        %v830 = vadd.f32 %v690, %v829
        %v831 = vpop.f32.mrb[0].mxu0
        %v832 = vadd.f32 %v686, %v831
        %v833 = vpop.f32.mrb[0].mxu0
        %v834 = vadd.f32 %v690, %v833
        %835 = vmatprep.mubr.bf16.mxu0 0
        %836 = vmatmul.mubr.bf16.gmra.mrb[0].mxu0 %v652
        %v837 = vpop.f32.mrb[0].mxu0
        %v838 = vadd.f32 %v686, %v837
        %v839 = vpop.f32.mrb[0].mxu0
        %v840 = vadd.f32 %v690, %v839
        %v841 = vpop.f32.mrb[0].mxu0
        %v842 = vadd.f32 %v686, %v841
        %v843 = vpop.f32.mrb[0].mxu0
        %v844 = vadd.f32 %v690, %v843
        %845 = vmatprep.mubr.bf16.mxu0 0
        %846 = vmatmul.mubr.bf16.gmra.mrb[0].mxu0 %v653
        %v847 = vpop.f32.mrb[0].mxu0
        %v848 = vadd.f32 %v686, %v847
        %v849 = vpop.f32.mrb[0].mxu0
        %v850 = vadd.f32 %v690, %v849
        %v851 = vpop.f32.mrb[0].mxu0
        %v852 = vadd.f32 %v686, %v851
        %v853 = vpop.f32.mrb[0].mxu0
        %v854 = vadd.f32 %v690, %v853
        %855 = vmatprep.mubr.bf16.mxu0 0
        %856 = vmatmul.mubr.bf16.gmra.mrb[0].mxu0 %v654
        %v857 = vpop.f32.mrb[0].mxu0
        %v858 = vadd.f32 %v686, %v857
        %v859 = vpop.f32.mrb[0].mxu0
        %v860 = vadd.f32 %v690, %v859
        %v861 = vpop.f32.mrb[0].mxu0
        %v862 = vadd.f32 %v686, %v861
        %v863 = vpop.f32.mrb[0].mxu0
        %v864 = vadd.f32 %v690, %v863
        %865 = vmatprep.mubr.bf16.mxu0 0
        %866 = vmatmul.mubr.bf16.gmra.mrb[0].mxu0 %v655
        %v867 = vpop.f32.mrb[0].mxu0
        %v868 = vadd.f32 %v686, %v867
        %v869 = vpop.f32.mrb[0].mxu0
        %v870 = vadd.f32 %v690, %v869
        %v871 = vpop.f32.mrb[0].mxu0
        %v872 = vadd.f32 %v686, %v871
        %v873 = vpop.f32.mrb[0].mxu0
        %v874 = vadd.f32 %v690, %v873
        %875 = vmatprep.mubr.bf16.mxu0 0
        %876 = vmatmul.mubr.bf16.gmra.mrb[0].mxu0 %v656
        %v877 = vpop.f32.mrb[0].mxu0
        %v878 = vadd.f32 %v686, %v877
        %v879 = vpop.f32.mrb[0].mxu0
        %v880 = vadd.f32 %v690, %v879
        %v881 = vpop.f32.mrb[0].mxu0
        %v882 = vadd.f32 %v686, %v881
        %v883 = vpop.f32.mrb[0].mxu0
        %v884 = vadd.f32 %v690, %v883
        %885 = vmatprep.mubr.bf16.mxu0 0
        %886 = vmatmul.mubr.bf16.gmra.mrb[0].mxu0 %v657
        %v887 = vpop.f32.mrb[0].mxu0
        %v888 = vadd.f32 %v686, %v887
        %v889 = vpop.f32.mrb[0].mxu0
        %v890 = vadd.f32 %v690, %v889
        %v891 = vpop.f32.mrb[0].mxu0
        %v892 = vadd.f32 %v686, %v891
        %v893 = vpop.f32.mrb[0].mxu0
        %v894 = vadd.f32 %v690, %v893
        %895 = vmatprep.mubr.bf16.mxu0 0
        %896 = vmatmul.mubr.bf16.gmra.mrb[0].mxu0 %v658
        %v897 = vpop.f32.mrb[0].mxu0
        %v898 = vadd.f32 %v686, %v897
        %v899 = vpop.f32.mrb[0].mxu0
        %v900 = vadd.f32 %v690, %v899
        %v901 = vpop.f32.mrb[0].mxu0
        %v902 = vadd.f32 %v686, %v901
        %v903 = vpop.f32.mrb[0].mxu0
        %v904 = vadd.f32 %v690, %v903
        %905 = vmatprep.mubr.bf16.mxu0 0
        %906 = vmatmul.mubr.bf16.gmra.mrb[0].mxu0 %v659
        %v907 = vpop.f32.mrb[0].mxu0
        %v908 = vadd.f32 %v686, %v907
        %v909 = vpop.f32.mrb[0].mxu0
        %v910 = vadd.f32 %v690, %v909
        %v911 = vpop.f32.mrb[0].mxu0
        %v912 = vadd.f32 %v686, %v911
        %v913 = vpop.f32.mrb[0].mxu0
        %v914 = vadd.f32 %v690, %v913
        %915 = vmatprep.mubr.bf16.mxu0 0
        %916 = vmatmul.mubr.bf16.gmra.mrb[0].mxu0 %v660
        %v917 = vpop.f32.mrb[0].mxu0
        %v918 = vadd.f32 %v686, %v917
        %v919 = vpop.f32.mrb[0].mxu0
        %v920 = vadd.f32 %v690, %v919
        %v921 = vpop.f32.mrb[0].mxu0
        %v922 = vadd.f32 %v686, %v921
        %v923 = vpop.f32.mrb[0].mxu0
        %v924 = vadd.f32 %v690, %v923
        %925 = vmatprep.mubr.bf16.mxu0 0
        %926 = vmatmul.mubr.bf16.gmra.mrb[0].mxu0 %v661
        %v927 = vpop.f32.mrb[0].mxu0
        %v928 = vadd.f32 %v686, %v927
        %v929 = vpop.f32.mrb[0].mxu0
        %v930 = vadd.f32 %v690, %v929
        %v931 = vpop.f32.mrb[0].mxu0
        %v932 = vadd.f32 %v686, %v931
        %v933 = vpop.f32.mrb[0].mxu0
        %v934 = vadd.f32 %v690, %v933
        %935 = vmatprep.mubr.bf16.mxu0 0
        %936 = vmatmul.mubr.bf16.gmra.mrb[0].mxu0 %v662
        %v937 = vpop.f32.mrb[0].mxu0
        %v938 = vadd.f32 %v686, %v937
        %v939 = vpop.f32.mrb[0].mxu0
        %v940 = vadd.f32 %v690, %v939
        %v941 = vpop.f32.mrb[0].mxu0
        %v942 = vadd.f32 %v686, %v941
        %v943 = vpop.f32.mrb[0].mxu0
        %v944 = vadd.f32 %v690, %v943
        %945 = vmatprep.mubr.bf16.mxu0 0
        %946 = vmatmul.mubr.bf16.gmra.mrb[0].mxu0 %v663
        %v947 = vpop.f32.mrb[0].mxu0
        %v948 = vadd.f32 %v686, %v947
        %v949 = vpop.f32.mrb[0].mxu0
        %v950 = vadd.f32 %v690, %v949
        %v951 = vpop.f32.mrb[0].mxu0
        %v952 = vadd.f32 %v686, %v951
        %v953 = vpop.f32.mrb[0].mxu0
        %v954 = vadd.f32 %v690, %v953
        %955 = vmatprep.mubr.bf16.mxu0 0
        %956 = vmatmul.mubr.bf16.gmra.mrb[0].mxu0 %v664
        %v957 = vpop.f32.mrb[0].mxu0
        %v958 = vadd.f32 %v686, %v957
        %v959 = vpop.f32.mrb[0].mxu0
        %v960 = vadd.f32 %v690, %v959
        %v961 = vpop.f32.mrb[0].mxu0
        %v962 = vadd.f32 %v686, %v961
        %v963 = vpop.f32.mrb[0].mxu0
        %v964 = vadd.f32 %v690, %v963
        %965 = vdwg.mxu0
        %v966 = vadd.f32 %v808, %v828
        %v967 = vadd.f32 %v966, %v848
        %v968 = vadd.f32 %v967, %v868
        %v969 = vadd.f32 %v968, %v888
        %v970 = vadd.f32 %v969, %v908
        %v971 = vadd.f32 %v970, %v928
        %v972 = vadd.f32 %v971, %v948
        %v973 = vadd.f32 %v810, %v830
        %v974 = vadd.f32 %v973, %v850
        %v975 = vadd.f32 %v974, %v870
        %v976 = vadd.f32 %v975, %v890
        %v977 = vadd.f32 %v976, %v910
        %v978 = vadd.f32 %v977, %v930
        %v979 = vadd.f32 %v978, %v950
        %v980 = vadd.f32 %v812, %v832
        %v981 = vadd.f32 %v980, %v852
        %v982 = vadd.f32 %v981, %v872
        %v983 = vadd.f32 %v982, %v892
        %v984 = vadd.f32 %v983, %v912
        %v985 = vadd.f32 %v984, %v932
        %v986 = vadd.f32 %v985, %v952
        %v987 = vadd.f32 %v814, %v834
        %v988 = vadd.f32 %v987, %v854
        %v989 = vadd.f32 %v988, %v874
        %v990 = vadd.f32 %v989, %v894
        %v991 = vadd.f32 %v990, %v914
        %v992 = vadd.f32 %v991, %v934
        %v993 = vadd.f32 %v992, %v954
        %v994 = vadd.f32 %v818, %v838
        %v995 = vadd.f32 %v994, %v858
        %v996 = vadd.f32 %v995, %v878
        %v997 = vadd.f32 %v996, %v898
        %v998 = vadd.f32 %v997, %v918
        %v999 = vadd.f32 %v998, %v938
        %v1000 = vadd.f32 %v999, %v958
        %v1001 = vadd.f32 %v820, %v840
        %v1002 = vadd.f32 %v1001, %v860
        %v1003 = vadd.f32 %v1002, %v880
        %v1004 = vadd.f32 %v1003, %v900
        %v1005 = vadd.f32 %v1004, %v920
        %v1006 = vadd.f32 %v1005, %v940
        %v1007 = vadd.f32 %v1006, %v960
        %v1008 = vadd.f32 %v822, %v842
        %v1009 = vadd.f32 %v1008, %v862
        %v1010 = vadd.f32 %v1009, %v882
        %v1011 = vadd.f32 %v1010, %v902
        %v1012 = vadd.f32 %v1011, %v922
        %v1013 = vadd.f32 %v1012, %v942
        %v1014 = vadd.f32 %v1013, %v962
        %v1015 = vadd.f32 %v824, %v844
        %v1016 = vadd.f32 %v1015, %v864
        %v1017 = vadd.f32 %v1016, %v884
        %v1018 = vadd.f32 %v1017, %v904
        %v1019 = vadd.f32 %v1018, %v924
        %v1020 = vadd.f32 %v1019, %v944
        %v1021 = vadd.f32 %v1020, %v964
        %v1022 = vadd.f32 %v972, %v979
        %1023 = vadd.xlane.f32.xlu0 %v1022
        %v1024 = vpop.xlane.xlu0 %1023
        %v1025 = vadd.f32 %v986, %v993
        %1026 = vadd.xlane.f32.xlu0 %v1025
        %v1027 = vpop.xlane.xlu0 %1026
        %v1028 = vadd.f32 %v1000, %v1007
        %1029 = vadd.xlane.f32.xlu0 %v1028
        %v1030 = vpop.xlane.xlu0 %1029
        %v1031 = vadd.f32 %v1014, %v1021
        %1032 = vadd.xlane.f32.xlu0 %v1031
        %v1033 = vpop.xlane.xlu0 %1032
        %v1034 = vmul.f32 %v808, %v808
        %v1035 = vmul.f32 %v810, %v810
        %v1036 = vmul.f32 %v812, %v812
        %v1037 = vmul.f32 %v814, %v814
        %v1038 = vmul.f32 %v818, %v818
        %v1039 = vmul.f32 %v820, %v820
        %v1040 = vmul.f32 %v822, %v822
        %v1041 = vmul.f32 %v824, %v824
        %v1042 = vmul.f32 %v828, %v828
        %v1043 = vmul.f32 %v830, %v830
        %v1044 = vmul.f32 %v832, %v832
        %v1045 = vmul.f32 %v834, %v834
        %v1046 = vmul.f32 %v838, %v838
        %v1047 = vmul.f32 %v840, %v840
        %v1048 = vmul.f32 %v842, %v842
        %v1049 = vmul.f32 %v844, %v844
        %v1050 = vmul.f32 %v848, %v848
        %v1051 = vmul.f32 %v850, %v850
        %v1052 = vmul.f32 %v852, %v852
        %v1053 = vmul.f32 %v854, %v854
        %v1054 = vmul.f32 %v858, %v858
        %v1055 = vmul.f32 %v860, %v860
        %v1056 = vmul.f32 %v862, %v862
        %v1057 = vmul.f32 %v864, %v864
        %v1058 = vmul.f32 %v868, %v868
        %v1059 = vmul.f32 %v870, %v870
        %v1060 = vmul.f32 %v872, %v872
        %v1061 = vmul.f32 %v874, %v874
        %v1062 = vmul.f32 %v878, %v878
        %v1063 = vmul.f32 %v880, %v880
        %v1064 = vmul.f32 %v882, %v882
        %v1065 = vmul.f32 %v884, %v884
        %v1066 = vmul.f32 %v888, %v888
        %v1067 = vmul.f32 %v890, %v890
        %v1068 = vmul.f32 %v892, %v892
        %v1069 = vmul.f32 %v894, %v894
        %v1070 = vmul.f32 %v898, %v898
        %v1071 = vmul.f32 %v900, %v900
        %v1072 = vmul.f32 %v902, %v902
        %v1073 = vmul.f32 %v904, %v904
        %v1074 = vmul.f32 %v908, %v908
        %v1075 = vmul.f32 %v910, %v910
        %v1076 = vmul.f32 %v912, %v912
        %v1077 = vmul.f32 %v914, %v914
        %v1078 = vmul.f32 %v918, %v918
        %v1079 = vmul.f32 %v920, %v920
        %v1080 = vmul.f32 %v922, %v922
        %v1081 = vmul.f32 %v924, %v924
        %v1082 = vmul.f32 %v928, %v928
        %v1083 = vmul.f32 %v930, %v930
        %v1084 = vmul.f32 %v932, %v932
        %v1085 = vmul.f32 %v934, %v934
        %v1086 = vmul.f32 %v938, %v938
        %v1087 = vmul.f32 %v940, %v940
        %v1088 = vmul.f32 %v942, %v942
        %v1089 = vmul.f32 %v944, %v944
        %v1090 = vmul.f32 %v948, %v948
        %v1091 = vmul.f32 %v950, %v950
        %v1092 = vmul.f32 %v952, %v952
        %v1093 = vmul.f32 %v954, %v954
        %v1094 = vmul.f32 %v958, %v958
        %v1095 = vmul.f32 %v960, %v960
        %v1096 = vmul.f32 %v962, %v962
        %v1097 = vmul.f32 %v964, %v964
        %v1098 = vadd.f32 %v1034, %v1042
        %v1099 = vadd.f32 %v1098, %v1050
        %v1100 = vadd.f32 %v1099, %v1058
        %v1101 = vadd.f32 %v1100, %v1066
        %v1102 = vadd.f32 %v1101, %v1074
        %v1103 = vadd.f32 %v1102, %v1082
        %v1104 = vadd.f32 %v1103, %v1090
        %v1105 = vadd.f32 %v1035, %v1043
        %v1106 = vadd.f32 %v1105, %v1051
        %v1107 = vadd.f32 %v1106, %v1059
        %v1108 = vadd.f32 %v1107, %v1067
        %v1109 = vadd.f32 %v1108, %v1075
        %v1110 = vadd.f32 %v1109, %v1083
        %v1111 = vadd.f32 %v1110, %v1091
        %v1112 = vadd.f32 %v1036, %v1044
        %v1113 = vadd.f32 %v1112, %v1052
        %v1114 = vadd.f32 %v1113, %v1060
        %v1115 = vadd.f32 %v1114, %v1068
        %v1116 = vadd.f32 %v1115, %v1076
        %v1117 = vadd.f32 %v1116, %v1084
        %v1118 = vadd.f32 %v1117, %v1092
        %v1119 = vadd.f32 %v1037, %v1045
        %v1120 = vadd.f32 %v1119, %v1053
        %v1121 = vadd.f32 %v1120, %v1061
        %v1122 = vadd.f32 %v1121, %v1069
        %v1123 = vadd.f32 %v1122, %v1077
        %v1124 = vadd.f32 %v1123, %v1085
        %v1125 = vadd.f32 %v1124, %v1093
        %v1126 = vadd.f32 %v1038, %v1046
        %v1127 = vadd.f32 %v1126, %v1054
        %v1128 = vadd.f32 %v1127, %v1062
        %v1129 = vadd.f32 %v1128, %v1070
        %v1130 = vadd.f32 %v1129, %v1078
        %v1131 = vadd.f32 %v1130, %v1086
        %v1132 = vadd.f32 %v1131, %v1094
        %v1133 = vadd.f32 %v1039, %v1047
        %v1134 = vadd.f32 %v1133, %v1055
        %v1135 = vadd.f32 %v1134, %v1063
        %v1136 = vadd.f32 %v1135, %v1071
        %v1137 = vadd.f32 %v1136, %v1079
        %v1138 = vadd.f32 %v1137, %v1087
        %v1139 = vadd.f32 %v1138, %v1095
        %v1140 = vadd.f32 %v1040, %v1048
        %v1141 = vadd.f32 %v1140, %v1056
        %v1142 = vadd.f32 %v1141, %v1064
        %v1143 = vadd.f32 %v1142, %v1072
        %v1144 = vadd.f32 %v1143, %v1080
        %v1145 = vadd.f32 %v1144, %v1088
        %v1146 = vadd.f32 %v1145, %v1096
        %v1147 = vadd.f32 %v1041, %v1049
        %v1148 = vadd.f32 %v1147, %v1057
        %v1149 = vadd.f32 %v1148, %v1065
        %v1150 = vadd.f32 %v1149, %v1073
        %v1151 = vadd.f32 %v1150, %v1081
        %v1152 = vadd.f32 %v1151, %v1089
        %v1153 = vadd.f32 %v1152, %v1097
        %v1154 = vadd.f32 %v1104, %v1111
        %1155 = vadd.xlane.f32.xlu0 %v1154
        %v1156 = vpop.xlane.xlu0 %1155
        %v1157 = vadd.f32 %v1118, %v1125
        %1158 = vadd.xlane.f32.xlu0 %v1157
        %v1159 = vpop.xlane.xlu0 %1158
        %v1160 = vadd.f32 %v1132, %v1139
        %1161 = vadd.xlane.f32.xlu0 %v1160
        %v1162 = vpop.xlane.xlu0 %1161
        %v1163 = vadd.f32 %v1146, %v1153
        %1164 = vadd.xlane.f32.xlu0 %v1163
        %v1165 = vpop.xlane.xlu0 %1164
        %v1166 = vmul.f32 %v1024, 0.00048828125
        %v1167 = vmul.f32 %v1027, 0.00048828125
        %v1168 = vmul.f32 %v1030, 0.00048828125
        %v1169 = vmul.f32 %v1033, 0.00048828125
        %v1170 = vmul.f32 %v1156, 0.00048828125
        %v1171 = vmul.f32 %v1159, 0.00048828125
        %v1172 = vmul.f32 %v1162, 0.00048828125
        %v1173 = vmul.f32 %v1165, 0.00048828125
        %v1174 = vmul.f32 %v1166, %v1166
        %v1175 = vmul.f32 %v1167, %v1167
        %v1176 = vmul.f32 %v1168, %v1168
        %v1177 = vmul.f32 %v1169, %v1169
        %v1178 = vsub.f32 %v1170, %v1174
        %v1179 = vsub.f32 %v1171, %v1175
        %v1180 = vsub.f32 %v1172, %v1176
        %v1181 = vsub.f32 %v1173, %v1177
        %v1182 = vmax.f32 %v1178, 0.0
        %v1183 = vmax.f32 %v1179, 0.0
        %v1184 = vmax.f32 %v1180, 0.0
        %v1185 = vmax.f32 %v1181, 0.0
        %v1186 = vadd.f32 %v1182, 1e-05
        %v1187 = vadd.f32 %v1183, 1e-05
        %v1188 = vadd.f32 %v1184, 1e-05
        %v1189 = vadd.f32 %v1185, 1e-05
        %v1190 = vrsqrt.pop %v1186
        %v1191 = vrsqrt.pop %v1187
        %v1192 = vrsqrt.pop %v1188
        %v1193 = vrsqrt.pop %v1189
        %v1194 = vmul.f32 %v1190, %v381
        %v1195 = vmul.f32 %v1191, %v382
        %v1196 = vmul.f32 %v1192, %v383
        %v1197 = vmul.f32 %v1193, %v384
        %v1198 = vmul.f32 %v1166, %v1194
        %v1199 = vmul.f32 %v1167, %v1195
        %v1200 = vmul.f32 %v1168, %v1196
        %v1201 = vmul.f32 %v1169, %v1197
        %1206 = vrot.lane.b32.xlu0 %v1198, 1
        %v1207 = vpop.permute.xlu0 %1206
        %1208 = vrot.lane.b32.xlu0 %v1199, 1
        %v1209 = vpop.permute.xlu0 %1208
        %1210 = vrot.lane.b32.xlu0 %v1200, 1
        %v1211 = vpop.permute.xlu0 %1210
        %1212 = vrot.lane.b32.xlu0 %v1201, 1
        %v1213 = vpop.permute.xlu0 %1212
        %v1218 = vsub.f32 %v381, %v1207
        %v1219 = vsub.f32 %v382, %v1209
        %v1220 = vsub.f32 %v383, %v1211
        %v1221 = vsub.f32 %v384, %v1213
        %vm1222 = vcmp.ge.f32.partialorder %v1194, 0.0
        %vm1223 = vcmp.ge.f32.partialorder %v1195, 0.0
        %vm1224 = vcmp.ge.f32.partialorder %v1196, 0.0
        %vm1225 = vcmp.ge.f32.partialorder %v1197, 0.0
        %v1226 = vsel %vm1222, 1.0, -1.0
        %v1227 = vsel %vm1223, 1.0, -1.0
        %v1228 = vsel %vm1224, 1.0, -1.0
        %v1229 = vsel %vm1225, 1.0, -1.0
        %v1230 = vsub.f32 2.0, %v1218
        %v1231 = vsub.f32 2.0, %v1219
        %v1232 = vsub.f32 2.0, %v1220
        %v1233 = vsub.f32 2.0, %v1221
        %v1234 = vand.u32 2147483647, %v1194
        %v1235 = vand.u32 2147483647, %v1195
        %v1236 = vand.u32 2147483647, %v1196
        %v1237 = vand.u32 2147483647, %v1197
        %1242 = vrot.lane.b32.xlu0 %v1234, 1
        %v1243 = vpop.permute.xlu0 %1242
        %1244 = vrot.lane.b32.xlu0 %v1235, 1
        %v1245 = vpop.permute.xlu0 %1244
        %1246 = vrot.lane.b32.xlu0 %v1236, 1
        %v1247 = vpop.permute.xlu0 %1246
        %1248 = vrot.lane.b32.xlu0 %v1237, 1
        %v1249 = vpop.permute.xlu0 %1248
        %v1254 = vrcp.pop %v1243
        %v1255 = vmul.f32 %v1230, %v1254
        %v1256 = vrcp.pop %v1245
        %v1257 = vmul.f32 %v1231, %v1256
        %v1258 = vrcp.pop %v1247
        %v1259 = vmul.f32 %v1232, %v1258
        %v1260 = vrcp.pop %v1249
        %v1261 = vmul.f32 %v1233, %v1260
        %1263 = vset.pattern.permute.xlu0 2
        %1264 = vperm.xlu0 %1263, %v1226
        %v1265 = vpop.permute.xlu0 %1264
        %1268 = vset.pattern.permute.xlu0 2
        %1269 = vperm.xlu0 %1268, %v1227
        %v1270 = vpop.permute.xlu0 %1269
        %1273 = vset.pattern.permute.xlu0 2
        %1274 = vperm.xlu0 %1273, %v1228
        %v1275 = vpop.permute.xlu0 %1274
        %1278 = vset.pattern.permute.xlu0 2
        %1279 = vperm.xlu0 %1278, %v1229
        %v1280 = vpop.permute.xlu0 %1279
        %v1282 = vmul.f32 %v808, %v1265
        %v1283 = vmul.f32 %v810, %v1265
        %v1284 = vmul.f32 %v812, %v1270
        %v1285 = vmul.f32 %v814, %v1270
        %v1286 = vmul.f32 %v818, %v1275
        %v1287 = vmul.f32 %v820, %v1275
        %v1288 = vmul.f32 %v822, %v1280
        %v1289 = vmul.f32 %v824, %v1280
        %v1290 = vmul.f32 %v828, %v1265
        %v1291 = vmul.f32 %v830, %v1265
        %v1292 = vmul.f32 %v832, %v1270
        %v1293 = vmul.f32 %v834, %v1270
        %v1294 = vmul.f32 %v838, %v1275
        %v1295 = vmul.f32 %v840, %v1275
        %v1296 = vmul.f32 %v842, %v1280
        %v1297 = vmul.f32 %v844, %v1280
        %v1298 = vmul.f32 %v848, %v1265
        %v1299 = vmul.f32 %v850, %v1265
        %v1300 = vmul.f32 %v852, %v1270
        %v1301 = vmul.f32 %v854, %v1270
        %v1302 = vmul.f32 %v858, %v1275
        %v1303 = vmul.f32 %v860, %v1275
        %v1304 = vmul.f32 %v862, %v1280
        %v1305 = vmul.f32 %v864, %v1280
        %v1306 = vmul.f32 %v868, %v1265
        %v1307 = vmul.f32 %v870, %v1265
        %v1308 = vmul.f32 %v872, %v1270
        %v1309 = vmul.f32 %v874, %v1270
        %v1310 = vmul.f32 %v878, %v1275
        %v1311 = vmul.f32 %v880, %v1275
        %v1312 = vmul.f32 %v882, %v1280
        %v1313 = vmul.f32 %v884, %v1280
        %v1314 = vmul.f32 %v888, %v1265
        %v1315 = vmul.f32 %v890, %v1265
        %v1316 = vmul.f32 %v892, %v1270
        %v1317 = vmul.f32 %v894, %v1270
        %v1318 = vmul.f32 %v898, %v1275
        %v1319 = vmul.f32 %v900, %v1275
        %v1320 = vmul.f32 %v902, %v1280
        %v1321 = vmul.f32 %v904, %v1280
        %v1322 = vmul.f32 %v908, %v1265
        %v1323 = vmul.f32 %v910, %v1265
        %v1324 = vmul.f32 %v912, %v1270
        %v1325 = vmul.f32 %v914, %v1270
        %v1326 = vmul.f32 %v918, %v1275
        %v1327 = vmul.f32 %v920, %v1275
        %v1328 = vmul.f32 %v922, %v1280
        %v1329 = vmul.f32 %v924, %v1280
        %v1330 = vmul.f32 %v928, %v1265
        %v1331 = vmul.f32 %v930, %v1265
        %v1332 = vmul.f32 %v932, %v1270
        %v1333 = vmul.f32 %v934, %v1270
        %v1334 = vmul.f32 %v938, %v1275
        %v1335 = vmul.f32 %v940, %v1275
        %v1336 = vmul.f32 %v942, %v1280
        %v1337 = vmul.f32 %v944, %v1280
        %v1338 = vmul.f32 %v948, %v1265
        %v1339 = vmul.f32 %v950, %v1265
        %v1340 = vmul.f32 %v952, %v1270
        %v1341 = vmul.f32 %v954, %v1270
        %v1342 = vmul.f32 %v958, %v1275
        %v1343 = vmul.f32 %v960, %v1275
        %v1344 = vmul.f32 %v962, %v1280
        %v1345 = vmul.f32 %v964, %v1280
        %1347 = vset.pattern.permute.xlu0 3
        %1348 = vperm.xlu0 %1347, %v1255
        %v1349 = vpop.permute.xlu0 %1348
        %1352 = vset.pattern.permute.xlu0 3
        %1353 = vperm.xlu0 %1352, %v1257
        %v1354 = vpop.permute.xlu0 %1353
        %1357 = vset.pattern.permute.xlu0 3
        %1358 = vperm.xlu0 %1357, %v1259
        %v1359 = vpop.permute.xlu0 %1358
        %1362 = vset.pattern.permute.xlu0 3
        %1363 = vperm.xlu0 %1362, %v1261
        %v1364 = vpop.permute.xlu0 %1363
        %vm1366 = vcmp.ge.f32.partialorder %v1282, %v1349
        %vm1367 = vcmp.ge.f32.partialorder %v1283, %v1349
        %vm1368 = vcmp.ge.f32.partialorder %v1284, %v1354
        %vm1369 = vcmp.ge.f32.partialorder %v1285, %v1354
        %vm1370 = vcmp.ge.f32.partialorder %v1286, %v1359
        %vm1371 = vcmp.ge.f32.partialorder %v1287, %v1359
        %vm1372 = vcmp.ge.f32.partialorder %v1288, %v1364
        %vm1373 = vcmp.ge.f32.partialorder %v1289, %v1364
        %vm1374 = vcmp.ge.f32.partialorder %v1290, %v1349
        %vm1375 = vcmp.ge.f32.partialorder %v1291, %v1349
        %vm1376 = vcmp.ge.f32.partialorder %v1292, %v1354
        %vm1377 = vcmp.ge.f32.partialorder %v1293, %v1354
        %vm1378 = vcmp.ge.f32.partialorder %v1294, %v1359
        %vm1379 = vcmp.ge.f32.partialorder %v1295, %v1359
        %vm1380 = vcmp.ge.f32.partialorder %v1296, %v1364
        %vm1381 = vcmp.ge.f32.partialorder %v1297, %v1364
        %vm1382 = vcmp.ge.f32.partialorder %v1298, %v1349
        %vm1383 = vcmp.ge.f32.partialorder %v1299, %v1349
        %vm1384 = vcmp.ge.f32.partialorder %v1300, %v1354
        %vm1385 = vcmp.ge.f32.partialorder %v1301, %v1354
        %vm1386 = vcmp.ge.f32.partialorder %v1302, %v1359
        %vm1387 = vcmp.ge.f32.partialorder %v1303, %v1359
        %vm1388 = vcmp.ge.f32.partialorder %v1304, %v1364
        %vm1389 = vcmp.ge.f32.partialorder %v1305, %v1364
        %vm1390 = vcmp.ge.f32.partialorder %v1306, %v1349
        %vm1391 = vcmp.ge.f32.partialorder %v1307, %v1349
        %vm1392 = vcmp.ge.f32.partialorder %v1308, %v1354
        %vm1393 = vcmp.ge.f32.partialorder %v1309, %v1354
        %vm1394 = vcmp.ge.f32.partialorder %v1310, %v1359
        %vm1395 = vcmp.ge.f32.partialorder %v1311, %v1359
        %vm1396 = vcmp.ge.f32.partialorder %v1312, %v1364
        %vm1397 = vcmp.ge.f32.partialorder %v1313, %v1364
        %vm1398 = vcmp.ge.f32.partialorder %v1314, %v1349
        %vm1399 = vcmp.ge.f32.partialorder %v1315, %v1349
        %vm1400 = vcmp.ge.f32.partialorder %v1316, %v1354
        %vm1401 = vcmp.ge.f32.partialorder %v1317, %v1354
        %vm1402 = vcmp.ge.f32.partialorder %v1318, %v1359
        %vm1403 = vcmp.ge.f32.partialorder %v1319, %v1359
        %vm1404 = vcmp.ge.f32.partialorder %v1320, %v1364
        %vm1405 = vcmp.ge.f32.partialorder %v1321, %v1364
        %vm1406 = vcmp.ge.f32.partialorder %v1322, %v1349
        %vm1407 = vcmp.ge.f32.partialorder %v1323, %v1349
        %vm1408 = vcmp.ge.f32.partialorder %v1324, %v1354
        %vm1409 = vcmp.ge.f32.partialorder %v1325, %v1354
        %vm1410 = vcmp.ge.f32.partialorder %v1326, %v1359
        %vm1411 = vcmp.ge.f32.partialorder %v1327, %v1359
        %vm1412 = vcmp.ge.f32.partialorder %v1328, %v1364
        %vm1413 = vcmp.ge.f32.partialorder %v1329, %v1364
        %vm1414 = vcmp.ge.f32.partialorder %v1330, %v1349
        %vm1415 = vcmp.ge.f32.partialorder %v1331, %v1349
        %vm1416 = vcmp.ge.f32.partialorder %v1332, %v1354
        %vm1417 = vcmp.ge.f32.partialorder %v1333, %v1354
        %vm1418 = vcmp.ge.f32.partialorder %v1334, %v1359
        %vm1419 = vcmp.ge.f32.partialorder %v1335, %v1359
        %vm1420 = vcmp.ge.f32.partialorder %v1336, %v1364
        %vm1421 = vcmp.ge.f32.partialorder %v1337, %v1364
        %vm1422 = vcmp.ge.f32.partialorder %v1338, %v1349
        %vm1423 = vcmp.ge.f32.partialorder %v1339, %v1349
        %vm1424 = vcmp.ge.f32.partialorder %v1340, %v1354
        %vm1425 = vcmp.ge.f32.partialorder %v1341, %v1354
        %vm1426 = vcmp.ge.f32.partialorder %v1342, %v1359
        %vm1427 = vcmp.ge.f32.partialorder %v1343, %v1359
        %vm1428 = vcmp.ge.f32.partialorder %v1344, %v1364
        %vm1429 = vcmp.ge.f32.partialorder %v1345, %v1364
        %v1430 = vsel %vm1366, 1, 0
        %v1431 = vsel %vm1367, 1, 0
        %v1432 = vsel %vm1368, 1, 0
        %v1433 = vsel %vm1369, 1, 0
        %v1434 = vsel %vm1370, 1, 0
        %v1435 = vsel %vm1371, 1, 0
        %v1436 = vsel %vm1372, 1, 0
        %v1437 = vsel %vm1373, 1, 0
        %v1438 = vsel %vm1374, 1, 0
        %v1439 = vsel %vm1375, 1, 0
        %v1440 = vsel %vm1376, 1, 0
        %v1441 = vsel %vm1377, 1, 0
        %v1442 = vsel %vm1378, 1, 0
        %v1443 = vsel %vm1379, 1, 0
        %v1444 = vsel %vm1380, 1, 0
        %v1445 = vsel %vm1381, 1, 0
        %v1446 = vsel %vm1382, 1, 0
        %v1447 = vsel %vm1383, 1, 0
        %v1448 = vsel %vm1384, 1, 0
        %v1449 = vsel %vm1385, 1, 0
        %v1450 = vsel %vm1386, 1, 0
        %v1451 = vsel %vm1387, 1, 0
        %v1452 = vsel %vm1388, 1, 0
        %v1453 = vsel %vm1389, 1, 0
        %v1454 = vsel %vm1390, 1, 0
        %v1455 = vsel %vm1391, 1, 0
        %v1456 = vsel %vm1392, 1, 0
        %v1457 = vsel %vm1393, 1, 0
        %v1458 = vsel %vm1394, 1, 0
        %v1459 = vsel %vm1395, 1, 0
        %v1460 = vsel %vm1396, 1, 0
        %v1461 = vsel %vm1397, 1, 0
        %v1462 = vsel %vm1398, 1, 0
        %v1463 = vsel %vm1399, 1, 0
        %v1464 = vsel %vm1400, 1, 0
        %v1465 = vsel %vm1401, 1, 0
        %v1466 = vsel %vm1402, 1, 0
        %v1467 = vsel %vm1403, 1, 0
        %v1468 = vsel %vm1404, 1, 0
        %v1469 = vsel %vm1405, 1, 0
        %v1470 = vsel %vm1406, 1, 0
        %v1471 = vsel %vm1407, 1, 0
        %v1472 = vsel %vm1408, 1, 0
        %v1473 = vsel %vm1409, 1, 0
        %v1474 = vsel %vm1410, 1, 0
        %v1475 = vsel %vm1411, 1, 0
        %v1476 = vsel %vm1412, 1, 0
        %v1477 = vsel %vm1413, 1, 0
        %v1478 = vsel %vm1414, 1, 0
        %v1479 = vsel %vm1415, 1, 0
        %v1480 = vsel %vm1416, 1, 0
        %v1481 = vsel %vm1417, 1, 0
        %v1482 = vsel %vm1418, 1, 0
        %v1483 = vsel %vm1419, 1, 0
        %v1484 = vsel %vm1420, 1, 0
        %v1485 = vsel %vm1421, 1, 0
        %v1486 = vsel %vm1422, 1, 0
        %v1487 = vsel %vm1423, 1, 0
        %v1488 = vsel %vm1424, 1, 0
        %v1489 = vsel %vm1425, 1, 0
        %v1490 = vsel %vm1426, 1, 0
        %v1491 = vsel %vm1427, 1, 0
        %v1492 = vsel %vm1428, 1, 0
        %v1493 = vsel %vm1429, 1, 0
        %v1494 = vcvt.s32.f32 %v1430
        %v1495 = vcvt.s32.f32 %v1431
        %v1496 = vcvt.s32.f32 %v1432
        %v1497 = vcvt.s32.f32 %v1433
        %v1498 = vcvt.s32.f32 %v1434
        %v1499 = vcvt.s32.f32 %v1435
        %v1500 = vcvt.s32.f32 %v1436
        %v1501 = vcvt.s32.f32 %v1437
        %v1502 = vcvt.s32.f32 %v1438
        %v1503 = vcvt.s32.f32 %v1439
        %v1504 = vcvt.s32.f32 %v1440
        %v1505 = vcvt.s32.f32 %v1441
        %v1506 = vcvt.s32.f32 %v1442
        %v1507 = vcvt.s32.f32 %v1443
        %v1508 = vcvt.s32.f32 %v1444
        %v1509 = vcvt.s32.f32 %v1445
        %v1510 = vcvt.s32.f32 %v1446
        %v1511 = vcvt.s32.f32 %v1447
        %v1512 = vcvt.s32.f32 %v1448
        %v1513 = vcvt.s32.f32 %v1449
        %v1514 = vcvt.s32.f32 %v1450
        %v1515 = vcvt.s32.f32 %v1451
        %v1516 = vcvt.s32.f32 %v1452
        %v1517 = vcvt.s32.f32 %v1453
        %v1518 = vcvt.s32.f32 %v1454
        %v1519 = vcvt.s32.f32 %v1455
        %v1520 = vcvt.s32.f32 %v1456
        %v1521 = vcvt.s32.f32 %v1457
        %v1522 = vcvt.s32.f32 %v1458
        %v1523 = vcvt.s32.f32 %v1459
        %v1524 = vcvt.s32.f32 %v1460
        %v1525 = vcvt.s32.f32 %v1461
        %v1526 = vcvt.s32.f32 %v1462
        %v1527 = vcvt.s32.f32 %v1463
        %v1528 = vcvt.s32.f32 %v1464
        %v1529 = vcvt.s32.f32 %v1465
        %v1530 = vcvt.s32.f32 %v1466
        %v1531 = vcvt.s32.f32 %v1467
        %v1532 = vcvt.s32.f32 %v1468
        %v1533 = vcvt.s32.f32 %v1469
        %v1534 = vcvt.s32.f32 %v1470
        %v1535 = vcvt.s32.f32 %v1471
        %v1536 = vcvt.s32.f32 %v1472
        %v1537 = vcvt.s32.f32 %v1473
        %v1538 = vcvt.s32.f32 %v1474
        %v1539 = vcvt.s32.f32 %v1475
        %v1540 = vcvt.s32.f32 %v1476
        %v1541 = vcvt.s32.f32 %v1477
        %v1542 = vcvt.s32.f32 %v1478
        %v1543 = vcvt.s32.f32 %v1479
        %v1544 = vcvt.s32.f32 %v1480
        %v1545 = vcvt.s32.f32 %v1481
        %v1546 = vcvt.s32.f32 %v1482
        %v1547 = vcvt.s32.f32 %v1483
        %v1548 = vcvt.s32.f32 %v1484
        %v1549 = vcvt.s32.f32 %v1485
        %v1550 = vcvt.s32.f32 %v1486
        %v1551 = vcvt.s32.f32 %v1487
        %v1552 = vcvt.s32.f32 %v1488
        %v1553 = vcvt.s32.f32 %v1489
        %v1554 = vcvt.s32.f32 %v1490
        %v1555 = vcvt.s32.f32 %v1491
        %v1556 = vcvt.s32.f32 %v1492
        %v1557 = vcvt.s32.f32 %v1493
        %v1558 = vpack.c.bf16 %v1496, %v1494
        %v1559 = vpack.c.bf16 %v1497, %v1495
        %v1560 = vpack.c.bf16 %v1500, %v1498
        %v1561 = vpack.c.bf16 %v1501, %v1499
        %v1562 = vpack.c.bf16 %v1504, %v1502
        %v1563 = vpack.c.bf16 %v1505, %v1503
        %v1564 = vpack.c.bf16 %v1508, %v1506
        %v1565 = vpack.c.bf16 %v1509, %v1507
        %v1566 = vpack.c.bf16 %v1512, %v1510
        %v1567 = vpack.c.bf16 %v1513, %v1511
        %v1568 = vpack.c.bf16 %v1516, %v1514
        %v1569 = vpack.c.bf16 %v1517, %v1515
        %v1570 = vpack.c.bf16 %v1520, %v1518
        %v1571 = vpack.c.bf16 %v1521, %v1519
        %v1572 = vpack.c.bf16 %v1524, %v1522
        %v1573 = vpack.c.bf16 %v1525, %v1523
        %v1574 = vpack.c.bf16 %v1528, %v1526
        %v1575 = vpack.c.bf16 %v1529, %v1527
        %v1576 = vpack.c.bf16 %v1532, %v1530
        %v1577 = vpack.c.bf16 %v1533, %v1531
        %v1578 = vpack.c.bf16 %v1536, %v1534
        %v1579 = vpack.c.bf16 %v1537, %v1535
        %v1580 = vpack.c.bf16 %v1540, %v1538
        %v1581 = vpack.c.bf16 %v1541, %v1539
        %v1582 = vpack.c.bf16 %v1544, %v1542
        %v1583 = vpack.c.bf16 %v1545, %v1543
        %v1584 = vpack.c.bf16 %v1548, %v1546
        %v1585 = vpack.c.bf16 %v1549, %v1547
        %v1586 = vpack.c.bf16 %v1552, %v1550
        %v1587 = vpack.c.bf16 %v1553, %v1551
        %v1588 = vpack.c.bf16 %v1556, %v1554
        %v1589 = vpack.c.bf16 %v1557, %v1555
        %v1590 = vld [vmem:[#allocation7] sm:$0xf]
        %v1591 = vld [vmem:[#allocation7 + $0x4] sm:$0xf]
        %v1592 = vld [vmem:[#allocation7 + $0x8] sm:$0xf]
        %v1593 = vld [vmem:[#allocation7 + $0xc] sm:$0xf]
        %v1594 = vld [vmem:[#allocation7 + $0x10] sm:$0xf]
        %v1595 = vld [vmem:[#allocation7 + $0x14] sm:$0xf]
        %v1596 = vld [vmem:[#allocation7 + $0x18] sm:$0xf]
        %v1597 = vld [vmem:[#allocation7 + $0x1c] sm:$0xf]
        %v1598 = vld [vmem:[#allocation7 + $0x20] sm:$0xf]
        %v1599 = vld [vmem:[#allocation7 + $0x24] sm:$0xf]
        %v1600 = vld [vmem:[#allocation7 + $0x28] sm:$0xf]
        %v1601 = vld [vmem:[#allocation7 + $0x2c] sm:$0xf]
        %v1602 = vld [vmem:[#allocation7 + $0x30] sm:$0xf]
        %v1603 = vld [vmem:[#allocation7 + $0x34] sm:$0xf]
        %v1604 = vld [vmem:[#allocation7 + $0x38] sm:$0xf]
        %v1605 = vld [vmem:[#allocation7 + $0x3c] sm:$0xf]
        %v1606 = vld [vmem:[#allocation7 + $0x40] sm:$0xf]
        %v1607 = vld [vmem:[#allocation7 + $0x44] sm:$0xf]
        %v1608 = vld [vmem:[#allocation7 + $0x48] sm:$0xf]
        %v1609 = vld [vmem:[#allocation7 + $0x4c] sm:$0xf]
        %v1610 = vld [vmem:[#allocation7 + $0x50] sm:$0xf]
        %v1611 = vld [vmem:[#allocation7 + $0x54] sm:$0xf]
        %v1612 = vld [vmem:[#allocation7 + $0x58] sm:$0xf]
        %v1613 = vld [vmem:[#allocation7 + $0x5c] sm:$0xf]
        %v1614 = vld [vmem:[#allocation7 + $0x60] sm:$0xf]
        %v1615 = vld [vmem:[#allocation7 + $0x64] sm:$0xf]
        %v1616 = vld [vmem:[#allocation7 + $0x68] sm:$0xf]
        %v1617 = vld [vmem:[#allocation7 + $0x6c] sm:$0xf]
        %v1618 = vld [vmem:[#allocation7 + $0x70] sm:$0xf]
        %v1619 = vld [vmem:[#allocation7 + $0x74] sm:$0xf]
        %v1620 = vld [vmem:[#allocation7 + $0x78] sm:$0xf]
        %v1621 = vld [vmem:[#allocation7 + $0x7c] sm:$0xf]
        %v1622 = vld [vmem:[%s4] sm:$0x1]
        %v1624 = vlaneseq
        %v1625 = vshrl.u32 %v1624, 7
        %v1626 = vsub.s32 0, %v1625
        %v1627 = vrot.slane %v1622, %v1626
        %v1661 = vunpack.c.l.b16 %v1590
        %v1662 = vunpack.c.l.b16 %v1591
        %v1663 = vunpack.c.l.b16 %v1592
        %v1664 = vunpack.c.l.b16 %v1593
        %v1665 = vunpack.c.l.b16 %v1594
        %v1666 = vunpack.c.l.b16 %v1595
        %v1667 = vunpack.c.l.b16 %v1596
        %v1668 = vunpack.c.l.b16 %v1597
        %v1669 = vunpack.c.l.b16 %v1598
        %v1670 = vunpack.c.l.b16 %v1599
        %v1671 = vunpack.c.l.b16 %v1600
        %v1672 = vunpack.c.l.b16 %v1601
        %v1673 = vunpack.c.l.b16 %v1602
        %v1674 = vunpack.c.l.b16 %v1603
        %v1675 = vunpack.c.l.b16 %v1604
        %v1676 = vunpack.c.l.b16 %v1605
        %v1677 = vunpack.c.l.b16 %v1606
        %v1678 = vunpack.c.l.b16 %v1607
        %v1679 = vunpack.c.l.b16 %v1608
        %v1680 = vunpack.c.l.b16 %v1609
        %v1681 = vunpack.c.l.b16 %v1610
        %v1682 = vunpack.c.l.b16 %v1611
        %v1683 = vunpack.c.l.b16 %v1612
        %v1684 = vunpack.c.l.b16 %v1613
        %v1685 = vunpack.c.l.b16 %v1614
        %v1686 = vunpack.c.l.b16 %v1615
        %v1687 = vunpack.c.l.b16 %v1616
        %v1688 = vunpack.c.l.b16 %v1617
        %v1689 = vunpack.c.l.b16 %v1618
        %v1690 = vunpack.c.l.b16 %v1619
        %v1691 = vunpack.c.l.b16 %v1620
        %v1692 = vunpack.c.l.b16 %v1621
        %v1693 = vpack.c.b16 %v1662, %v1661
        %v1694 = vpack.c.b16 %v1664, %v1663
        %v1695 = vpack.c.b16 %v1666, %v1665
        %v1696 = vpack.c.b16 %v1668, %v1667
        %v1697 = vpack.c.b16 %v1670, %v1669
        %v1698 = vpack.c.b16 %v1672, %v1671
        %v1699 = vpack.c.b16 %v1674, %v1673
        %v1700 = vpack.c.b16 %v1676, %v1675
        %v1701 = vpack.c.b16 %v1678, %v1677
        %v1702 = vpack.c.b16 %v1680, %v1679
        %v1703 = vpack.c.b16 %v1682, %v1681
        %v1704 = vpack.c.b16 %v1684, %v1683
        %v1705 = vpack.c.b16 %v1686, %v1685
        %v1706 = vpack.c.b16 %v1688, %v1687
        %v1707 = vpack.c.b16 %v1690, %v1689
        %v1708 = vpack.c.b16 %v1692, %v1691
        %1725 = vmatprep.subr.bf16.mxu0 0
        %1726 = vmatpush1.bf16.msra.mxu0 %v1693
        %1727 = vmatprep.subr.bf16.mxu0 0
        %1728 = vmatpush1.bf16.msra.mxu0 %v1694
        %1729 = vmatprep.subr.bf16.mxu0 0
        %1730 = vmatpush1.bf16.msra.mxu0 %v1695
        %1731 = vmatprep.subr.bf16.mxu0 0
        %1732 = vmatpush1.bf16.msra.mxu0 %v1696
        %1733 = vmatprep.subr.bf16.mxu0 0
        %1734 = vmatpush1.bf16.msra.mxu0 %v1697
        %1735 = vmatprep.subr.bf16.mxu0 0
        %1736 = vmatpush1.bf16.msra.mxu0 %v1698
        %1737 = vmatprep.subr.bf16.mxu0 0
        %1738 = vmatpush1.bf16.msra.mxu0 %v1699
        %1739 = vmatprep.subr.bf16.mxu0 0
        %1740 = vmatpush1.bf16.msra.mxu0 %v1700
        %1741 = vmatprep.subr.bf16.mxu0 0
        %1742 = vmatpush1.bf16.msra.mxu0 %v1701
        %1743 = vmatprep.subr.bf16.mxu0 0
        %1744 = vmatpush1.bf16.msra.mxu0 %v1702
        %1745 = vmatprep.subr.bf16.mxu0 0
        %1746 = vmatpush1.bf16.msra.mxu0 %v1703
        %1747 = vmatprep.subr.bf16.mxu0 0
        %1748 = vmatpush1.bf16.msra.mxu0 %v1704
        %1749 = vmatprep.subr.bf16.mxu0 0
        %1750 = vmatpush1.bf16.msra.mxu0 %v1705
        %1751 = vmatprep.subr.bf16.mxu0 0
        %1752 = vmatpush1.bf16.msra.mxu0 %v1706
        %1753 = vmatprep.subr.bf16.mxu0 0
        %1754 = vmatpush1.bf16.msra.mxu0 %v1707
        %1755 = vmatprep.subr.bf16.mxu0 0
        %1756 = vmatpush1.bf16.msra.mxu0 %v1708
        %1757 = vmatprep.mubr.bf16.mxu0 %v1559
        %1758 = vmatmul.mubr.bf16.gmra.mrb[0].mxu0 %v1558
        %v1759 = vpop.f32.mrb[0].mxu0
        %v1760 = vadd.f32 %v1627, %v1759
        %v1761 = vpop.f32.mrb[0].mxu0
        %v1762 = vpop.f32.mrb[0].mxu0
        %v1763 = vadd.f32 %v1627, %v1762
        %v1764 = vpop.f32.mrb[0].mxu0
        %1765 = vmatprep.mubr.bf16.mxu0 %v1561
        %1766 = vmatmul.mubr.bf16.gmra.mrb[0].mxu0 %v1560
        %v1767 = vpop.f32.mrb[0].mxu0
        %v1768 = vadd.f32 %v1627, %v1767
        %v1769 = vpop.f32.mrb[0].mxu0
        %v1770 = vpop.f32.mrb[0].mxu0
        %v1771 = vadd.f32 %v1627, %v1770
        %v1772 = vpop.f32.mrb[0].mxu0
        %1773 = vmatprep.mubr.bf16.mxu0 %v1563
        %1774 = vmatmul.mubr.bf16.gmra.mrb[0].mxu0 %v1562
        %v1775 = vpop.f32.mrb[0].mxu0
        %v1776 = vadd.f32 %v1627, %v1775
        %v1777 = vpop.f32.mrb[0].mxu0
        %v1778 = vpop.f32.mrb[0].mxu0
        %v1779 = vadd.f32 %v1627, %v1778
        %v1780 = vpop.f32.mrb[0].mxu0
        %1781 = vmatprep.mubr.bf16.mxu0 %v1565
        %1782 = vmatmul.mubr.bf16.gmra.mrb[0].mxu0 %v1564
        %v1783 = vpop.f32.mrb[0].mxu0
        %v1784 = vadd.f32 %v1627, %v1783
        %v1785 = vpop.f32.mrb[0].mxu0
        %v1786 = vpop.f32.mrb[0].mxu0
        %v1787 = vadd.f32 %v1627, %v1786
        %v1788 = vpop.f32.mrb[0].mxu0
        %1789 = vmatprep.mubr.bf16.mxu0 %v1567
        %1790 = vmatmul.mubr.bf16.gmra.mrb[0].mxu0 %v1566
        %v1791 = vpop.f32.mrb[0].mxu0
        %v1792 = vadd.f32 %v1627, %v1791
        %v1793 = vpop.f32.mrb[0].mxu0
        %v1794 = vpop.f32.mrb[0].mxu0
        %v1795 = vadd.f32 %v1627, %v1794
        %v1796 = vpop.f32.mrb[0].mxu0
        %1797 = vmatprep.mubr.bf16.mxu0 %v1569
        %1798 = vmatmul.mubr.bf16.gmra.mrb[0].mxu0 %v1568
        %v1799 = vpop.f32.mrb[0].mxu0
        %v1800 = vadd.f32 %v1627, %v1799
        %v1801 = vpop.f32.mrb[0].mxu0
        %v1802 = vpop.f32.mrb[0].mxu0
        %v1803 = vadd.f32 %v1627, %v1802
        %v1804 = vpop.f32.mrb[0].mxu0
        %1805 = vmatprep.mubr.bf16.mxu0 %v1571
        %1806 = vmatmul.mubr.bf16.gmra.mrb[0].mxu0 %v1570
        %v1807 = vpop.f32.mrb[0].mxu0
        %v1808 = vadd.f32 %v1627, %v1807
        %v1809 = vpop.f32.mrb[0].mxu0
        %v1810 = vpop.f32.mrb[0].mxu0
        %v1811 = vadd.f32 %v1627, %v1810
        %v1812 = vpop.f32.mrb[0].mxu0
        %1813 = vmatprep.mubr.bf16.mxu0 %v1573
        %1814 = vmatmul.mubr.bf16.gmra.mrb[0].mxu0 %v1572
        %v1815 = vpop.f32.mrb[0].mxu0
        %v1816 = vadd.f32 %v1627, %v1815
        %v1817 = vpop.f32.mrb[0].mxu0
        %v1818 = vpop.f32.mrb[0].mxu0
        %v1819 = vadd.f32 %v1627, %v1818
        %v1820 = vpop.f32.mrb[0].mxu0
        %1821 = vmatprep.mubr.bf16.mxu0 %v1575
        %1822 = vmatmul.mubr.bf16.gmra.mrb[0].mxu0 %v1574
        %v1823 = vpop.f32.mrb[0].mxu0
        %v1824 = vadd.f32 %v1627, %v1823
        %v1825 = vpop.f32.mrb[0].mxu0
        %v1826 = vpop.f32.mrb[0].mxu0
        %v1827 = vadd.f32 %v1627, %v1826
        %v1828 = vpop.f32.mrb[0].mxu0
        %1829 = vmatprep.mubr.bf16.mxu0 %v1577
        %1830 = vmatmul.mubr.bf16.gmra.mrb[0].mxu0 %v1576
        %v1831 = vpop.f32.mrb[0].mxu0
        %v1832 = vadd.f32 %v1627, %v1831
        %v1833 = vpop.f32.mrb[0].mxu0
        %v1834 = vpop.f32.mrb[0].mxu0
        %v1835 = vadd.f32 %v1627, %v1834
        %v1836 = vpop.f32.mrb[0].mxu0
        %1837 = vmatprep.mubr.bf16.mxu0 %v1579
        %1838 = vmatmul.mubr.bf16.gmra.mrb[0].mxu0 %v1578
        %v1839 = vpop.f32.mrb[0].mxu0
        %v1840 = vadd.f32 %v1627, %v1839
        %v1841 = vpop.f32.mrb[0].mxu0
        %v1842 = vpop.f32.mrb[0].mxu0
        %v1843 = vadd.f32 %v1627, %v1842
        %v1844 = vpop.f32.mrb[0].mxu0
        %1845 = vmatprep.mubr.bf16.mxu0 %v1581
        %1846 = vmatmul.mubr.bf16.gmra.mrb[0].mxu0 %v1580
        %v1847 = vpop.f32.mrb[0].mxu0
        %v1848 = vadd.f32 %v1627, %v1847
        %v1849 = vpop.f32.mrb[0].mxu0
        %v1850 = vpop.f32.mrb[0].mxu0
        %v1851 = vadd.f32 %v1627, %v1850
        %v1852 = vpop.f32.mrb[0].mxu0
        %1853 = vmatprep.mubr.bf16.mxu0 %v1583
        %1854 = vmatmul.mubr.bf16.gmra.mrb[0].mxu0 %v1582
        %v1855 = vpop.f32.mrb[0].mxu0
        %v1856 = vadd.f32 %v1627, %v1855
        %v1857 = vpop.f32.mrb[0].mxu0
        %v1858 = vpop.f32.mrb[0].mxu0
        %v1859 = vadd.f32 %v1627, %v1858
        %v1860 = vpop.f32.mrb[0].mxu0
        %1861 = vmatprep.mubr.bf16.mxu0 %v1585
        %1862 = vmatmul.mubr.bf16.gmra.mrb[0].mxu0 %v1584
        %v1863 = vpop.f32.mrb[0].mxu0
        %v1864 = vadd.f32 %v1627, %v1863
        %v1865 = vpop.f32.mrb[0].mxu0
        %v1866 = vpop.f32.mrb[0].mxu0
        %v1867 = vadd.f32 %v1627, %v1866
        %v1868 = vpop.f32.mrb[0].mxu0
        %1869 = vmatprep.mubr.bf16.mxu0 %v1587
        %1870 = vmatmul.mubr.bf16.gmra.mrb[0].mxu0 %v1586
        %v1871 = vpop.f32.mrb[0].mxu0
        %v1872 = vadd.f32 %v1627, %v1871
        %v1873 = vpop.f32.mrb[0].mxu0
        %v1874 = vpop.f32.mrb[0].mxu0
        %v1875 = vadd.f32 %v1627, %v1874
        %v1876 = vpop.f32.mrb[0].mxu0
        %1877 = vmatprep.mubr.bf16.mxu0 %v1589
        %1878 = vmatmul.mubr.bf16.gmra.mrb[0].mxu0 %v1588
        %v1879 = vpop.f32.mrb[0].mxu0
        %v1880 = vadd.f32 %v1627, %v1879
        %v1881 = vpop.f32.mrb[0].mxu0
        %v1882 = vpop.f32.mrb[0].mxu0
        %v1883 = vadd.f32 %v1627, %v1882
        %v1884 = vpop.f32.mrb[0].mxu0
        %1885 = vdwg.mxu0
        %v1886 = vadd.f32 %v1760, %v1776
        %v1887 = vadd.f32 %v1886, %v1792
        %v1888 = vadd.f32 %v1887, %v1808
        %v1889 = vadd.f32 %v1888, %v1824
        %v1890 = vadd.f32 %v1889, %v1840
        %v1891 = vadd.f32 %v1890, %v1856
        %v1892 = vadd.f32 %v1891, %v1872
        %v1893 = vadd.f32 %v1763, %v1779
        %v1894 = vadd.f32 %v1893, %v1795
        %v1895 = vadd.f32 %v1894, %v1811
        %v1896 = vadd.f32 %v1895, %v1827
        %v1897 = vadd.f32 %v1896, %v1843
        %v1898 = vadd.f32 %v1897, %v1859
        %v1899 = vadd.f32 %v1898, %v1875
        %v1900 = vadd.f32 %v1768, %v1784
        %v1901 = vadd.f32 %v1900, %v1800
        %v1902 = vadd.f32 %v1901, %v1816
        %v1903 = vadd.f32 %v1902, %v1832
        %v1904 = vadd.f32 %v1903, %v1848
        %v1905 = vadd.f32 %v1904, %v1864
        %v1906 = vadd.f32 %v1905, %v1880
        %v1907 = vadd.f32 %v1771, %v1787
        %v1908 = vadd.f32 %v1907, %v1803
        %v1909 = vadd.f32 %v1908, %v1819
        %v1910 = vadd.f32 %v1909, %v1835
        %v1911 = vadd.f32 %v1910, %v1851
        %v1912 = vadd.f32 %v1911, %v1867
        %v1913 = vadd.f32 %v1912, %v1883
        %1914 = vadd.xlane.f32.xlu0 %v1892
        %v1915 = vpop.xlane.xlu0 %1914
        %1916 = vadd.xlane.f32.xlu0 %v1899
        %v1917 = vpop.xlane.xlu0 %1916
        %1918 = vadd.xlane.f32.xlu0 %v1906
        %v1919 = vpop.xlane.xlu0 %1918
        %1920 = vadd.xlane.f32.xlu0 %v1913
        %v1921 = vpop.xlane.xlu0 %1920
        %v1922 = vmul.f32 %v1760, %v1760
        %v1923 = vmul.f32 %v1763, %v1763
        %v1924 = vmul.f32 %v1768, %v1768
        %v1925 = vmul.f32 %v1771, %v1771
        %v1926 = vmul.f32 %v1776, %v1776
        %v1927 = vmul.f32 %v1779, %v1779
        %v1928 = vmul.f32 %v1784, %v1784
        %v1929 = vmul.f32 %v1787, %v1787
        %v1930 = vmul.f32 %v1792, %v1792
        %v1931 = vmul.f32 %v1795, %v1795
        %v1932 = vmul.f32 %v1800, %v1800
        %v1933 = vmul.f32 %v1803, %v1803
        %v1934 = vmul.f32 %v1808, %v1808
        %v1935 = vmul.f32 %v1811, %v1811
        %v1936 = vmul.f32 %v1816, %v1816
        %v1937 = vmul.f32 %v1819, %v1819
        %v1938 = vmul.f32 %v1824, %v1824
        %v1939 = vmul.f32 %v1827, %v1827
        %v1940 = vmul.f32 %v1832, %v1832
        %v1941 = vmul.f32 %v1835, %v1835
        %v1942 = vmul.f32 %v1840, %v1840
        %v1943 = vmul.f32 %v1843, %v1843
        %v1944 = vmul.f32 %v1848, %v1848
        %v1945 = vmul.f32 %v1851, %v1851
        %v1946 = vmul.f32 %v1856, %v1856
        %v1947 = vmul.f32 %v1859, %v1859
        %v1948 = vmul.f32 %v1864, %v1864
        %v1949 = vmul.f32 %v1867, %v1867
        %v1950 = vmul.f32 %v1872, %v1872
        %v1951 = vmul.f32 %v1875, %v1875
        %v1952 = vmul.f32 %v1880, %v1880
        %v1953 = vmul.f32 %v1883, %v1883
        %v1954 = vadd.f32 %v1922, %v1926
        %v1955 = vadd.f32 %v1954, %v1930
        %v1956 = vadd.f32 %v1955, %v1934
        %v1957 = vadd.f32 %v1956, %v1938
        %v1958 = vadd.f32 %v1957, %v1942
        %v1959 = vadd.f32 %v1958, %v1946
        %v1960 = vadd.f32 %v1959, %v1950
        %v1961 = vadd.f32 %v1923, %v1927
        %v1962 = vadd.f32 %v1961, %v1931
        %v1963 = vadd.f32 %v1962, %v1935
        %v1964 = vadd.f32 %v1963, %v1939
        %v1965 = vadd.f32 %v1964, %v1943
        %v1966 = vadd.f32 %v1965, %v1947
        %v1967 = vadd.f32 %v1966, %v1951
        %v1968 = vadd.f32 %v1924, %v1928
        %v1969 = vadd.f32 %v1968, %v1932
        %v1970 = vadd.f32 %v1969, %v1936
        %v1971 = vadd.f32 %v1970, %v1940
        %v1972 = vadd.f32 %v1971, %v1944
        %v1973 = vadd.f32 %v1972, %v1948
        %v1974 = vadd.f32 %v1973, %v1952
        %v1975 = vadd.f32 %v1925, %v1929
        %v1976 = vadd.f32 %v1975, %v1933
        %v1977 = vadd.f32 %v1976, %v1937
        %v1978 = vadd.f32 %v1977, %v1941
        %v1979 = vadd.f32 %v1978, %v1945
        %v1980 = vadd.f32 %v1979, %v1949
        %v1981 = vadd.f32 %v1980, %v1953
        %1982 = vadd.xlane.f32.xlu0 %v1960
        %v1983 = vpop.xlane.xlu0 %1982
        %1984 = vadd.xlane.f32.xlu0 %v1967
        %v1985 = vpop.xlane.xlu0 %1984
        %1986 = vadd.xlane.f32.xlu0 %v1974
        %v1987 = vpop.xlane.xlu0 %1986
        %1988 = vadd.xlane.f32.xlu0 %v1981
        %v1989 = vpop.xlane.xlu0 %1988
        %v1990 = vmul.f32 %v1915, 0.0009765625
        %v1991 = vmul.f32 %v1917, 0.0009765625
        %v1992 = vmul.f32 %v1919, 0.0009765625
        %v1993 = vmul.f32 %v1921, 0.0009765625
        %v1994 = vmul.f32 %v1983, 0.0009765625
        %v1995 = vmul.f32 %v1985, 0.0009765625
        %v1996 = vmul.f32 %v1987, 0.0009765625
        %v1997 = vmul.f32 %v1989, 0.0009765625
        %v1998 = vmul.f32 %v1990, %v1990
        %v1999 = vmul.f32 %v1991, %v1991
        %v2000 = vmul.f32 %v1992, %v1992
        %v2001 = vmul.f32 %v1993, %v1993
        %v2002 = vsub.f32 %v1994, %v1998
        %v2003 = vsub.f32 %v1995, %v1999
        %v2004 = vsub.f32 %v1996, %v2000
        %v2005 = vsub.f32 %v1997, %v2001
        %v2006 = vmax.f32 %v2002, 0.0
        %v2007 = vmax.f32 %v2003, 0.0
        %v2008 = vmax.f32 %v2004, 0.0
        %v2009 = vmax.f32 %v2005, 0.0
        %v2010 = vadd.f32 %v2006, 1e-05
        %v2011 = vadd.f32 %v2007, 1e-05
        %v2012 = vadd.f32 %v2008, 1e-05
        %v2013 = vadd.f32 %v2009, 1e-05
        %v2014 = vrsqrt.pop %v2010
        %v2015 = vrsqrt.pop %v2011
        %v2016 = vrsqrt.pop %v2012
        %v2017 = vrsqrt.pop %v2013
        %v2018 = vmul.f32 %v2014, %v381
        %v2019 = vmul.f32 %v2015, %v382
        %v2020 = vmul.f32 %v2016, %v383
        %v2021 = vmul.f32 %v2017, %v384
        %v2022 = vmul.f32 %v1990, %v2018
        %v2023 = vmul.f32 %v1991, %v2019
        %v2024 = vmul.f32 %v1992, %v2020
        %v2025 = vmul.f32 %v1993, %v2021
        %2030 = vrot.lane.b32.xlu0 %v2022, 1
        %v2031 = vpop.permute.xlu0 %2030
        %2032 = vrot.lane.b32.xlu0 %v2023, 1
        %v2033 = vpop.permute.xlu0 %2032
        %2034 = vrot.lane.b32.xlu0 %v2024, 1
        %v2035 = vpop.permute.xlu0 %2034
        %2036 = vrot.lane.b32.xlu0 %v2025, 1
        %v2037 = vpop.permute.xlu0 %2036
        %v2042 = vsub.f32 %v381, %v2031
        %v2043 = vsub.f32 %v382, %v2033
        %v2044 = vsub.f32 %v383, %v2035
        %v2045 = vsub.f32 %v384, %v2037
        %2047 = vset.pattern.permute.xlu0 4
        %2048 = vperm.xlu0 %2047, %v2018
        %v2049 = vpop.permute.xlu0 %2048
        %2052 = vset.pattern.permute.xlu0 4
        %2053 = vperm.xlu0 %2052, %v2019
        %v2054 = vpop.permute.xlu0 %2053
        %2057 = vset.pattern.permute.xlu0 4
        %2058 = vperm.xlu0 %2057, %v2020
        %v2059 = vpop.permute.xlu0 %2058
        %2062 = vset.pattern.permute.xlu0 4
        %2063 = vperm.xlu0 %2062, %v2021
        %v2064 = vpop.permute.xlu0 %2063
        %v2066 = vmul.f32 %v1760, %v2049
        %v2067 = vmul.f32 %v1763, %v2054
        %v2068 = vmul.f32 %v1768, %v2059
        %v2069 = vmul.f32 %v1771, %v2064
        %v2070 = vmul.f32 %v1776, %v2049
        %v2071 = vmul.f32 %v1779, %v2054
        %v2072 = vmul.f32 %v1784, %v2059
        %v2073 = vmul.f32 %v1787, %v2064
        %v2074 = vmul.f32 %v1792, %v2049
        %v2075 = vmul.f32 %v1795, %v2054
        %v2076 = vmul.f32 %v1800, %v2059
        %v2077 = vmul.f32 %v1803, %v2064
        %v2078 = vmul.f32 %v1808, %v2049
        %v2079 = vmul.f32 %v1811, %v2054
        %v2080 = vmul.f32 %v1816, %v2059
        %v2081 = vmul.f32 %v1819, %v2064
        %v2082 = vmul.f32 %v1824, %v2049
        %v2083 = vmul.f32 %v1827, %v2054
        %v2084 = vmul.f32 %v1832, %v2059
        %v2085 = vmul.f32 %v1835, %v2064
        %v2086 = vmul.f32 %v1840, %v2049
        %v2087 = vmul.f32 %v1843, %v2054
        %v2088 = vmul.f32 %v1848, %v2059
        %v2089 = vmul.f32 %v1851, %v2064
        %v2090 = vmul.f32 %v1856, %v2049
        %v2091 = vmul.f32 %v1859, %v2054
        %v2092 = vmul.f32 %v1864, %v2059
        %v2093 = vmul.f32 %v1867, %v2064
        %v2094 = vmul.f32 %v1872, %v2049
        %v2095 = vmul.f32 %v1875, %v2054
        %v2096 = vmul.f32 %v1880, %v2059
        %v2097 = vmul.f32 %v1883, %v2064
        %2099 = vset.pattern.permute.xlu0 5
        %2100 = vperm.xlu0 %2099, %v2042
        %v2101 = vpop.permute.xlu0 %2100
        %2104 = vset.pattern.permute.xlu0 5
        %2105 = vperm.xlu0 %2104, %v2043
        %v2106 = vpop.permute.xlu0 %2105
        %2109 = vset.pattern.permute.xlu0 5
        %2110 = vperm.xlu0 %2109, %v2044
        %v2111 = vpop.permute.xlu0 %2110
        %2114 = vset.pattern.permute.xlu0 5
        %2115 = vperm.xlu0 %2114, %v2045
        %v2116 = vpop.permute.xlu0 %2115
        %v2118 = vadd.f32 %v2066, %v2101
        %v2119 = vadd.f32 %v2067, %v2106
        %v2120 = vadd.f32 %v2068, %v2111
        %v2121 = vadd.f32 %v2069, %v2116
        %v2122 = vadd.f32 %v2070, %v2101
        %v2123 = vadd.f32 %v2071, %v2106
        %v2124 = vadd.f32 %v2072, %v2111
        %v2125 = vadd.f32 %v2073, %v2116
        %v2126 = vadd.f32 %v2074, %v2101
        %v2127 = vadd.f32 %v2075, %v2106
        %v2128 = vadd.f32 %v2076, %v2111
        %v2129 = vadd.f32 %v2077, %v2116
        %v2130 = vadd.f32 %v2078, %v2101
        %v2131 = vadd.f32 %v2079, %v2106
        %v2132 = vadd.f32 %v2080, %v2111
        %v2133 = vadd.f32 %v2081, %v2116
        %v2134 = vadd.f32 %v2082, %v2101
        %v2135 = vadd.f32 %v2083, %v2106
        %v2136 = vadd.f32 %v2084, %v2111
        %v2137 = vadd.f32 %v2085, %v2116
        %v2138 = vadd.f32 %v2086, %v2101
        %v2139 = vadd.f32 %v2087, %v2106
        %v2140 = vadd.f32 %v2088, %v2111
        %v2141 = vadd.f32 %v2089, %v2116
        %v2142 = vadd.f32 %v2090, %v2101
        %v2143 = vadd.f32 %v2091, %v2106
        %v2144 = vadd.f32 %v2092, %v2111
        %v2145 = vadd.f32 %v2093, %v2116
        %v2146 = vadd.f32 %v2094, %v2101
        %v2147 = vadd.f32 %v2095, %v2106
        %v2148 = vadd.f32 %v2096, %v2111
        %v2149 = vadd.f32 %v2097, %v2116
        %v2150 = vadd.f32 %v2118, %v617
        %v2151 = vadd.f32 %v2119, %v618
        %v2152 = vadd.f32 %v2120, %v619
        %v2153 = vadd.f32 %v2121, %v620
        %v2154 = vadd.f32 %v2122, %v621
        %v2155 = vadd.f32 %v2123, %v622
        %v2156 = vadd.f32 %v2124, %v623
        %v2157 = vadd.f32 %v2125, %v624
        %v2158 = vadd.f32 %v2126, %v625
        %v2159 = vadd.f32 %v2127, %v626
        %v2160 = vadd.f32 %v2128, %v627
        %v2161 = vadd.f32 %v2129, %v628
        %v2162 = vadd.f32 %v2130, %v629
        %v2163 = vadd.f32 %v2131, %v630
        %v2164 = vadd.f32 %v2132, %v631
        %v2165 = vadd.f32 %v2133, %v632
        %v2166 = vadd.f32 %v2134, %v633
        %v2167 = vadd.f32 %v2135, %v634
        %v2168 = vadd.f32 %v2136, %v635
        %v2169 = vadd.f32 %v2137, %v636
        %v2170 = vadd.f32 %v2138, %v637
        %v2171 = vadd.f32 %v2139, %v638
        %v2172 = vadd.f32 %v2140, %v639
        %v2173 = vadd.f32 %v2141, %v640
        %v2174 = vadd.f32 %v2142, %v641
        %v2175 = vadd.f32 %v2143, %v642
        %v2176 = vadd.f32 %v2144, %v643
        %v2177 = vadd.f32 %v2145, %v644
        %v2178 = vadd.f32 %v2146, %v645
        %v2179 = vadd.f32 %v2147, %v646
        %v2180 = vadd.f32 %v2148, %v647
        %v2181 = vadd.f32 %v2149, %v648
        %vm2182 = vcmp.ge.f32.partialorder %v2150, 2.0
        %vm2183 = vcmp.ge.f32.partialorder %v2151, 2.0
        %vm2184 = vcmp.ge.f32.partialorder %v2152, 2.0
        %vm2185 = vcmp.ge.f32.partialorder %v2153, 2.0
        %vm2186 = vcmp.ge.f32.partialorder %v2154, 2.0
        %vm2187 = vcmp.ge.f32.partialorder %v2155, 2.0
        %vm2188 = vcmp.ge.f32.partialorder %v2156, 2.0
        %vm2189 = vcmp.ge.f32.partialorder %v2157, 2.0
        %vm2190 = vcmp.ge.f32.partialorder %v2158, 2.0
        %vm2191 = vcmp.ge.f32.partialorder %v2159, 2.0
        %vm2192 = vcmp.ge.f32.partialorder %v2160, 2.0
        %vm2193 = vcmp.ge.f32.partialorder %v2161, 2.0
        %vm2194 = vcmp.ge.f32.partialorder %v2162, 2.0
        %vm2195 = vcmp.ge.f32.partialorder %v2163, 2.0
        %vm2196 = vcmp.ge.f32.partialorder %v2164, 2.0
        %vm2197 = vcmp.ge.f32.partialorder %v2165, 2.0
        %vm2198 = vcmp.ge.f32.partialorder %v2166, 2.0
        %vm2199 = vcmp.ge.f32.partialorder %v2167, 2.0
        %vm2200 = vcmp.ge.f32.partialorder %v2168, 2.0
        %vm2201 = vcmp.ge.f32.partialorder %v2169, 2.0
        %vm2202 = vcmp.ge.f32.partialorder %v2170, 2.0
        %vm2203 = vcmp.ge.f32.partialorder %v2171, 2.0
        %vm2204 = vcmp.ge.f32.partialorder %v2172, 2.0
        %vm2205 = vcmp.ge.f32.partialorder %v2173, 2.0
        %vm2206 = vcmp.ge.f32.partialorder %v2174, 2.0
        %vm2207 = vcmp.ge.f32.partialorder %v2175, 2.0
        %vm2208 = vcmp.ge.f32.partialorder %v2176, 2.0
        %vm2209 = vcmp.ge.f32.partialorder %v2177, 2.0
        %vm2210 = vcmp.ge.f32.partialorder %v2178, 2.0
        %vm2211 = vcmp.ge.f32.partialorder %v2179, 2.0
        %vm2212 = vcmp.ge.f32.partialorder %v2180, 2.0
        %vm2213 = vcmp.ge.f32.partialorder %v2181, 2.0
        %v2214 = vsel %vm2182, 1, 0
        %v2215 = vsel %vm2183, 1, 0
        %v2216 = vsel %vm2184, 1, 0
        %v2217 = vsel %vm2185, 1, 0
        %v2218 = vsel %vm2186, 1, 0
        %v2219 = vsel %vm2187, 1, 0
        %v2220 = vsel %vm2188, 1, 0
        %v2221 = vsel %vm2189, 1, 0
        %v2222 = vsel %vm2190, 1, 0
        %v2223 = vsel %vm2191, 1, 0
        %v2224 = vsel %vm2192, 1, 0
        %v2225 = vsel %vm2193, 1, 0
        %v2226 = vsel %vm2194, 1, 0
        %v2227 = vsel %vm2195, 1, 0
        %v2228 = vsel %vm2196, 1, 0
        %v2229 = vsel %vm2197, 1, 0
        %v2230 = vsel %vm2198, 1, 0
        %v2231 = vsel %vm2199, 1, 0
        %v2232 = vsel %vm2200, 1, 0
        %v2233 = vsel %vm2201, 1, 0
        %v2234 = vsel %vm2202, 1, 0
        %v2235 = vsel %vm2203, 1, 0
        %v2236 = vsel %vm2204, 1, 0
        %v2237 = vsel %vm2205, 1, 0
        %v2238 = vsel %vm2206, 1, 0
        %v2239 = vsel %vm2207, 1, 0
        %v2240 = vsel %vm2208, 1, 0
        %v2241 = vsel %vm2209, 1, 0
        %v2242 = vsel %vm2210, 1, 0
        %v2243 = vsel %vm2211, 1, 0
        %v2244 = vsel %vm2212, 1, 0
        %v2245 = vsel %vm2213, 1, 0
        %v2246 = vcvt.s32.f32 %v2214
        %v2247 = vcvt.s32.f32 %v2215
        %v2248 = vcvt.s32.f32 %v2216
        %v2249 = vcvt.s32.f32 %v2217
        %v2250 = vcvt.s32.f32 %v2218
        %v2251 = vcvt.s32.f32 %v2219
        %v2252 = vcvt.s32.f32 %v2220
        %v2253 = vcvt.s32.f32 %v2221
        %v2254 = vcvt.s32.f32 %v2222
        %v2255 = vcvt.s32.f32 %v2223
        %v2256 = vcvt.s32.f32 %v2224
        %v2257 = vcvt.s32.f32 %v2225
        %v2258 = vcvt.s32.f32 %v2226
        %v2259 = vcvt.s32.f32 %v2227
        %v2260 = vcvt.s32.f32 %v2228
        %v2261 = vcvt.s32.f32 %v2229
        %v2262 = vcvt.s32.f32 %v2230
        %v2263 = vcvt.s32.f32 %v2231
        %v2264 = vcvt.s32.f32 %v2232
        %v2265 = vcvt.s32.f32 %v2233
        %v2266 = vcvt.s32.f32 %v2234
        %v2267 = vcvt.s32.f32 %v2235
        %v2268 = vcvt.s32.f32 %v2236
        %v2269 = vcvt.s32.f32 %v2237
        %v2270 = vcvt.s32.f32 %v2238
        %v2271 = vcvt.s32.f32 %v2239
        %v2272 = vcvt.s32.f32 %v2240
        %v2273 = vcvt.s32.f32 %v2241
        %v2274 = vcvt.s32.f32 %v2242
        %v2275 = vcvt.s32.f32 %v2243
        %v2276 = vcvt.s32.f32 %v2244
        %v2277 = vcvt.s32.f32 %v2245
        %v2278 = vpack.c.bf16 %v2247, %v2246
        %v2279 = vpack.c.bf16 %v2249, %v2248
        %v2280 = vpack.c.bf16 %v2251, %v2250
        %v2281 = vpack.c.bf16 %v2253, %v2252
        %v2282 = vpack.c.bf16 %v2255, %v2254
        %v2283 = vpack.c.bf16 %v2257, %v2256
        %v2284 = vpack.c.bf16 %v2259, %v2258
        %v2285 = vpack.c.bf16 %v2261, %v2260
        %v2286 = vpack.c.bf16 %v2263, %v2262
        %v2287 = vpack.c.bf16 %v2265, %v2264
        %v2288 = vpack.c.bf16 %v2267, %v2266
        %v2289 = vpack.c.bf16 %v2269, %v2268
        %v2290 = vpack.c.bf16 %v2271, %v2270
        %v2291 = vpack.c.bf16 %v2273, %v2272
        %v2292 = vpack.c.bf16 %v2275, %v2274
        %v2293 = vpack.c.bf16 %v2277, %v2276
        %v2310 = vunpack.c.l.b16 %v2278
        %v2311 = vunpack.c.h.b16 %v2278
        %v2312 = vunpack.c.l.b16 %v2279
        %v2313 = vunpack.c.h.b16 %v2279
        %v2314 = vunpack.c.l.b16 %v2280
        %v2315 = vunpack.c.h.b16 %v2280
        %v2316 = vunpack.c.l.b16 %v2281
        %v2317 = vunpack.c.h.b16 %v2281
        %v2318 = vunpack.c.l.b16 %v2282
        %v2319 = vunpack.c.h.b16 %v2282
        %v2320 = vunpack.c.l.b16 %v2283
        %v2321 = vunpack.c.h.b16 %v2283
        %v2322 = vunpack.c.l.b16 %v2284
        %v2323 = vunpack.c.h.b16 %v2284
        %v2324 = vunpack.c.l.b16 %v2285
        %v2325 = vunpack.c.h.b16 %v2285
        %v2326 = vunpack.c.l.b16 %v2286
        %v2327 = vunpack.c.h.b16 %v2286
        %v2328 = vunpack.c.l.b16 %v2287
        %v2329 = vunpack.c.h.b16 %v2287
        %v2330 = vunpack.c.l.b16 %v2288
        %v2331 = vunpack.c.h.b16 %v2288
        %v2332 = vunpack.c.l.b16 %v2289
        %v2333 = vunpack.c.h.b16 %v2289
        %v2334 = vunpack.c.l.b16 %v2290
        %v2335 = vunpack.c.h.b16 %v2290
        %v2336 = vunpack.c.l.b16 %v2291
        %v2337 = vunpack.c.h.b16 %v2291
        %v2338 = vunpack.c.l.b16 %v2292
        %v2339 = vunpack.c.h.b16 %v2292
        %v2340 = vunpack.c.l.b16 %v2293
        %v2341 = vunpack.c.h.b16 %v2293
        %v2342 = vpack.c.b16 %v2310, %v2310
        %v2343 = vpack.c.b16 %v2311, %v2311
        %v2344 = vpack.c.b16 %v2312, %v2312
        %v2345 = vpack.c.b16 %v2313, %v2313
        %v2346 = vpack.c.b16 %v2314, %v2314
        %v2347 = vpack.c.b16 %v2315, %v2315
        %v2348 = vpack.c.b16 %v2316, %v2316
        %v2349 = vpack.c.b16 %v2317, %v2317
        %v2350 = vpack.c.b16 %v2318, %v2318
        %v2351 = vpack.c.b16 %v2319, %v2319
        %v2352 = vpack.c.b16 %v2320, %v2320
        %v2353 = vpack.c.b16 %v2321, %v2321
        %v2354 = vpack.c.b16 %v2322, %v2322
        %v2355 = vpack.c.b16 %v2323, %v2323
        %v2356 = vpack.c.b16 %v2324, %v2324
        %v2357 = vpack.c.b16 %v2325, %v2325
        %v2358 = vpack.c.b16 %v2326, %v2326
        %v2359 = vpack.c.b16 %v2327, %v2327
        %v2360 = vpack.c.b16 %v2328, %v2328
        %v2361 = vpack.c.b16 %v2329, %v2329
        %v2362 = vpack.c.b16 %v2330, %v2330
        %v2363 = vpack.c.b16 %v2331, %v2331
        %v2364 = vpack.c.b16 %v2332, %v2332
        %v2365 = vpack.c.b16 %v2333, %v2333
        %v2366 = vpack.c.b16 %v2334, %v2334
        %v2367 = vpack.c.b16 %v2335, %v2335
        %v2368 = vpack.c.b16 %v2336, %v2336
        %v2369 = vpack.c.b16 %v2337, %v2337
        %v2370 = vpack.c.b16 %v2338, %v2338
        %v2371 = vpack.c.b16 %v2339, %v2339
        %v2372 = vpack.c.b16 %v2340, %v2340
        %v2373 = vpack.c.b16 %v2341, %v2341
        %2406 = vst [vmem:[%s339] sm:$0xf] %v2342
        %2407 = vst [vmem:[%s339 + $0x4] sm:$0xf] %v2343
        %2408 = vst [vmem:[%s339 + $0x8] sm:$0xf] %v2344
        %2409 = vst [vmem:[%s339 + $0xc] sm:$0xf] %v2345
        %2410 = vst [vmem:[%s339 + $0x10] sm:$0xf] %v2346
        %2411 = vst [vmem:[%s339 + $0x14] sm:$0xf] %v2347
        %2412 = vst [vmem:[%s339 + $0x18] sm:$0xf] %v2348
        %2413 = vst [vmem:[%s339 + $0x1c] sm:$0xf] %v2349
        %2414 = vst [vmem:[%s339 + $0x20] sm:$0xf] %v2350
        %2415 = vst [vmem:[%s339 + $0x24] sm:$0xf] %v2351
        %2416 = vst [vmem:[%s339 + $0x28] sm:$0xf] %v2352
        %2417 = vst [vmem:[%s339 + $0x2c] sm:$0xf] %v2353
        %2418 = vst [vmem:[%s339 + $0x30] sm:$0xf] %v2354
        %2419 = vst [vmem:[%s339 + $0x34] sm:$0xf] %v2355
        %2420 = vst [vmem:[%s339 + $0x38] sm:$0xf] %v2356
        %2421 = vst [vmem:[%s339 + $0x3c] sm:$0xf] %v2357
        %2422 = vst [vmem:[%s339 + $0x40] sm:$0xf] %v2358
        %2423 = vst [vmem:[%s339 + $0x44] sm:$0xf] %v2359
        %2424 = vst [vmem:[%s339 + $0x48] sm:$0xf] %v2360
        %2425 = vst [vmem:[%s339 + $0x4c] sm:$0xf] %v2361
        %2426 = vst [vmem:[%s339 + $0x50] sm:$0xf] %v2362
        %2427 = vst [vmem:[%s339 + $0x54] sm:$0xf] %v2363
        %2428 = vst [vmem:[%s339 + $0x58] sm:$0xf] %v2364
        %2429 = vst [vmem:[%s339 + $0x5c] sm:$0xf] %v2365
        %2430 = vst [vmem:[%s339 + $0x60] sm:$0xf] %v2366
        %2431 = vst [vmem:[%s339 + $0x64] sm:$0xf] %v2367
        %2432 = vst [vmem:[%s339 + $0x68] sm:$0xf] %v2368
        %2433 = vst [vmem:[%s339 + $0x6c] sm:$0xf] %v2369
        %2434 = vst [vmem:[%s339 + $0x70] sm:$0xf] %v2370
        %2435 = vst [vmem:[%s339 + $0x74] sm:$0xf] %v2371
        %2436 = vst [vmem:[%s339 + $0x78] sm:$0xf] %v2372
        %2437 = vst [vmem:[%s339 + $0x7c] sm:$0xf] %v2373
        %s2438 = sand.u32 %s168, 1
        %s2439 = scalar_lea.sflag [#allocation4], %s2438
        %s2440 = sand.u32 %s168, 1
        %s2441 = smul.addr %s2440, 128
        %s2442 = scalar_lea.vmem [#allocation8], %s2441
        // Predicated region
        $region57: #{tpu_custom_call.1} parent=43 // pred_check
          %p2443 = pneg %p178
        $region58: #{tpu_custom_call.1} parent=43 // pred_check_branch
          %2445 = sbr.rel (%p2443) target = $region60
        $region59: #{tpu_custom_call.1} parent=43 // pred_region
          #allocation12 [shape = 'u32[6]{0}', space=smem, size = 0x18, scoped, tag = 'DMA stride descriptor']
          %s2446 = smul.u32 4, %s24
          %s2448 = ssub.s32 2048, 2048
          %2449 = vsyncadd %s2439, %s2448
          %s2450 = smul.addr %s2446, 64
          %s2451 = scalar_lea.hbm %s6, %s2450
          %s2453 = sshll.u32 1, 14
          %s2454 = sxor.u32 4294967295, %s2453
          %s2457 = sshll.u32 7, 18
          %s2458 = sxor.u32 4294967295, %s2457
          %s2459 = sand.u32 0, %s2458
          %s2461 = sor.u32 %s2459, 0
          %s2463 = sshll.u32 3, 24
          %s2464 = sxor.u32 4294967295, %s2463
          %s2465 = sand.u32 %s2461, %s2464
          %s2467 = sor.u32 %s2465, 0
          %s2468 = sshll.u32 %s2442, 4
          %s2469 = int_to_ptr.vmem [resolvable:$true] %s2468
          %2475 = sst [smem:[#allocation12]] 256
          %s2476 = scalar_lea.smem [#allocation12], 1
          %2477 = sst [smem:[%s2476]] 512
          %s2478 = scalar_lea.smem [#allocation12], 2
          %2479 = sst [smem:[%s2478]] 4
          %s2480 = scalar_lea.smem [#allocation12], 3
          %2481 = sst [smem:[%s2480]] 64
          %s2482 = scalar_lea.smem [#allocation12], 4
          %2483 = sst [smem:[%s2482]] 64
          %s2484 = scalar_lea.smem [#allocation12], 5
          %2485 = sst [smem:[%s2484]] 4
          %2487 = dma.general %s2469, 2048, %s2451, %s2439, [#allocation11], [#allocation12], %s2467, 0
        $region60: #{tpu_custom_call.1} parent=43 // pred_fallthru
          _
      $region44: #{tpu_custom_call.1} parent=5 // pred_fallthru
        _
      %p2488 = scmp.le.s32.totalorder 2, %s19
      // Predicated region
      $region61: #{tpu_custom_call.1} parent=5 // pred_check
        %p2489 = pneg %p2488
      $region62: #{tpu_custom_call.1} parent=5 // pred_check_branch
        %2491 = sbr.rel (%p2489) target = $region64
      $region63: #{tpu_custom_call.1} parent=5 // pred_region
        %s2492 = ssub.s32 %s19, 2
        // Predicated region
        $region65: #{tpu_custom_call.1} parent=63 // pred_check
          %p2493 = pneg %p184
        $region66: #{tpu_custom_call.1} parent=63 // pred_check_branch
          %2495 = sbr.rel (%p2493) target = $region68
        $region67: #{tpu_custom_call.1} parent=63 // pred_region
          %s2496 = sand.u32 %s169, 1
          %s2497 = scalar_lea.sflag [#allocation4], %s2496
          %s2498 = sand.u32 %s169, 1
          %s2499 = smul.addr %s2498, 128
          %s2500 = scalar_lea.vmem [#allocation8], %s2499
          %2501 = dma.done %s2497, 2048
        $region68: #{tpu_custom_call.1} parent=63 // pred_fallthru
          _
      $region64: #{tpu_custom_call.1} parent=5 // pred_fallthru
        _
    $region6: #{tpu_custom_call.1} parent=1 // loop_footer
      %s23 = sadd.s32 1, %s19
    $region7: #{tpu_custom_call.1} parent=1 // loop_footer_branch
      %18 = sbr.rel target = $region3
    $region8: #{tpu_custom_call.1} parent=1 // loop_exit
      _
    %2502 = vsyncpa [#allocation3], 1
    %s2503 = scalar_lea.sflag [#allocation3], 1
    %2504 = vsyncpa %s2503, 1
    %2505 = vsyncpa [#allocation6], 1
    %2506 = vsyncpa [#allocation4], 1
    %s2507 = scalar_lea.sflag [#allocation4], 1
    %2508 = vsyncpa %s2507, 1

</llo_original>
